<compile_context>
chip_gen: v6e
topology: v6e:2x2x1
jax: 0.10.0
libtpu: 0.0.40
codegen_flags: <defaults>
</compile_context>

<pallas_src>
import functools

import jax
import jax.numpy as jnp
from jax import lax
from jax.experimental import pallas as pl
from jax.experimental.pallas import tpu as pltpu


# Row-space constants (rows are always  spatial_index * tb + b_within_tile):
#   x2   : pool1 output == conv2 zero-padded input, 16x24 padded plane per image:
#          row = ((y+1)*24 + (x+8)) * tb + b    for y, x in [0, 14); ring rows are exact zeros.
#   acc2 : conv2 output, row = (y*24 + x) * tb + b            (x in [14,24) rows are junk, unread)
#   x3c  : conv3 input,  row = (s*4 + pos) * tb + b,  s = pool3 window (3x3), pos = member (2x2)
_X2_VALID = 384    # 16 * 24
_X2_ROWS = 400     # + 16 slack spatial rows so the last conv2 chunk's tap over-read stays in-bounds
_ACC2_ROWS = 336   # 14 * 24
_CHUNK = 128       # rows per register-accumulated matmul chunk (16 f32 output vregs)


def _fused_forward_kernel(
    patch_ref, drop_ref,
    w1_ref, w2_ref, b2_ref, w3_ref, b3_ref,
    wf1_ref, bf1_ref, wf2_ref, bf2_ref,
    o_ref,
    x2_ref, acc2_ref, x3c_ref, acc3_ref, feat_ref,
    *, tb):
  f32 = jnp.float32
  bf16 = jnp.bfloat16

  # ---- stage 1: conv1 (7x7, 1->32, bias folded) + 2x2 max pool, fused into one matmul pass ----
  # Patch rows already sit in the zero-padded conv2-input row space; the 4 members of every
  # pool window live in the 4 output lane groups (block-diagonal weight), so pooling is a
  # lane-group max.  Ring rows have all-zero patches -> pooled value 0 -> conv2's zero padding
  # comes out for free (no memsets anywhere).
  n1 = (_X2_VALID * tb) // _CHUNK

  def s1_chunk(c, carry):
    base = pl.multiple_of(c * _CHUNK, _CHUNK)
    a = jnp.dot(patch_ref[pl.ds(base, _CHUNK), :], w1_ref[...],
                preferred_element_type=f32)                       # (CHUNK, 128) in registers
    m = jnp.maximum(jnp.maximum(a[:, 0:32], a[:, 32:64]),
                    jnp.maximum(a[:, 64:96], a[:, 96:128]))       # 2x2 max pool over lane groups
    x2_ref[pl.ds(base, _CHUNK), :] = m.astype(bf16)
    return carry

  lax.fori_loop(0, n1, s1_chunk, 0)

  # ---- stage 2: conv2 (3x3, 32->64, 'same') as 9 shifted-slab matmuls, register-accumulated ----
  n2 = (_ACC2_ROWS * tb) // _CHUNK

  def s2_chunk(c, carry):
    base = pl.multiple_of(c * _CHUNK, _CHUNK)
    acc = None
    for k in range(9):
      di, dj = divmod(k, 3)
      start = pl.multiple_of(base + (di * 24 + dj + 7) * tb, 8)
      t = jnp.dot(x2_ref[pl.ds(start, _CHUNK), :],
                  w2_ref[pl.ds(k * 32, 32), :],
                  preferred_element_type=f32)
      acc = t if acc is None else acc + t
    acc2_ref[pl.ds(base, _CHUNK), :] = acc                        # single store per element
    return carry

  lax.fori_loop(0, n2, s2_chunk, 0)

  # ---- pool2 (+ conv2 bias): 14x14 -> 7x7, computing only the 6x6 positions pool3 consumes ----
  # (bias commutes with max; conv3 is 1x1 so row/col 6 of pool2's output is never needed.)
  b2 = b2_ref[...]
  for y3 in range(6):
    for x3 in range(6):
      base = (2 * y3 * 24 + 2 * x3) * tb
      m = jnp.maximum(
          jnp.maximum(acc2_ref[pl.ds(base, tb), :],
                      acc2_ref[pl.ds(base + tb, tb), :]),
          jnp.maximum(acc2_ref[pl.ds(base + 24 * tb, tb), :],
                      acc2_ref[pl.ds(base + 25 * tb, tb), :]))
      s = (y3 // 2) * 3 + (x3 // 2)
      pos = (y3 % 2) * 2 + (x3 % 2)
      x3c_ref[pl.ds((s * 4 + pos) * tb, tb), :] = (m + b2).astype(bf16)

  # ---- stage 3: conv3 (1x1, 64->128) ----
  acc3_ref[...] = jnp.dot(x3c_ref[...], w3_ref[...], preferred_element_type=f32)

  # ---- pool3 (+ conv3 bias) -> feat laid out (tb, 9*128) for a single fc1 matmul ----
  b3 = b3_ref[...]
  for s in range(9):
    base = s * 4 * tb
    m = jnp.maximum(
        jnp.maximum(acc3_ref[pl.ds(base, tb), :],
                    acc3_ref[pl.ds(base + tb, tb), :]),
        jnp.maximum(acc3_ref[pl.ds(base + 2 * tb, tb), :],
                    acc3_ref[pl.ds(base + 3 * tb, tb), :]))
    feat_ref[:, pl.ds(s * 128, 128)] = (m + b3).astype(bf16)      # vreg-aligned lane block

  # ---- head: fc1 (K=1152) + ReLU + dropout + fc2 + softmax (lane-padded to 128 classes) ----
  h = jnp.dot(feat_ref[...], wf1_ref[...], preferred_element_type=f32) + bf1_ref[...]
  h = jnp.maximum(h, 0.0) * drop_ref[...]        # precomputed {0, 2} inverted-dropout mask
  logits = jnp.dot(h.astype(bf16), wf2_ref[...], preferred_element_type=f32) + bf2_ref[...]
  z = logits - jnp.max(logits, axis=-1, keepdims=True)
  e = jnp.exp(z)                                  # padded classes have bias -3e4 -> exp == 0
  o_ref[...] = (e / jnp.sum(e, axis=-1, keepdims=True)).astype(o_ref.dtype)


# ----------------------------- wrapper -----------------------------

def _pick_tile(batch):
  # tb must be a multiple of 8 so every in-kernel row block is sublane aligned.  8-image tiles
  # keep the per-step footprint ~7 MiB; batch>=32 uses 16-image tiles (bigger matmul M, fewer
  # grid steps) and still leaves >4x headroom inside v7x's 64 MiB VMEM.
  return 16 if batch >= 32 else 8


def _build_conv1_patches(x_nchw, n_tiles, tb):
  """Pool-window-grouped im2col for conv1.

  Rows (per batch tile): ((y2+1)*24 + (x2+8))*tb + b for pool window (y2, x2) in 14x14; every
  other row (the conv2 zero-pad ring and the slack columns) is all-zero.  Columns: 4 window
  positions x (49 taps + 1 bias ones-column) = 200.
  """
  batch = x_nchw.shape[0]
  b_pad = n_tiles * tb
  ximg = x_nchw.reshape(batch, 28, 28).astype(jnp.float32)
  ximg = jnp.pad(ximg, ((0, b_pad - batch), (3, 3), (3, 3)))             # (B_pad, 34, 34)
  taps = jnp.stack([ximg[:, di:di + 28, dj:dj + 28]
                    for di in range(7) for dj in range(7)], axis=-1)     # (B_pad, 28, 28, 49)
  taps = jnp.concatenate([taps, jnp.ones_like(taps[..., :1])], axis=-1)  # + bias ones column
  taps = taps.reshape(b_pad, 14, 2, 14, 2, 50)                           # b, y2, py, x2, px, t
  taps = taps.transpose(1, 3, 0, 2, 4, 5).reshape(14, 14, b_pad, 200)    # cols = (py*2+px)*50 + t
  taps = jnp.pad(taps, ((1, 1), (8, 2), (0, 0), (0, 0)))                 # 16 x 24 padded plane
  taps = taps.reshape(16, 24, n_tiles, tb, 200).transpose(2, 0, 1, 3, 4)
  return taps.reshape(n_tiles * 384 * tb, 200).astype(jnp.bfloat16)


def _prep_weights(p):
  """Torch-layout parameters -> kernel layouts (tiny, done under jit)."""
  bf16 = jnp.bfloat16
  # conv1: block-diagonal over the 4 pool positions; torch conv1.weight[co,0,di,dj] -> row di*7+dj.
  w1k = p["conv1_w"].reshape(32, 49).T
  blk = jnp.concatenate([w1k, p["conv1_b"][None, :]], axis=0)            # (50, 32), bias row last
  w1blk = jnp.zeros((200, 128), jnp.float32)
  for q in range(4):
    w1blk = w1blk.at[q * 50:(q + 1) * 50, q * 32:(q + 1) * 32].set(blk)
  # conv2: row (di*3+dj)*32 + ci  <->  torch conv2.weight[co, ci, di, dj]
  w2k = p["conv2_w"].transpose(2, 3, 1, 0).reshape(288, 64)
  # conv3 (1x1): (ci, co)
  w3k = p["conv3_w"].reshape(128, 64).T
  # fc1: kernel feature lane = s*128 + c  vs  torch flatten index c*9 + s (NCHW flatten baked in)
  wf1k = p["fc1_w"].T.reshape(128, 9, 128).transpose(1, 0, 2).reshape(1152, 128)
  # fc2: lane-pad 10 classes to 128; padded classes get a -3e4 bias so softmax ignores them.
  wf2k = jnp.zeros((128, 128), jnp.float32).at[:, :10].set(p["fc2_w"].T)
  bf2k = jnp.full((1, 128), -30000.0, jnp.float32).at[0, :10].set(p["fc2_b"])
  return (w1blk.astype(bf16), w2k.astype(bf16), p["conv2_b"].reshape(1, 64),
          w3k.astype(bf16), p["conv3_b"].reshape(1, 128),
          wf1k.astype(bf16), p["fc1_b"].reshape(1, 128),
          wf2k.astype(bf16), bf2k)


@jax.jit
def neural_network_forward(x_nchw, params, dropout_key):
  batch = x_nchw.shape[0]
  tb = _pick_tile(batch)
  n_tiles = -(-batch // tb)          # pad the batch to a whole number of tiles
  b_pad = n_tiles * tb

  patch = _build_conv1_patches(x_nchw, n_tiles, tb)
  (w1blk, w2k, b2k, w3k, b3k, wf1k, bf1k, wf2k, bf2k) = _prep_weights(params)

  # nn.Dropout(p=0.5) is constructed inside forward() -> always training mode.
  # TODO(synk): the mask comes from jax.random, so it cannot match torch's RNG bit-for-bit.
  keep = jax.random.bernoulli(dropout_key, 0.5, (b_pad, 128))
  drop = keep.astype(jnp.float32) * 2.0            # inverted dropout: scale by 1/(1-p)

  kernel = functools.partial(_fused_forward_kernel, tb=tb)
  const2 = lambda g: (0, 0)

  out = pl.pallas_call(
      kernel,
      out_shape=jax.ShapeDtypeStruct((b_pad, 128), jnp.float32),
      grid=(n_tiles,),
      in_specs=[
          pl.BlockSpec((384 * tb, 200), lambda g: (g, 0)),   # conv1 im2col patches
          pl.BlockSpec((tb, 128), lambda g: (g, 0)),         # dropout mask
          pl.BlockSpec((200, 128), const2),                  # conv1 block-diag weight (+bias row)
          pl.BlockSpec((288, 64), const2),                   # conv2 weight
          pl.BlockSpec((1, 64), const2),                     # conv2 bias
          pl.BlockSpec((64, 128), const2),                   # conv3 weight
          pl.BlockSpec((1, 128), const2),                    # conv3 bias
          pl.BlockSpec((1152, 128), const2),                 # fc1 weight
          pl.BlockSpec((1, 128), const2),                    # fc1 bias
          pl.BlockSpec((128, 128), const2),                  # fc2 weight (lane-padded)
          pl.BlockSpec((1, 128), const2),                    # fc2 bias (lane-padded)
      ],
      out_specs=pl.BlockSpec((tb, 128), lambda g: (g, 0)),
      scratch_shapes=[
          pltpu.VMEM((_X2_ROWS * tb, 32), jnp.bfloat16),     # pool1 out / padded conv2 input
          pltpu.VMEM((_ACC2_ROWS * tb, 64), jnp.float32),    # conv2 output
          pltpu.VMEM((36 * tb, 64), jnp.bfloat16),           # pool2 out / conv3 input
          pltpu.VMEM((36 * tb, 128), jnp.float32),           # conv3 output
          pltpu.VMEM((tb, 1152), jnp.bfloat16),              # pooled features for fc1
      ],
      compiler_params=pltpu.CompilerParams(
          dimension_semantics=("parallel",),
          vmem_limit_bytes=40 * 1024 * 1024,
      ),
  )(patch, drop, w1blk, w2k, b2k, w3k, b3k, wf1k, bf1k, wf2k, bf2k)

  return out[:batch, :10]


# ----------------------------- deterministic params (torch layouts) -----------------------------

def init_params(key):
  ks = jax.random.split(key, 10)

  def w(k, shape, fan_in):
    return jax.random.normal(k, shape, jnp.float32) / jnp.sqrt(float(fan_in))

  return {
      "conv1_w": w(ks[0], (32, 1, 7, 7), 49),
      "conv1_b": 0.01 * jax.random.normal(ks[1], (32,), jnp.float32),
      "conv2_w": w(ks[2], (64, 32, 3, 3), 32 * 9),
      "conv2_b": 0.01 * jax.random.normal(ks[3], (64,), jnp.float32),
      "conv3_w": w(ks[4], (128, 64, 1, 1), 64),
      "conv3_b": 0.01 * jax.random.normal(ks[5], (128,), jnp.float32),
      "fc1_w": w(ks[6], (128, 1152), 1152),
      "fc1_b": 0.01 * jax.random.normal(ks[7], (128,), jnp.float32),
      "fc2_w": w(ks[8], (10, 128), 128),
      "fc2_b": 0.01 * jax.random.normal(ks[9], (10,), jnp.float32),
  }


if __name__ == "__main__":
  key = jax.random.PRNGKey(0)
  kp, kx, kd = jax.random.split(key, 3)
  params = init_params(kp)
  # batch=2, 1 channel, 28x28 spatial (implied by the 128*3*3 flatten in the module)
  x = jax.random.normal(kx, (2, 1, 28, 28), jnp.float32)

  out = jax.block_until_ready(neural_network_forward(x, params, kd))

  assert out.shape == (2, 10), out.shape
  assert bool(jnp.all(jnp.isfinite(out)))
  assert bool(jnp.all(jnp.abs(jnp.sum(out, axis=1) - 1.0) < 1e-3))   # softmax rows sum to 1
  print("KERNEL_OK")
</pallas_src>

<mosaic_0001>
module attributes {stable_mosaic.version = 11 : i64} {
  func.func @_fused_forward_kernel(%arg0: i32, %arg1: memref<3072x200xbf16, #tpu.memory_space<vmem>>, %arg2: memref<8x128xf32, #tpu.memory_space<vmem>>, %arg3: memref<200x128xbf16, #tpu.memory_space<vmem>>, %arg4: memref<288x64xbf16, #tpu.memory_space<vmem>>, %arg5: memref<1x64xf32, #tpu.memory_space<vmem>>, %arg6: memref<64x128xbf16, #tpu.memory_space<vmem>>, %arg7: memref<1x128xf32, #tpu.memory_space<vmem>>, %arg8: memref<1152x128xbf16, #tpu.memory_space<vmem>>, %arg9: memref<1x128xf32, #tpu.memory_space<vmem>>, %arg10: memref<128x128xbf16, #tpu.memory_space<vmem>>, %arg11: memref<1x128xf32, #tpu.memory_space<vmem>>, %arg12: memref<8x128xf32, #tpu.memory_space<vmem>>, %arg13: memref<3200x32xbf16, #tpu.memory_space<vmem>>, %arg14: memref<2688x64xf32, #tpu.memory_space<vmem>>, %arg15: memref<288x64xbf16, #tpu.memory_space<vmem>>, %arg16: memref<288x128xf32, #tpu.memory_space<vmem>>, %arg17: memref<8x1152xbf16, #tpu.memory_space<vmem>>) attributes {dimension_semantics = [#tpu.dimension_semantics<parallel>], iteration_bounds = array<i64: 1>, scalar_prefetch = 0 : i64, scratch_operands = 5 : i64, tpu.core_type = #tpu.core_type<tc>, window_params = [{transform_indices = @transform_0, window_bounds = array<i64: 3072, 200>}, {transform_indices = @transform_1, window_bounds = array<i64: 8, 128>}, {pipeline_mode = #tpu.pipeline_mode<synchronous>, transform_indices = @transform_2, window_bounds = array<i64: 200, 128>}, {pipeline_mode = #tpu.pipeline_mode<synchronous>, transform_indices = @transform_3, window_bounds = array<i64: 288, 64>}, {pipeline_mode = #tpu.pipeline_mode<synchronous>, transform_indices = @transform_4, window_bounds = array<i64: 1, 64>}, {pipeline_mode = #tpu.pipeline_mode<synchronous>, transform_indices = @transform_5, window_bounds = array<i64: 64, 128>}, {pipeline_mode = #tpu.pipeline_mode<synchronous>, transform_indices = @transform_6, window_bounds = array<i64: 1, 128>}, {pipeline_mode = #tpu.pipeline_mode<synchronous>, transform_indices = @transform_7, window_bounds = array<i64: 1152, 128>}, {pipeline_mode = #tpu.pipeline_mode<synchronous>, transform_indices = @transform_8, window_bounds = array<i64: 1, 128>}, {pipeline_mode = #tpu.pipeline_mode<synchronous>, transform_indices = @transform_9, window_bounds = array<i64: 128, 128>}, {pipeline_mode = #tpu.pipeline_mode<synchronous>, transform_indices = @transform_10, window_bounds = array<i64: 1, 128>}, {transform_indices = @transform_11, window_bounds = array<i64: 8, 128>}]} {
    %c0_i32 = arith.constant 0 : i32
    %c24_i32 = arith.constant 24 : i32
    %0 = arith.addi %c0_i32, %c24_i32 : i32
    %c1_i32 = arith.constant 1 : i32
    scf.for %arg18 = %c0_i32 to %0 step %c1_i32  : i32 {
      %c128_i32 = arith.constant 128 : i32
      %529 = arith.muli %arg18, %c128_i32 : i32
      %530 = tpu.assume_multiple %529, 128 : i32
      %531 = arith.index_cast %530 : i32 to index
      %c0_325 = arith.constant 0 : index
      %532 = vector.load %arg1[%531, %c0_325] : memref<3072x200xbf16, #tpu.memory_space<vmem>>, vector<128x200xbf16>
      %c0_326 = arith.constant 0 : index
      %c0_327 = arith.constant 0 : index
      %533 = vector.load %arg3[%c0_326, %c0_327] : memref<200x128xbf16, #tpu.memory_space<vmem>>, vector<200x128xbf16>
      %cst_328 = arith.constant dense<0.000000e+00> : vector<128x128xf32>
      %534 = tpu.matmul %532, %533, %cst_328 {dimension_numbers = #tpu.dot_dimension_numbers<[1], [0], [0], [1], [0, 0, 1, 1], [], []>} : vector<128x200xbf16>, vector<200x128xbf16>, vector<128x128xf32> -> vector<128x128xf32>
      %535 = vector.extract_strided_slice %534 {offsets = [0, 0], sizes = [128, 32], strides = [1, 1]} : vector<128x128xf32> to vector<128x32xf32>
      %536 = vector.extract_strided_slice %534 {offsets = [0, 32], sizes = [128, 32], strides = [1, 1]} : vector<128x128xf32> to vector<128x32xf32>
      %537 = arith.maximumf %535, %536 : vector<128x32xf32>
      %538 = vector.extract_strided_slice %534 {offsets = [0, 64], sizes = [128, 32], strides = [1, 1]} : vector<128x128xf32> to vector<128x32xf32>
      %539 = vector.extract_strided_slice %534 {offsets = [0, 96], sizes = [128, 32], strides = [1, 1]} : vector<128x128xf32> to vector<128x32xf32>
      %540 = arith.maximumf %538, %539 : vector<128x32xf32>
      %541 = arith.maximumf %537, %540 : vector<128x32xf32>
      %542 = arith.truncf %541 : vector<128x32xf32> to vector<128x32xbf16>
      %543 = arith.index_cast %530 : i32 to index
      %c0_329 = arith.constant 0 : index
      %544 = vector.load %arg13[%543, %c0_329] : memref<3200x32xbf16, #tpu.memory_space<vmem>>, vector<128x32xbf16>
      tpu.vector_store %arg13[%543, %c0_329], %542 {strides = array<i32>} : memref<3200x32xbf16, #tpu.memory_space<vmem>>, vector<128x32xbf16>,
    }
    %c24_i32_0 = arith.constant 24 : i32
    %c0_i32_1 = arith.constant 0 : i32
    %c21_i32 = arith.constant 21 : i32
    %1 = arith.addi %c0_i32_1, %c21_i32 : i32
    %c1_i32_2 = arith.constant 1 : i32
    scf.for %arg18 = %c0_i32_1 to %1 step %c1_i32_2  : i32 {
      %c128_i32 = arith.constant 128 : i32
      %529 = arith.muli %arg18, %c128_i32 : i32
      %530 = tpu.assume_multiple %529, 128 : i32
      %c56_i32 = arith.constant 56 : i32
      %531 = arith.addi %530, %c56_i32 : i32
      %532 = tpu.assume_multiple %531, 8 : i32
      %533 = arith.index_cast %532 : i32 to index
      %c0_325 = arith.constant 0 : index
      %534 = vector.load %arg13[%533, %c0_325] : memref<3200x32xbf16, #tpu.memory_space<vmem>>, vector<128x32xbf16>
      %c0_326 = arith.constant 0 : index
      %c0_327 = arith.constant 0 : index
      %535 = vector.load %arg4[%c0_326, %c0_327] : memref<288x64xbf16, #tpu.memory_space<vmem>>, vector<32x64xbf16>
      %cst_328 = arith.constant dense<0.000000e+00> : vector<128x64xf32>
      %536 = tpu.matmul %534, %535, %cst_328 {dimension_numbers = #tpu.dot_dimension_numbers<[1], [0], [0], [1], [0, 0, 1, 1], [], []>} : vector<128x32xbf16>, vector<32x64xbf16>, vector<128x64xf32> -> vector<128x64xf32>
      %c64_i32 = arith.constant 64 : i32
      %537 = arith.addi %530, %c64_i32 : i32
      %538 = tpu.assume_multiple %537, 8 : i32
      %539 = arith.index_cast %538 : i32 to index
      %c0_329 = arith.constant 0 : index
      %540 = vector.load %arg13[%539, %c0_329] : memref<3200x32xbf16, #tpu.memory_space<vmem>>, vector<128x32xbf16>
      %c32_330 = arith.constant 32 : index
      %c0_331 = arith.constant 0 : index
      %541 = vector.load %arg4[%c32_330, %c0_331] : memref<288x64xbf16, #tpu.memory_space<vmem>>, vector<32x64xbf16>
      %cst_332 = arith.constant dense<0.000000e+00> : vector<128x64xf32>
      %542 = tpu.matmul %540, %541, %cst_332 {dimension_numbers = #tpu.dot_dimension_numbers<[1], [0], [0], [1], [0, 0, 1, 1], [], []>} : vector<128x32xbf16>, vector<32x64xbf16>, vector<128x64xf32> -> vector<128x64xf32>
      %543 = arith.addf %536, %542 : vector<128x64xf32>
      %c72_i32 = arith.constant 72 : i32
      %544 = arith.addi %530, %c72_i32 : i32
      %545 = tpu.assume_multiple %544, 8 : i32
      %546 = arith.index_cast %545 : i32 to index
      %c0_333 = arith.constant 0 : index
      %547 = vector.load %arg13[%546, %c0_333] : memref<3200x32xbf16, #tpu.memory_space<vmem>>, vector<128x32xbf16>
      %c64_334 = arith.constant 64 : index
      %c0_335 = arith.constant 0 : index
      %548 = vector.load %arg4[%c64_334, %c0_335] : memref<288x64xbf16, #tpu.memory_space<vmem>>, vector<32x64xbf16>
      %cst_336 = arith.constant dense<0.000000e+00> : vector<128x64xf32>
      %549 = tpu.matmul %547, %548, %cst_336 {dimension_numbers = #tpu.dot_dimension_numbers<[1], [0], [0], [1], [0, 0, 1, 1], [], []>} : vector<128x32xbf16>, vector<32x64xbf16>, vector<128x64xf32> -> vector<128x64xf32>
      %550 = arith.addf %543, %549 : vector<128x64xf32>
      %c248_i32 = arith.constant 248 : i32
      %551 = arith.addi %530, %c248_i32 : i32
      %552 = tpu.assume_multiple %551, 8 : i32
      %553 = arith.index_cast %552 : i32 to index
      %c0_337 = arith.constant 0 : index
      %554 = vector.load %arg13[%553, %c0_337] : memref<3200x32xbf16, #tpu.memory_space<vmem>>, vector<128x32xbf16>
      %c96_338 = arith.constant 96 : index
      %c0_339 = arith.constant 0 : index
      %555 = vector.load %arg4[%c96_338, %c0_339] : memref<288x64xbf16, #tpu.memory_space<vmem>>, vector<32x64xbf16>
      %cst_340 = arith.constant dense<0.000000e+00> : vector<128x64xf32>
      %556 = tpu.matmul %554, %555, %cst_340 {dimension_numbers = #tpu.dot_dimension_numbers<[1], [0], [0], [1], [0, 0, 1, 1], [], []>} : vector<128x32xbf16>, vector<32x64xbf16>, vector<128x64xf32> -> vector<128x64xf32>
      %557 = arith.addf %550, %556 : vector<128x64xf32>
      %c256_i32 = arith.constant 256 : i32
      %558 = arith.addi %530, %c256_i32 : i32
      %559 = tpu.assume_multiple %558, 8 : i32
      %560 = arith.index_cast %559 : i32 to index
      %c0_341 = arith.constant 0 : index
      %561 = vector.load %arg13[%560, %c0_341] : memref<3200x32xbf16, #tpu.memory_space<vmem>>, vector<128x32xbf16>
      %c128_342 = arith.constant 128 : index
      %c0_343 = arith.constant 0 : index
      %562 = vector.load %arg4[%c128_342, %c0_343] : memref<288x64xbf16, #tpu.memory_space<vmem>>, vector<32x64xbf16>
      %cst_344 = arith.constant dense<0.000000e+00> : vector<128x64xf32>
      %563 = tpu.matmul %561, %562, %cst_344 {dimension_numbers = #tpu.dot_dimension_numbers<[1], [0], [0], [1], [0, 0, 1, 1], [], []>} : vector<128x32xbf16>, vector<32x64xbf16>, vector<128x64xf32> -> vector<128x64xf32>
      %564 = arith.addf %557, %563 : vector<128x64xf32>
      %c264_i32 = arith.constant 264 : i32
      %565 = arith.addi %530, %c264_i32 : i32
      %566 = tpu.assume_multiple %565, 8 : i32
      %567 = arith.index_cast %566 : i32 to index
      %c0_345 = arith.constant 0 : index
      %568 = vector.load %arg13[%567, %c0_345] : memref<3200x32xbf16, #tpu.memory_space<vmem>>, vector<128x32xbf16>
      %c160_346 = arith.constant 160 : index
      %c0_347 = arith.constant 0 : index
      %569 = vector.load %arg4[%c160_346, %c0_347] : memref<288x64xbf16, #tpu.memory_space<vmem>>, vector<32x64xbf16>
      %cst_348 = arith.constant dense<0.000000e+00> : vector<128x64xf32>
      %570 = tpu.matmul %568, %569, %cst_348 {dimension_numbers = #tpu.dot_dimension_numbers<[1], [0], [0], [1], [0, 0, 1, 1], [], []>} : vector<128x32xbf16>, vector<32x64xbf16>, vector<128x64xf32> -> vector<128x64xf32>
      %571 = arith.addf %564, %570 : vector<128x64xf32>
      %c440_i32 = arith.constant 440 : i32
      %572 = arith.addi %530, %c440_i32 : i32
      %573 = tpu.assume_multiple %572, 8 : i32
      %574 = arith.index_cast %573 : i32 to index
      %c0_349 = arith.constant 0 : index
      %575 = vector.load %arg13[%574, %c0_349] : memref<3200x32xbf16, #tpu.memory_space<vmem>>, vector<128x32xbf16>
      %c192_350 = arith.constant 192 : index
      %c0_351 = arith.constant 0 : index
      %576 = vector.load %arg4[%c192_350, %c0_351] : memref<288x64xbf16, #tpu.memory_space<vmem>>, vector<32x64xbf16>
      %cst_352 = arith.constant dense<0.000000e+00> : vector<128x64xf32>
      %577 = tpu.matmul %575, %576, %cst_352 {dimension_numbers = #tpu.dot_dimension_numbers<[1], [0], [0], [1], [0, 0, 1, 1], [], []>} : vector<128x32xbf16>, vector<32x64xbf16>, vector<128x64xf32> -> vector<128x64xf32>
      %578 = arith.addf %571, %577 : vector<128x64xf32>
      %c448_i32 = arith.constant 448 : i32
      %579 = arith.addi %530, %c448_i32 : i32
      %580 = tpu.assume_multiple %579, 8 : i32
      %581 = arith.index_cast %580 : i32 to index
      %c0_353 = arith.constant 0 : index
      %582 = vector.load %arg13[%581, %c0_353] : memref<3200x32xbf16, #tpu.memory_space<vmem>>, vector<128x32xbf16>
      %c224_354 = arith.constant 224 : index
      %c0_355 = arith.constant 0 : index
      %583 = vector.load %arg4[%c224_354, %c0_355] : memref<288x64xbf16, #tpu.memory_space<vmem>>, vector<32x64xbf16>
      %cst_356 = arith.constant dense<0.000000e+00> : vector<128x64xf32>
      %584 = tpu.matmul %582, %583, %cst_356 {dimension_numbers = #tpu.dot_dimension_numbers<[1], [0], [0], [1], [0, 0, 1, 1], [], []>} : vector<128x32xbf16>, vector<32x64xbf16>, vector<128x64xf32> -> vector<128x64xf32>
      %585 = arith.addf %578, %584 : vector<128x64xf32>
      %c456_i32 = arith.constant 456 : i32
      %586 = arith.addi %530, %c456_i32 : i32
      %587 = tpu.assume_multiple %586, 8 : i32
      %588 = arith.index_cast %587 : i32 to index
      %c0_357 = arith.constant 0 : index
      %589 = vector.load %arg13[%588, %c0_357] : memref<3200x32xbf16, #tpu.memory_space<vmem>>, vector<128x32xbf16>
      %c256_358 = arith.constant 256 : index
      %c0_359 = arith.constant 0 : index
      %590 = vector.load %arg4[%c256_358, %c0_359] : memref<288x64xbf16, #tpu.memory_space<vmem>>, vector<32x64xbf16>
      %cst_360 = arith.constant dense<0.000000e+00> : vector<128x64xf32>
      %591 = tpu.matmul %589, %590, %cst_360 {dimension_numbers = #tpu.dot_dimension_numbers<[1], [0], [0], [1], [0, 0, 1, 1], [], []>} : vector<128x32xbf16>, vector<32x64xbf16>, vector<128x64xf32> -> vector<128x64xf32>
      %592 = arith.addf %585, %591 : vector<128x64xf32>
      %593 = arith.index_cast %530 : i32 to index
      %c0_361 = arith.constant 0 : index
      %594 = vector.load %arg14[%593, %c0_361] : memref<2688x64xf32, #tpu.memory_space<vmem>>, vector<128x64xf32>
      tpu.vector_store %arg14[%593, %c0_361], %592 {strides = array<i32>} : memref<2688x64xf32, #tpu.memory_space<vmem>>, vector<128x64xf32>,
    }
    %c21_i32_3 = arith.constant 21 : i32
    %c0 = arith.constant 0 : index
    %c0_4 = arith.constant 0 : index
    %2 = vector.load %arg5[%c0, %c0_4] : memref<1x64xf32, #tpu.memory_space<vmem>>, vector<1x64xf32>
    %c0_5 = arith.constant 0 : index
    %c0_6 = arith.constant 0 : index
    %3 = vector.load %arg14[%c0_5, %c0_6] : memref<2688x64xf32, #tpu.memory_space<vmem>>, vector<8x64xf32>
    %c8 = arith.constant 8 : index
    %c0_7 = arith.constant 0 : index
    %4 = vector.load %arg14[%c8, %c0_7] : memref<2688x64xf32, #tpu.memory_space<vmem>>, vector<8x64xf32>
    %5 = arith.maximumf %3, %4 : vector<8x64xf32>
    %c192 = arith.constant 192 : index
    %c0_8 = arith.constant 0 : index
    %6 = vector.load %arg14[%c192, %c0_8] : memref<2688x64xf32, #tpu.memory_space<vmem>>, vector<8x64xf32>
    %c200 = arith.constant 200 : index
    %c0_9 = arith.constant 0 : index
    %7 = vector.load %arg14[%c200, %c0_9] : memref<2688x64xf32, #tpu.memory_space<vmem>>, vector<8x64xf32>
    %8 = arith.maximumf %6, %7 : vector<8x64xf32>
    %9 = arith.maximumf %5, %8 : vector<8x64xf32>
    %10 = vector.broadcast %2 : vector<1x64xf32> to vector<8x64xf32>
    %11 = arith.addf %9, %10 : vector<8x64xf32>
    %12 = arith.truncf %11 : vector<8x64xf32> to vector<8x64xbf16>
    %c0_10 = arith.constant 0 : index
    %c0_11 = arith.constant 0 : index
    %13 = vector.load %arg15[%c0_10, %c0_11] : memref<288x64xbf16, #tpu.memory_space<vmem>>, vector<8x64xbf16>
    tpu.vector_store %arg15[%c0_10, %c0_11], %12 {strides = array<i32>} : memref<288x64xbf16, #tpu.memory_space<vmem>>, vector<8x64xbf16>,
    %c16 = arith.constant 16 : index
    %c0_12 = arith.constant 0 : index
    %14 = vector.load %arg14[%c16, %c0_12] : memref<2688x64xf32, #tpu.memory_space<vmem>>, vector<8x64xf32>
    %c24 = arith.constant 24 : index
    %c0_13 = arith.constant 0 : index
    %15 = vector.load %arg14[%c24, %c0_13] : memref<2688x64xf32, #tpu.memory_space<vmem>>, vector<8x64xf32>
    %16 = arith.maximumf %14, %15 : vector<8x64xf32>
    %c208 = arith.constant 208 : index
    %c0_14 = arith.constant 0 : index
    %17 = vector.load %arg14[%c208, %c0_14] : memref<2688x64xf32, #tpu.memory_space<vmem>>, vector<8x64xf32>
    %c216 = arith.constant 216 : index
    %c0_15 = arith.constant 0 : index
    %18 = vector.load %arg14[%c216, %c0_15] : memref<2688x64xf32, #tpu.memory_space<vmem>>, vector<8x64xf32>
    %19 = arith.maximumf %17, %18 : vector<8x64xf32>
    %20 = arith.maximumf %16, %19 : vector<8x64xf32>
    %21 = vector.broadcast %2 : vector<1x64xf32> to vector<8x64xf32>
    %22 = arith.addf %20, %21 : vector<8x64xf32>
    %23 = arith.truncf %22 : vector<8x64xf32> to vector<8x64xbf16>
    %c8_16 = arith.constant 8 : index
    %c0_17 = arith.constant 0 : index
    %24 = vector.load %arg15[%c8_16, %c0_17] : memref<288x64xbf16, #tpu.memory_space<vmem>>, vector<8x64xbf16>
    tpu.vector_store %arg15[%c8_16, %c0_17], %23 {strides = array<i32>} : memref<288x64xbf16, #tpu.memory_space<vmem>>, vector<8x64xbf16>,
    %c32 = arith.constant 32 : index
    %c0_18 = arith.constant 0 : index
    %25 = vector.load %arg14[%c32, %c0_18] : memref<2688x64xf32, #tpu.memory_space<vmem>>, vector<8x64xf32>
    %c40 = arith.constant 40 : index
    %c0_19 = arith.constant 0 : index
    %26 = vector.load %arg14[%c40, %c0_19] : memref<2688x64xf32, #tpu.memory_space<vmem>>, vector<8x64xf32>
    %27 = arith.maximumf %25, %26 : vector<8x64xf32>
    %c224 = arith.constant 224 : index
    %c0_20 = arith.constant 0 : index
    %28 = vector.load %arg14[%c224, %c0_20] : memref<2688x64xf32, #tpu.memory_space<vmem>>, vector<8x64xf32>
    %c232 = arith.constant 232 : index
    %c0_21 = arith.constant 0 : index
    %29 = vector.load %arg14[%c232, %c0_21] : memref<2688x64xf32, #tpu.memory_space<vmem>>, vector<8x64xf32>
    %30 = arith.maximumf %28, %29 : vector<8x64xf32>
    %31 = arith.maximumf %27, %30 : vector<8x64xf32>
    %32 = vector.broadcast %2 : vector<1x64xf32> to vector<8x64xf32>
    %33 = arith.addf %31, %32 : vector<8x64xf32>
    %34 = arith.truncf %33 : vector<8x64xf32> to vector<8x64xbf16>
    %c32_22 = arith.constant 32 : index
    %c0_23 = arith.constant 0 : index
    %35 = vector.load %arg15[%c32_22, %c0_23] : memref<288x64xbf16, #tpu.memory_space<vmem>>, vector<8x64xbf16>
    tpu.vector_store %arg15[%c32_22, %c0_23], %34 {strides = array<i32>} : memref<288x64xbf16, #tpu.memory_space<vmem>>, vector<8x64xbf16>,
    %c48 = arith.constant 48 : index
    %c0_24 = arith.constant 0 : index
    %36 = vector.load %arg14[%c48, %c0_24] : memref<2688x64xf32, #tpu.memory_space<vmem>>, vector<8x64xf32>
    %c56 = arith.constant 56 : index
    %c0_25 = arith.constant 0 : index
    %37 = vector.load %arg14[%c56, %c0_25] : memref<2688x64xf32, #tpu.memory_space<vmem>>, vector<8x64xf32>
    %38 = arith.maximumf %36, %37 : vector<8x64xf32>
    %c240 = arith.constant 240 : index
    %c0_26 = arith.constant 0 : index
    %39 = vector.load %arg14[%c240, %c0_26] : memref<2688x64xf32, #tpu.memory_space<vmem>>, vector<8x64xf32>
    %c248 = arith.constant 248 : index
    %c0_27 = arith.constant 0 : index
    %40 = vector.load %arg14[%c248, %c0_27] : memref<2688x64xf32, #tpu.memory_space<vmem>>, vector<8x64xf32>
    %41 = arith.maximumf %39, %40 : vector<8x64xf32>
    %42 = arith.maximumf %38, %41 : vector<8x64xf32>
    %43 = vector.broadcast %2 : vector<1x64xf32> to vector<8x64xf32>
    %44 = arith.addf %42, %43 : vector<8x64xf32>
    %45 = arith.truncf %44 : vector<8x64xf32> to vector<8x64xbf16>
    %c40_28 = arith.constant 40 : index
    %c0_29 = arith.constant 0 : index
    %46 = vector.load %arg15[%c40_28, %c0_29] : memref<288x64xbf16, #tpu.memory_space<vmem>>, vector<8x64xbf16>
    tpu.vector_store %arg15[%c40_28, %c0_29], %45 {strides = array<i32>} : memref<288x64xbf16, #tpu.memory_space<vmem>>, vector<8x64xbf16>,
    %c64 = arith.constant 64 : index
    %c0_30 = arith.constant 0 : index
    %47 = vector.load %arg14[%c64, %c0_30] : memref<2688x64xf32, #tpu.memory_space<vmem>>, vector<8x64xf32>
    %c72 = arith.constant 72 : index
    %c0_31 = arith.constant 0 : index
    %48 = vector.load %arg14[%c72, %c0_31] : memref<2688x64xf32, #tpu.memory_space<vmem>>, vector<8x64xf32>
    %49 = arith.maximumf %47, %48 : vector<8x64xf32>
    %c256 = arith.constant 256 : index
    %c0_32 = arith.constant 0 : index
    %50 = vector.load %arg14[%c256, %c0_32] : memref<2688x64xf32, #tpu.memory_space<vmem>>, vector<8x64xf32>
    %c264 = arith.constant 264 : index
    %c0_33 = arith.constant 0 : index
    %51 = vector.load %arg14[%c264, %c0_33] : memref<2688x64xf32, #tpu.memory_space<vmem>>, vector<8x64xf32>
    %52 = arith.maximumf %50, %51 : vector<8x64xf32>
    %53 = arith.maximumf %49, %52 : vector<8x64xf32>
    %54 = vector.broadcast %2 : vector<1x64xf32> to vector<8x64xf32>
    %55 = arith.addf %53, %54 : vector<8x64xf32>
    %56 = arith.truncf %55 : vector<8x64xf32> to vector<8x64xbf16>
    %c64_34 = arith.constant 64 : index
    %c0_35 = arith.constant 0 : index
    %57 = vector.load %arg15[%c64_34, %c0_35] : memref<288x64xbf16, #tpu.memory_space<vmem>>, vector<8x64xbf16>
    tpu.vector_store %arg15[%c64_34, %c0_35], %56 {strides = array<i32>} : memref<288x64xbf16, #tpu.memory_space<vmem>>, vector<8x64xbf16>,
    %c80 = arith.constant 80 : index
    %c0_36 = arith.constant 0 : index
    %58 = vector.load %arg14[%c80, %c0_36] : memref<2688x64xf32, #tpu.memory_space<vmem>>, vector<8x64xf32>
    %c88 = arith.constant 88 : index
    %c0_37 = arith.constant 0 : index
    %59 = vector.load %arg14[%c88, %c0_37] : memref<2688x64xf32, #tpu.memory_space<vmem>>, vector<8x64xf32>
    %60 = arith.maximumf %58, %59 : vector<8x64xf32>
    %c272 = arith.constant 272 : index
    %c0_38 = arith.constant 0 : index
    %61 = vector.load %arg14[%c272, %c0_38] : memref<2688x64xf32, #tpu.memory_space<vmem>>, vector<8x64xf32>
    %c280 = arith.constant 280 : index
    %c0_39 = arith.constant 0 : index
    %62 = vector.load %arg14[%c280, %c0_39] : memref<2688x64xf32, #tpu.memory_space<vmem>>, vector<8x64xf32>
    %63 = arith.maximumf %61, %62 : vector<8x64xf32>
    %64 = arith.maximumf %60, %63 : vector<8x64xf32>
    %65 = vector.broadcast %2 : vector<1x64xf32> to vector<8x64xf32>
    %66 = arith.addf %64, %65 : vector<8x64xf32>
    %67 = arith.truncf %66 : vector<8x64xf32> to vector<8x64xbf16>
    %c72_40 = arith.constant 72 : index
    %c0_41 = arith.constant 0 : index
    %68 = vector.load %arg15[%c72_40, %c0_41] : memref<288x64xbf16, #tpu.memory_space<vmem>>, vector<8x64xbf16>
    tpu.vector_store %arg15[%c72_40, %c0_41], %67 {strides = array<i32>} : memref<288x64xbf16, #tpu.memory_space<vmem>>, vector<8x64xbf16>,
    %c384 = arith.constant 384 : index
    %c0_42 = arith.constant 0 : index
    %69 = vector.load %arg14[%c384, %c0_42] : memref<2688x64xf32, #tpu.memory_space<vmem>>, vector<8x64xf32>
    %c392 = arith.constant 392 : index
    %c0_43 = arith.constant 0 : index
    %70 = vector.load %arg14[%c392, %c0_43] : memref<2688x64xf32, #tpu.memory_space<vmem>>, vector<8x64xf32>
    %71 = arith.maximumf %69, %70 : vector<8x64xf32>
    %c576 = arith.constant 576 : index
    %c0_44 = arith.constant 0 : index
    %72 = vector.load %arg14[%c576, %c0_44] : memref<2688x64xf32, #tpu.memory_space<vmem>>, vector<8x64xf32>
    %c584 = arith.constant 584 : index
    %c0_45 = arith.constant 0 : index
    %73 = vector.load %arg14[%c584, %c0_45] : memref<2688x64xf32, #tpu.memory_space<vmem>>, vector<8x64xf32>
    %74 = arith.maximumf %72, %73 : vector<8x64xf32>
    %75 = arith.maximumf %71, %74 : vector<8x64xf32>
    %76 = vector.broadcast %2 : vector<1x64xf32> to vector<8x64xf32>
    %77 = arith.addf %75, %76 : vector<8x64xf32>
    %78 = arith.truncf %77 : vector<8x64xf32> to vector<8x64xbf16>
    %c16_46 = arith.constant 16 : index
    %c0_47 = arith.constant 0 : index
    %79 = vector.load %arg15[%c16_46, %c0_47] : memref<288x64xbf16, #tpu.memory_space<vmem>>, vector<8x64xbf16>
    tpu.vector_store %arg15[%c16_46, %c0_47], %78 {strides = array<i32>} : memref<288x64xbf16, #tpu.memory_space<vmem>>, vector<8x64xbf16>,
    %c400 = arith.constant 400 : index
    %c0_48 = arith.constant 0 : index
    %80 = vector.load %arg14[%c400, %c0_48] : memref<2688x64xf32, #tpu.memory_space<vmem>>, vector<8x64xf32>
    %c408 = arith.constant 408 : index
    %c0_49 = arith.constant 0 : index
    %81 = vector.load %arg14[%c408, %c0_49] : memref<2688x64xf32, #tpu.memory_space<vmem>>, vector<8x64xf32>
    %82 = arith.maximumf %80, %81 : vector<8x64xf32>
    %c592 = arith.constant 592 : index
    %c0_50 = arith.constant 0 : index
    %83 = vector.load %arg14[%c592, %c0_50] : memref<2688x64xf32, #tpu.memory_space<vmem>>, vector<8x64xf32>
    %c600 = arith.constant 600 : index
    %c0_51 = arith.constant 0 : index
    %84 = vector.load %arg14[%c600, %c0_51] : memref<2688x64xf32, #tpu.memory_space<vmem>>, vector<8x64xf32>
    %85 = arith.maximumf %83, %84 : vector<8x64xf32>
    %86 = arith.maximumf %82, %85 : vector<8x64xf32>
    %87 = vector.broadcast %2 : vector<1x64xf32> to vector<8x64xf32>
    %88 = arith.addf %86, %87 : vector<8x64xf32>
    %89 = arith.truncf %88 : vector<8x64xf32> to vector<8x64xbf16>
    %c24_52 = arith.constant 24 : index
    %c0_53 = arith.constant 0 : index
    %90 = vector.load %arg15[%c24_52, %c0_53] : memref<288x64xbf16, #tpu.memory_space<vmem>>, vector<8x64xbf16>
    tpu.vector_store %arg15[%c24_52, %c0_53], %89 {strides = array<i32>} : memref<288x64xbf16, #tpu.memory_space<vmem>>, vector<8x64xbf16>,
    %c416 = arith.constant 416 : index
    %c0_54 = arith.constant 0 : index
    %91 = vector.load %arg14[%c416, %c0_54] : memref<2688x64xf32, #tpu.memory_space<vmem>>, vector<8x64xf32>
    %c424 = arith.constant 424 : index
    %c0_55 = arith.constant 0 : index
    %92 = vector.load %arg14[%c424, %c0_55] : memref<2688x64xf32, #tpu.memory_space<vmem>>, vector<8x64xf32>
    %93 = arith.maximumf %91, %92 : vector<8x64xf32>
    %c608 = arith.constant 608 : index
    %c0_56 = arith.constant 0 : index
    %94 = vector.load %arg14[%c608, %c0_56] : memref<2688x64xf32, #tpu.memory_space<vmem>>, vector<8x64xf32>
    %c616 = arith.constant 616 : index
    %c0_57 = arith.constant 0 : index
    %95 = vector.load %arg14[%c616, %c0_57] : memref<2688x64xf32, #tpu.memory_space<vmem>>, vector<8x64xf32>
    %96 = arith.maximumf %94, %95 : vector<8x64xf32>
    %97 = arith.maximumf %93, %96 : vector<8x64xf32>
    %98 = vector.broadcast %2 : vector<1x64xf32> to vector<8x64xf32>
    %99 = arith.addf %97, %98 : vector<8x64xf32>
    %100 = arith.truncf %99 : vector<8x64xf32> to vector<8x64xbf16>
    %c48_58 = arith.constant 48 : index
    %c0_59 = arith.constant 0 : index
    %101 = vector.load %arg15[%c48_58, %c0_59] : memref<288x64xbf16, #tpu.memory_space<vmem>>, vector<8x64xbf16>
    tpu.vector_store %arg15[%c48_58, %c0_59], %100 {strides = array<i32>} : memref<288x64xbf16, #tpu.memory_space<vmem>>, vector<8x64xbf16>,
    %c432 = arith.constant 432 : index
    %c0_60 = arith.constant 0 : index
    %102 = vector.load %arg14[%c432, %c0_60] : memref<2688x64xf32, #tpu.memory_space<vmem>>, vector<8x64xf32>
    %c440 = arith.constant 440 : index
    %c0_61 = arith.constant 0 : index
    %103 = vector.load %arg14[%c440, %c0_61] : memref<2688x64xf32, #tpu.memory_space<vmem>>, vector<8x64xf32>
    %104 = arith.maximumf %102, %103 : vector<8x64xf32>
    %c624 = arith.constant 624 : index
    %c0_62 = arith.constant 0 : index
    %105 = vector.load %arg14[%c624, %c0_62] : memref<2688x64xf32, #tpu.memory_space<vmem>>, vector<8x64xf32>
    %c632 = arith.constant 632 : index
    %c0_63 = arith.constant 0 : index
    %106 = vector.load %arg14[%c632, %c0_63] : memref<2688x64xf32, #tpu.memory_space<vmem>>, vector<8x64xf32>
    %107 = arith.maximumf %105, %106 : vector<8x64xf32>
    %108 = arith.maximumf %104, %107 : vector<8x64xf32>
    %109 = vector.broadcast %2 : vector<1x64xf32> to vector<8x64xf32>
    %110 = arith.addf %108, %109 : vector<8x64xf32>
    %111 = arith.truncf %110 : vector<8x64xf32> to vector<8x64xbf16>
    %c56_64 = arith.constant 56 : index
    %c0_65 = arith.constant 0 : index
    %112 = vector.load %arg15[%c56_64, %c0_65] : memref<288x64xbf16, #tpu.memory_space<vmem>>, vector<8x64xbf16>
    tpu.vector_store %arg15[%c56_64, %c0_65], %111 {strides = array<i32>} : memref<288x64xbf16, #tpu.memory_space<vmem>>, vector<8x64xbf16>,
    %c448 = arith.constant 448 : index
    %c0_66 = arith.constant 0 : index
    %113 = vector.load %arg14[%c448, %c0_66] : memref<2688x64xf32, #tpu.memory_space<vmem>>, vector<8x64xf32>
    %c456 = arith.constant 456 : index
    %c0_67 = arith.constant 0 : index
    %114 = vector.load %arg14[%c456, %c0_67] : memref<2688x64xf32, #tpu.memory_space<vmem>>, vector<8x64xf32>
    %115 = arith.maximumf %113, %114 : vector<8x64xf32>
    %c640 = arith.constant 640 : index
    %c0_68 = arith.constant 0 : index
    %116 = vector.load %arg14[%c640, %c0_68] : memref<2688x64xf32, #tpu.memory_space<vmem>>, vector<8x64xf32>
    %c648 = arith.constant 648 : index
    %c0_69 = arith.constant 0 : index
    %117 = vector.load %arg14[%c648, %c0_69] : memref<2688x64xf32, #tpu.memory_space<vmem>>, vector<8x64xf32>
    %118 = arith.maximumf %116, %117 : vector<8x64xf32>
    %119 = arith.maximumf %115, %118 : vector<8x64xf32>
    %120 = vector.broadcast %2 : vector<1x64xf32> to vector<8x64xf32>
    %121 = arith.addf %119, %120 : vector<8x64xf32>
    %122 = arith.truncf %121 : vector<8x64xf32> to vector<8x64xbf16>
    %c80_70 = arith.constant 80 : index
    %c0_71 = arith.constant 0 : index
    %123 = vector.load %arg15[%c80_70, %c0_71] : memref<288x64xbf16, #tpu.memory_space<vmem>>, vector<8x64xbf16>
    tpu.vector_store %arg15[%c80_70, %c0_71], %122 {strides = array<i32>} : memref<288x64xbf16, #tpu.memory_space<vmem>>, vector<8x64xbf16>,
    %c464 = arith.constant 464 : index
    %c0_72 = arith.constant 0 : index
    %124 = vector.load %arg14[%c464, %c0_72] : memref<2688x64xf32, #tpu.memory_space<vmem>>, vector<8x64xf32>
    %c472 = arith.constant 472 : index
    %c0_73 = arith.constant 0 : index
    %125 = vector.load %arg14[%c472, %c0_73] : memref<2688x64xf32, #tpu.memory_space<vmem>>, vector<8x64xf32>
    %126 = arith.maximumf %124, %125 : vector<8x64xf32>
    %c656 = arith.constant 656 : index
    %c0_74 = arith.constant 0 : index
    %127 = vector.load %arg14[%c656, %c0_74] : memref<2688x64xf32, #tpu.memory_space<vmem>>, vector<8x64xf32>
    %c664 = arith.constant 664 : index
    %c0_75 = arith.constant 0 : index
    %128 = vector.load %arg14[%c664, %c0_75] : memref<2688x64xf32, #tpu.memory_space<vmem>>, vector<8x64xf32>
    %129 = arith.maximumf %127, %128 : vector<8x64xf32>
    %130 = arith.maximumf %126, %129 : vector<8x64xf32>
    %131 = vector.broadcast %2 : vector<1x64xf32> to vector<8x64xf32>
    %132 = arith.addf %130, %131 : vector<8x64xf32>
    %133 = arith.truncf %132 : vector<8x64xf32> to vector<8x64xbf16>
    %c88_76 = arith.constant 88 : index
    %c0_77 = arith.constant 0 : index
    %134 = vector.load %arg15[%c88_76, %c0_77] : memref<288x64xbf16, #tpu.memory_space<vmem>>, vector<8x64xbf16>
    tpu.vector_store %arg15[%c88_76, %c0_77], %133 {strides = array<i32>} : memref<288x64xbf16, #tpu.memory_space<vmem>>, vector<8x64xbf16>,
    %c768 = arith.constant 768 : index
    %c0_78 = arith.constant 0 : index
    %135 = vector.load %arg14[%c768, %c0_78] : memref<2688x64xf32, #tpu.memory_space<vmem>>, vector<8x64xf32>
    %c776 = arith.constant 776 : index
    %c0_79 = arith.constant 0 : index
    %136 = vector.load %arg14[%c776, %c0_79] : memref<2688x64xf32, #tpu.memory_space<vmem>>, vector<8x64xf32>
    %137 = arith.maximumf %135, %136 : vector<8x64xf32>
    %c960 = arith.constant 960 : index
    %c0_80 = arith.constant 0 : index
    %138 = vector.load %arg14[%c960, %c0_80] : memref<2688x64xf32, #tpu.memory_space<vmem>>, vector<8x64xf32>
    %c968 = arith.constant 968 : index
    %c0_81 = arith.constant 0 : index
    %139 = vector.load %arg14[%c968, %c0_81] : memref<2688x64xf32, #tpu.memory_space<vmem>>, vector<8x64xf32>
    %140 = arith.maximumf %138, %139 : vector<8x64xf32>
    %141 = arith.maximumf %137, %140 : vector<8x64xf32>
    %142 = vector.broadcast %2 : vector<1x64xf32> to vector<8x64xf32>
    %143 = arith.addf %141, %142 : vector<8x64xf32>
    %144 = arith.truncf %143 : vector<8x64xf32> to vector<8x64xbf16>
    %c96 = arith.constant 96 : index
    %c0_82 = arith.constant 0 : index
    %145 = vector.load %arg15[%c96, %c0_82] : memref<288x64xbf16, #tpu.memory_space<vmem>>, vector<8x64xbf16>
    tpu.vector_store %arg15[%c96, %c0_82], %144 {strides = array<i32>} : memref<288x64xbf16, #tpu.memory_space<vmem>>, vector<8x64xbf16>,
    %c784 = arith.constant 784 : index
    %c0_83 = arith.constant 0 : index
    %146 = vector.load %arg14[%c784, %c0_83] : memref<2688x64xf32, #tpu.memory_space<vmem>>, vector<8x64xf32>
    %c792 = arith.constant 792 : index
    %c0_84 = arith.constant 0 : index
    %147 = vector.load %arg14[%c792, %c0_84] : memref<2688x64xf32, #tpu.memory_space<vmem>>, vector<8x64xf32>
    %148 = arith.maximumf %146, %147 : vector<8x64xf32>
    %c976 = arith.constant 976 : index
    %c0_85 = arith.constant 0 : index
    %149 = vector.load %arg14[%c976, %c0_85] : memref<2688x64xf32, #tpu.memory_space<vmem>>, vector<8x64xf32>
    %c984 = arith.constant 984 : index
    %c0_86 = arith.constant 0 : index
    %150 = vector.load %arg14[%c984, %c0_86] : memref<2688x64xf32, #tpu.memory_space<vmem>>, vector<8x64xf32>
    %151 = arith.maximumf %149, %150 : vector<8x64xf32>
    %152 = arith.maximumf %148, %151 : vector<8x64xf32>
    %153 = vector.broadcast %2 : vector<1x64xf32> to vector<8x64xf32>
    %154 = arith.addf %152, %153 : vector<8x64xf32>
    %155 = arith.truncf %154 : vector<8x64xf32> to vector<8x64xbf16>
    %c104 = arith.constant 104 : index
    %c0_87 = arith.constant 0 : index
    %156 = vector.load %arg15[%c104, %c0_87] : memref<288x64xbf16, #tpu.memory_space<vmem>>, vector<8x64xbf16>
    tpu.vector_store %arg15[%c104, %c0_87], %155 {strides = array<i32>} : memref<288x64xbf16, #tpu.memory_space<vmem>>, vector<8x64xbf16>,
    %c800 = arith.constant 800 : index
    %c0_88 = arith.constant 0 : index
    %157 = vector.load %arg14[%c800, %c0_88] : memref<2688x64xf32, #tpu.memory_space<vmem>>, vector<8x64xf32>
    %c808 = arith.constant 808 : index
    %c0_89 = arith.constant 0 : index
    %158 = vector.load %arg14[%c808, %c0_89] : memref<2688x64xf32, #tpu.memory_space<vmem>>, vector<8x64xf32>
    %159 = arith.maximumf %157, %158 : vector<8x64xf32>
    %c992 = arith.constant 992 : index
    %c0_90 = arith.constant 0 : index
    %160 = vector.load %arg14[%c992, %c0_90] : memref<2688x64xf32, #tpu.memory_space<vmem>>, vector<8x64xf32>
    %c1000 = arith.constant 1000 : index
    %c0_91 = arith.constant 0 : index
    %161 = vector.load %arg14[%c1000, %c0_91] : memref<2688x64xf32, #tpu.memory_space<vmem>>, vector<8x64xf32>
    %162 = arith.maximumf %160, %161 : vector<8x64xf32>
    %163 = arith.maximumf %159, %162 : vector<8x64xf32>
    %164 = vector.broadcast %2 : vector<1x64xf32> to vector<8x64xf32>
    %165 = arith.addf %163, %164 : vector<8x64xf32>
    %166 = arith.truncf %165 : vector<8x64xf32> to vector<8x64xbf16>
    %c128 = arith.constant 128 : index
    %c0_92 = arith.constant 0 : index
    %167 = vector.load %arg15[%c128, %c0_92] : memref<288x64xbf16, #tpu.memory_space<vmem>>, vector<8x64xbf16>
    tpu.vector_store %arg15[%c128, %c0_92], %166 {strides = array<i32>} : memref<288x64xbf16, #tpu.memory_space<vmem>>, vector<8x64xbf16>,
    %c816 = arith.constant 816 : index
    %c0_93 = arith.constant 0 : index
    %168 = vector.load %arg14[%c816, %c0_93] : memref<2688x64xf32, #tpu.memory_space<vmem>>, vector<8x64xf32>
    %c824 = arith.constant 824 : index
    %c0_94 = arith.constant 0 : index
    %169 = vector.load %arg14[%c824, %c0_94] : memref<2688x64xf32, #tpu.memory_space<vmem>>, vector<8x64xf32>
    %170 = arith.maximumf %168, %169 : vector<8x64xf32>
    %c1008 = arith.constant 1008 : index
    %c0_95 = arith.constant 0 : index
    %171 = vector.load %arg14[%c1008, %c0_95] : memref<2688x64xf32, #tpu.memory_space<vmem>>, vector<8x64xf32>
    %c1016 = arith.constant 1016 : index
    %c0_96 = arith.constant 0 : index
    %172 = vector.load %arg14[%c1016, %c0_96] : memref<2688x64xf32, #tpu.memory_space<vmem>>, vector<8x64xf32>
    %173 = arith.maximumf %171, %172 : vector<8x64xf32>
    %174 = arith.maximumf %170, %173 : vector<8x64xf32>
    %175 = vector.broadcast %2 : vector<1x64xf32> to vector<8x64xf32>
    %176 = arith.addf %174, %175 : vector<8x64xf32>
    %177 = arith.truncf %176 : vector<8x64xf32> to vector<8x64xbf16>
    %c136 = arith.constant 136 : index
    %c0_97 = arith.constant 0 : index
    %178 = vector.load %arg15[%c136, %c0_97] : memref<288x64xbf16, #tpu.memory_space<vmem>>, vector<8x64xbf16>
    tpu.vector_store %arg15[%c136, %c0_97], %177 {strides = array<i32>} : memref<288x64xbf16, #tpu.memory_space<vmem>>, vector<8x64xbf16>,
    %c832 = arith.constant 832 : index
    %c0_98 = arith.constant 0 : index
    %179 = vector.load %arg14[%c832, %c0_98] : memref<2688x64xf32, #tpu.memory_space<vmem>>, vector<8x64xf32>
    %c840 = arith.constant 840 : index
    %c0_99 = arith.constant 0 : index
    %180 = vector.load %arg14[%c840, %c0_99] : memref<2688x64xf32, #tpu.memory_space<vmem>>, vector<8x64xf32>
    %181 = arith.maximumf %179, %180 : vector<8x64xf32>
    %c1024 = arith.constant 1024 : index
    %c0_100 = arith.constant 0 : index
    %182 = vector.load %arg14[%c1024, %c0_100] : memref<2688x64xf32, #tpu.memory_space<vmem>>, vector<8x64xf32>
    %c1032 = arith.constant 1032 : index
    %c0_101 = arith.constant 0 : index
    %183 = vector.load %arg14[%c1032, %c0_101] : memref<2688x64xf32, #tpu.memory_space<vmem>>, vector<8x64xf32>
    %184 = arith.maximumf %182, %183 : vector<8x64xf32>
    %185 = arith.maximumf %181, %184 : vector<8x64xf32>
    %186 = vector.broadcast %2 : vector<1x64xf32> to vector<8x64xf32>
    %187 = arith.addf %185, %186 : vector<8x64xf32>
    %188 = arith.truncf %187 : vector<8x64xf32> to vector<8x64xbf16>
    %c160 = arith.constant 160 : index
    %c0_102 = arith.constant 0 : index
    %189 = vector.load %arg15[%c160, %c0_102] : memref<288x64xbf16, #tpu.memory_space<vmem>>, vector<8x64xbf16>
    tpu.vector_store %arg15[%c160, %c0_102], %188 {strides = array<i32>} : memref<288x64xbf16, #tpu.memory_space<vmem>>, vector<8x64xbf16>,
    %c848 = arith.constant 848 : index
    %c0_103 = arith.constant 0 : index
    %190 = vector.load %arg14[%c848, %c0_103] : memref<2688x64xf32, #tpu.memory_space<vmem>>, vector<8x64xf32>
    %c856 = arith.constant 856 : index
    %c0_104 = arith.constant 0 : index
    %191 = vector.load %arg14[%c856, %c0_104] : memref<2688x64xf32, #tpu.memory_space<vmem>>, vector<8x64xf32>
    %192 = arith.maximumf %190, %191 : vector<8x64xf32>
    %c1040 = arith.constant 1040 : index
    %c0_105 = arith.constant 0 : index
    %193 = vector.load %arg14[%c1040, %c0_105] : memref<2688x64xf32, #tpu.memory_space<vmem>>, vector<8x64xf32>
    %c1048 = arith.constant 1048 : index
    %c0_106 = arith.constant 0 : index
    %194 = vector.load %arg14[%c1048, %c0_106] : memref<2688x64xf32, #tpu.memory_space<vmem>>, vector<8x64xf32>
    %195 = arith.maximumf %193, %194 : vector<8x64xf32>
    %196 = arith.maximumf %192, %195 : vector<8x64xf32>
    %197 = vector.broadcast %2 : vector<1x64xf32> to vector<8x64xf32>
    %198 = arith.addf %196, %197 : vector<8x64xf32>
    %199 = arith.truncf %198 : vector<8x64xf32> to vector<8x64xbf16>
    %c168 = arith.constant 168 : index
    %c0_107 = arith.constant 0 : index
    %200 = vector.load %arg15[%c168, %c0_107] : memref<288x64xbf16, #tpu.memory_space<vmem>>, vector<8x64xbf16>
    tpu.vector_store %arg15[%c168, %c0_107], %199 {strides = array<i32>} : memref<288x64xbf16, #tpu.memory_space<vmem>>, vector<8x64xbf16>,
    %c1152 = arith.constant 1152 : index
    %c0_108 = arith.constant 0 : index
    %201 = vector.load %arg14[%c1152, %c0_108] : memref<2688x64xf32, #tpu.memory_space<vmem>>, vector<8x64xf32>
    %c1160 = arith.constant 1160 : index
    %c0_109 = arith.constant 0 : index
    %202 = vector.load %arg14[%c1160, %c0_109] : memref<2688x64xf32, #tpu.memory_space<vmem>>, vector<8x64xf32>
    %203 = arith.maximumf %201, %202 : vector<8x64xf32>
    %c1344 = arith.constant 1344 : index
    %c0_110 = arith.constant 0 : index
    %204 = vector.load %arg14[%c1344, %c0_110] : memref<2688x64xf32, #tpu.memory_space<vmem>>, vector<8x64xf32>
    %c1352 = arith.constant 1352 : index
    %c0_111 = arith.constant 0 : index
    %205 = vector.load %arg14[%c1352, %c0_111] : memref<2688x64xf32, #tpu.memory_space<vmem>>, vector<8x64xf32>
    %206 = arith.maximumf %204, %205 : vector<8x64xf32>
    %207 = arith.maximumf %203, %206 : vector<8x64xf32>
    %208 = vector.broadcast %2 : vector<1x64xf32> to vector<8x64xf32>
    %209 = arith.addf %207, %208 : vector<8x64xf32>
    %210 = arith.truncf %209 : vector<8x64xf32> to vector<8x64xbf16>
    %c112 = arith.constant 112 : index
    %c0_112 = arith.constant 0 : index
    %211 = vector.load %arg15[%c112, %c0_112] : memref<288x64xbf16, #tpu.memory_space<vmem>>, vector<8x64xbf16>
    tpu.vector_store %arg15[%c112, %c0_112], %210 {strides = array<i32>} : memref<288x64xbf16, #tpu.memory_space<vmem>>, vector<8x64xbf16>,
    %c1168 = arith.constant 1168 : index
    %c0_113 = arith.constant 0 : index
    %212 = vector.load %arg14[%c1168, %c0_113] : memref<2688x64xf32, #tpu.memory_space<vmem>>, vector<8x64xf32>
    %c1176 = arith.constant 1176 : index
    %c0_114 = arith.constant 0 : index
    %213 = vector.load %arg14[%c1176, %c0_114] : memref<2688x64xf32, #tpu.memory_space<vmem>>, vector<8x64xf32>
    %214 = arith.maximumf %212, %213 : vector<8x64xf32>
    %c1360 = arith.constant 1360 : index
    %c0_115 = arith.constant 0 : index
    %215 = vector.load %arg14[%c1360, %c0_115] : memref<2688x64xf32, #tpu.memory_space<vmem>>, vector<8x64xf32>
    %c1368 = arith.constant 1368 : index
    %c0_116 = arith.constant 0 : index
    %216 = vector.load %arg14[%c1368, %c0_116] : memref<2688x64xf32, #tpu.memory_space<vmem>>, vector<8x64xf32>
    %217 = arith.maximumf %215, %216 : vector<8x64xf32>
    %218 = arith.maximumf %214, %217 : vector<8x64xf32>
    %219 = vector.broadcast %2 : vector<1x64xf32> to vector<8x64xf32>
    %220 = arith.addf %218, %219 : vector<8x64xf32>
    %221 = arith.truncf %220 : vector<8x64xf32> to vector<8x64xbf16>
    %c120 = arith.constant 120 : index
    %c0_117 = arith.constant 0 : index
    %222 = vector.load %arg15[%c120, %c0_117] : memref<288x64xbf16, #tpu.memory_space<vmem>>, vector<8x64xbf16>
    tpu.vector_store %arg15[%c120, %c0_117], %221 {strides = array<i32>} : memref<288x64xbf16, #tpu.memory_space<vmem>>, vector<8x64xbf16>,
    %c1184 = arith.constant 1184 : index
    %c0_118 = arith.constant 0 : index
    %223 = vector.load %arg14[%c1184, %c0_118] : memref<2688x64xf32, #tpu.memory_space<vmem>>, vector<8x64xf32>
    %c1192 = arith.constant 1192 : index
    %c0_119 = arith.constant 0 : index
    %224 = vector.load %arg14[%c1192, %c0_119] : memref<2688x64xf32, #tpu.memory_space<vmem>>, vector<8x64xf32>
    %225 = arith.maximumf %223, %224 : vector<8x64xf32>
    %c1376 = arith.constant 1376 : index
    %c0_120 = arith.constant 0 : index
    %226 = vector.load %arg14[%c1376, %c0_120] : memref<2688x64xf32, #tpu.memory_space<vmem>>, vector<8x64xf32>
    %c1384 = arith.constant 1384 : index
    %c0_121 = arith.constant 0 : index
    %227 = vector.load %arg14[%c1384, %c0_121] : memref<2688x64xf32, #tpu.memory_space<vmem>>, vector<8x64xf32>
    %228 = arith.maximumf %226, %227 : vector<8x64xf32>
    %229 = arith.maximumf %225, %228 : vector<8x64xf32>
    %230 = vector.broadcast %2 : vector<1x64xf32> to vector<8x64xf32>
    %231 = arith.addf %229, %230 : vector<8x64xf32>
    %232 = arith.truncf %231 : vector<8x64xf32> to vector<8x64xbf16>
    %c144 = arith.constant 144 : index
    %c0_122 = arith.constant 0 : index
    %233 = vector.load %arg15[%c144, %c0_122] : memref<288x64xbf16, #tpu.memory_space<vmem>>, vector<8x64xbf16>
    tpu.vector_store %arg15[%c144, %c0_122], %232 {strides = array<i32>} : memref<288x64xbf16, #tpu.memory_space<vmem>>, vector<8x64xbf16>,
    %c1200 = arith.constant 1200 : index
    %c0_123 = arith.constant 0 : index
    %234 = vector.load %arg14[%c1200, %c0_123] : memref<2688x64xf32, #tpu.memory_space<vmem>>, vector<8x64xf32>
    %c1208 = arith.constant 1208 : index
    %c0_124 = arith.constant 0 : index
    %235 = vector.load %arg14[%c1208, %c0_124] : memref<2688x64xf32, #tpu.memory_space<vmem>>, vector<8x64xf32>
    %236 = arith.maximumf %234, %235 : vector<8x64xf32>
    %c1392 = arith.constant 1392 : index
    %c0_125 = arith.constant 0 : index
    %237 = vector.load %arg14[%c1392, %c0_125] : memref<2688x64xf32, #tpu.memory_space<vmem>>, vector<8x64xf32>
    %c1400 = arith.constant 1400 : index
    %c0_126 = arith.constant 0 : index
    %238 = vector.load %arg14[%c1400, %c0_126] : memref<2688x64xf32, #tpu.memory_space<vmem>>, vector<8x64xf32>
    %239 = arith.maximumf %237, %238 : vector<8x64xf32>
    %240 = arith.maximumf %236, %239 : vector<8x64xf32>
    %241 = vector.broadcast %2 : vector<1x64xf32> to vector<8x64xf32>
    %242 = arith.addf %240, %241 : vector<8x64xf32>
    %243 = arith.truncf %242 : vector<8x64xf32> to vector<8x64xbf16>
    %c152 = arith.constant 152 : index
    %c0_127 = arith.constant 0 : index
    %244 = vector.load %arg15[%c152, %c0_127] : memref<288x64xbf16, #tpu.memory_space<vmem>>, vector<8x64xbf16>
    tpu.vector_store %arg15[%c152, %c0_127], %243 {strides = array<i32>} : memref<288x64xbf16, #tpu.memory_space<vmem>>, vector<8x64xbf16>,
    %c1216 = arith.constant 1216 : index
    %c0_128 = arith.constant 0 : index
    %245 = vector.load %arg14[%c1216, %c0_128] : memref<2688x64xf32, #tpu.memory_space<vmem>>, vector<8x64xf32>
    %c1224 = arith.constant 1224 : index
    %c0_129 = arith.constant 0 : index
    %246 = vector.load %arg14[%c1224, %c0_129] : memref<2688x64xf32, #tpu.memory_space<vmem>>, vector<8x64xf32>
    %247 = arith.maximumf %245, %246 : vector<8x64xf32>
    %c1408 = arith.constant 1408 : index
    %c0_130 = arith.constant 0 : index
    %248 = vector.load %arg14[%c1408, %c0_130] : memref<2688x64xf32, #tpu.memory_space<vmem>>, vector<8x64xf32>
    %c1416 = arith.constant 1416 : index
    %c0_131 = arith.constant 0 : index
    %249 = vector.load %arg14[%c1416, %c0_131] : memref<2688x64xf32, #tpu.memory_space<vmem>>, vector<8x64xf32>
    %250 = arith.maximumf %248, %249 : vector<8x64xf32>
    %251 = arith.maximumf %247, %250 : vector<8x64xf32>
    %252 = vector.broadcast %2 : vector<1x64xf32> to vector<8x64xf32>
    %253 = arith.addf %251, %252 : vector<8x64xf32>
    %254 = arith.truncf %253 : vector<8x64xf32> to vector<8x64xbf16>
    %c176 = arith.constant 176 : index
    %c0_132 = arith.constant 0 : index
    %255 = vector.load %arg15[%c176, %c0_132] : memref<288x64xbf16, #tpu.memory_space<vmem>>, vector<8x64xbf16>
    tpu.vector_store %arg15[%c176, %c0_132], %254 {strides = array<i32>} : memref<288x64xbf16, #tpu.memory_space<vmem>>, vector<8x64xbf16>,
    %c1232 = arith.constant 1232 : index
    %c0_133 = arith.constant 0 : index
    %256 = vector.load %arg14[%c1232, %c0_133] : memref<2688x64xf32, #tpu.memory_space<vmem>>, vector<8x64xf32>
    %c1240 = arith.constant 1240 : index
    %c0_134 = arith.constant 0 : index
    %257 = vector.load %arg14[%c1240, %c0_134] : memref<2688x64xf32, #tpu.memory_space<vmem>>, vector<8x64xf32>
    %258 = arith.maximumf %256, %257 : vector<8x64xf32>
    %c1424 = arith.constant 1424 : index
    %c0_135 = arith.constant 0 : index
    %259 = vector.load %arg14[%c1424, %c0_135] : memref<2688x64xf32, #tpu.memory_space<vmem>>, vector<8x64xf32>
    %c1432 = arith.constant 1432 : index
    %c0_136 = arith.constant 0 : index
    %260 = vector.load %arg14[%c1432, %c0_136] : memref<2688x64xf32, #tpu.memory_space<vmem>>, vector<8x64xf32>
    %261 = arith.maximumf %259, %260 : vector<8x64xf32>
    %262 = arith.maximumf %258, %261 : vector<8x64xf32>
    %263 = vector.broadcast %2 : vector<1x64xf32> to vector<8x64xf32>
    %264 = arith.addf %262, %263 : vector<8x64xf32>
    %265 = arith.truncf %264 : vector<8x64xf32> to vector<8x64xbf16>
    %c184 = arith.constant 184 : index
    %c0_137 = arith.constant 0 : index
    %266 = vector.load %arg15[%c184, %c0_137] : memref<288x64xbf16, #tpu.memory_space<vmem>>, vector<8x64xbf16>
    tpu.vector_store %arg15[%c184, %c0_137], %265 {strides = array<i32>} : memref<288x64xbf16, #tpu.memory_space<vmem>>, vector<8x64xbf16>,
    %c1536 = arith.constant 1536 : index
    %c0_138 = arith.constant 0 : index
    %267 = vector.load %arg14[%c1536, %c0_138] : memref<2688x64xf32, #tpu.memory_space<vmem>>, vector<8x64xf32>
    %c1544 = arith.constant 1544 : index
    %c0_139 = arith.constant 0 : index
    %268 = vector.load %arg14[%c1544, %c0_139] : memref<2688x64xf32, #tpu.memory_space<vmem>>, vector<8x64xf32>
    %269 = arith.maximumf %267, %268 : vector<8x64xf32>
    %c1728 = arith.constant 1728 : index
    %c0_140 = arith.constant 0 : index
    %270 = vector.load %arg14[%c1728, %c0_140] : memref<2688x64xf32, #tpu.memory_space<vmem>>, vector<8x64xf32>
    %c1736 = arith.constant 1736 : index
    %c0_141 = arith.constant 0 : index
    %271 = vector.load %arg14[%c1736, %c0_141] : memref<2688x64xf32, #tpu.memory_space<vmem>>, vector<8x64xf32>
    %272 = arith.maximumf %270, %271 : vector<8x64xf32>
    %273 = arith.maximumf %269, %272 : vector<8x64xf32>
    %274 = vector.broadcast %2 : vector<1x64xf32> to vector<8x64xf32>
    %275 = arith.addf %273, %274 : vector<8x64xf32>
    %276 = arith.truncf %275 : vector<8x64xf32> to vector<8x64xbf16>
    %c192_142 = arith.constant 192 : index
    %c0_143 = arith.constant 0 : index
    %277 = vector.load %arg15[%c192_142, %c0_143] : memref<288x64xbf16, #tpu.memory_space<vmem>>, vector<8x64xbf16>
    tpu.vector_store %arg15[%c192_142, %c0_143], %276 {strides = array<i32>} : memref<288x64xbf16, #tpu.memory_space<vmem>>, vector<8x64xbf16>,
    %c1552 = arith.constant 1552 : index
    %c0_144 = arith.constant 0 : index
    %278 = vector.load %arg14[%c1552, %c0_144] : memref<2688x64xf32, #tpu.memory_space<vmem>>, vector<8x64xf32>
    %c1560 = arith.constant 1560 : index
    %c0_145 = arith.constant 0 : index
    %279 = vector.load %arg14[%c1560, %c0_145] : memref<2688x64xf32, #tpu.memory_space<vmem>>, vector<8x64xf32>
    %280 = arith.maximumf %278, %279 : vector<8x64xf32>
    %c1744 = arith.constant 1744 : index
    %c0_146 = arith.constant 0 : index
    %281 = vector.load %arg14[%c1744, %c0_146] : memref<2688x64xf32, #tpu.memory_space<vmem>>, vector<8x64xf32>
    %c1752 = arith.constant 1752 : index
    %c0_147 = arith.constant 0 : index
    %282 = vector.load %arg14[%c1752, %c0_147] : memref<2688x64xf32, #tpu.memory_space<vmem>>, vector<8x64xf32>
    %283 = arith.maximumf %281, %282 : vector<8x64xf32>
    %284 = arith.maximumf %280, %283 : vector<8x64xf32>
    %285 = vector.broadcast %2 : vector<1x64xf32> to vector<8x64xf32>
    %286 = arith.addf %284, %285 : vector<8x64xf32>
    %287 = arith.truncf %286 : vector<8x64xf32> to vector<8x64xbf16>
    %c200_148 = arith.constant 200 : index
    %c0_149 = arith.constant 0 : index
    %288 = vector.load %arg15[%c200_148, %c0_149] : memref<288x64xbf16, #tpu.memory_space<vmem>>, vector<8x64xbf16>
    tpu.vector_store %arg15[%c200_148, %c0_149], %287 {strides = array<i32>} : memref<288x64xbf16, #tpu.memory_space<vmem>>, vector<8x64xbf16>,
    %c1568 = arith.constant 1568 : index
    %c0_150 = arith.constant 0 : index
    %289 = vector.load %arg14[%c1568, %c0_150] : memref<2688x64xf32, #tpu.memory_space<vmem>>, vector<8x64xf32>
    %c1576 = arith.constant 1576 : index
    %c0_151 = arith.constant 0 : index
    %290 = vector.load %arg14[%c1576, %c0_151] : memref<2688x64xf32, #tpu.memory_space<vmem>>, vector<8x64xf32>
    %291 = arith.maximumf %289, %290 : vector<8x64xf32>
    %c1760 = arith.constant 1760 : index
    %c0_152 = arith.constant 0 : index
    %292 = vector.load %arg14[%c1760, %c0_152] : memref<2688x64xf32, #tpu.memory_space<vmem>>, vector<8x64xf32>
    %c1768 = arith.constant 1768 : index
    %c0_153 = arith.constant 0 : index
    %293 = vector.load %arg14[%c1768, %c0_153] : memref<2688x64xf32, #tpu.memory_space<vmem>>, vector<8x64xf32>
    %294 = arith.maximumf %292, %293 : vector<8x64xf32>
    %295 = arith.maximumf %291, %294 : vector<8x64xf32>
    %296 = vector.broadcast %2 : vector<1x64xf32> to vector<8x64xf32>
    %297 = arith.addf %295, %296 : vector<8x64xf32>
    %298 = arith.truncf %297 : vector<8x64xf32> to vector<8x64xbf16>
    %c224_154 = arith.constant 224 : index
    %c0_155 = arith.constant 0 : index
    %299 = vector.load %arg15[%c224_154, %c0_155] : memref<288x64xbf16, #tpu.memory_space<vmem>>, vector<8x64xbf16>
    tpu.vector_store %arg15[%c224_154, %c0_155], %298 {strides = array<i32>} : memref<288x64xbf16, #tpu.memory_space<vmem>>, vector<8x64xbf16>,
    %c1584 = arith.constant 1584 : index
    %c0_156 = arith.constant 0 : index
    %300 = vector.load %arg14[%c1584, %c0_156] : memref<2688x64xf32, #tpu.memory_space<vmem>>, vector<8x64xf32>
    %c1592 = arith.constant 1592 : index
    %c0_157 = arith.constant 0 : index
    %301 = vector.load %arg14[%c1592, %c0_157] : memref<2688x64xf32, #tpu.memory_space<vmem>>, vector<8x64xf32>
    %302 = arith.maximumf %300, %301 : vector<8x64xf32>
    %c1776 = arith.constant 1776 : index
    %c0_158 = arith.constant 0 : index
    %303 = vector.load %arg14[%c1776, %c0_158] : memref<2688x64xf32, #tpu.memory_space<vmem>>, vector<8x64xf32>
    %c1784 = arith.constant 1784 : index
    %c0_159 = arith.constant 0 : index
    %304 = vector.load %arg14[%c1784, %c0_159] : memref<2688x64xf32, #tpu.memory_space<vmem>>, vector<8x64xf32>
    %305 = arith.maximumf %303, %304 : vector<8x64xf32>
    %306 = arith.maximumf %302, %305 : vector<8x64xf32>
    %307 = vector.broadcast %2 : vector<1x64xf32> to vector<8x64xf32>
    %308 = arith.addf %306, %307 : vector<8x64xf32>
    %309 = arith.truncf %308 : vector<8x64xf32> to vector<8x64xbf16>
    %c232_160 = arith.constant 232 : index
    %c0_161 = arith.constant 0 : index
    %310 = vector.load %arg15[%c232_160, %c0_161] : memref<288x64xbf16, #tpu.memory_space<vmem>>, vector<8x64xbf16>
    tpu.vector_store %arg15[%c232_160, %c0_161], %309 {strides = array<i32>} : memref<288x64xbf16, #tpu.memory_space<vmem>>, vector<8x64xbf16>,
    %c1600 = arith.constant 1600 : index
    %c0_162 = arith.constant 0 : index
    %311 = vector.load %arg14[%c1600, %c0_162] : memref<2688x64xf32, #tpu.memory_space<vmem>>, vector<8x64xf32>
    %c1608 = arith.constant 1608 : index
    %c0_163 = arith.constant 0 : index
    %312 = vector.load %arg14[%c1608, %c0_163] : memref<2688x64xf32, #tpu.memory_space<vmem>>, vector<8x64xf32>
    %313 = arith.maximumf %311, %312 : vector<8x64xf32>
    %c1792 = arith.constant 1792 : index
    %c0_164 = arith.constant 0 : index
    %314 = vector.load %arg14[%c1792, %c0_164] : memref<2688x64xf32, #tpu.memory_space<vmem>>, vector<8x64xf32>
    %c1800 = arith.constant 1800 : index
    %c0_165 = arith.constant 0 : index
    %315 = vector.load %arg14[%c1800, %c0_165] : memref<2688x64xf32, #tpu.memory_space<vmem>>, vector<8x64xf32>
    %316 = arith.maximumf %314, %315 : vector<8x64xf32>
    %317 = arith.maximumf %313, %316 : vector<8x64xf32>
    %318 = vector.broadcast %2 : vector<1x64xf32> to vector<8x64xf32>
    %319 = arith.addf %317, %318 : vector<8x64xf32>
    %320 = arith.truncf %319 : vector<8x64xf32> to vector<8x64xbf16>
    %c256_166 = arith.constant 256 : index
    %c0_167 = arith.constant 0 : index
    %321 = vector.load %arg15[%c256_166, %c0_167] : memref<288x64xbf16, #tpu.memory_space<vmem>>, vector<8x64xbf16>
    tpu.vector_store %arg15[%c256_166, %c0_167], %320 {strides = array<i32>} : memref<288x64xbf16, #tpu.memory_space<vmem>>, vector<8x64xbf16>,
    %c1616 = arith.constant 1616 : index
    %c0_168 = arith.constant 0 : index
    %322 = vector.load %arg14[%c1616, %c0_168] : memref<2688x64xf32, #tpu.memory_space<vmem>>, vector<8x64xf32>
    %c1624 = arith.constant 1624 : index
    %c0_169 = arith.constant 0 : index
    %323 = vector.load %arg14[%c1624, %c0_169] : memref<2688x64xf32, #tpu.memory_space<vmem>>, vector<8x64xf32>
    %324 = arith.maximumf %322, %323 : vector<8x64xf32>
    %c1808 = arith.constant 1808 : index
    %c0_170 = arith.constant 0 : index
    %325 = vector.load %arg14[%c1808, %c0_170] : memref<2688x64xf32, #tpu.memory_space<vmem>>, vector<8x64xf32>
    %c1816 = arith.constant 1816 : index
    %c0_171 = arith.constant 0 : index
    %326 = vector.load %arg14[%c1816, %c0_171] : memref<2688x64xf32, #tpu.memory_space<vmem>>, vector<8x64xf32>
    %327 = arith.maximumf %325, %326 : vector<8x64xf32>
    %328 = arith.maximumf %324, %327 : vector<8x64xf32>
    %329 = vector.broadcast %2 : vector<1x64xf32> to vector<8x64xf32>
    %330 = arith.addf %328, %329 : vector<8x64xf32>
    %331 = arith.truncf %330 : vector<8x64xf32> to vector<8x64xbf16>
    %c264_172 = arith.constant 264 : index
    %c0_173 = arith.constant 0 : index
    %332 = vector.load %arg15[%c264_172, %c0_173] : memref<288x64xbf16, #tpu.memory_space<vmem>>, vector<8x64xbf16>
    tpu.vector_store %arg15[%c264_172, %c0_173], %331 {strides = array<i32>} : memref<288x64xbf16, #tpu.memory_space<vmem>>, vector<8x64xbf16>,
    %c1920 = arith.constant 1920 : index
    %c0_174 = arith.constant 0 : index
    %333 = vector.load %arg14[%c1920, %c0_174] : memref<2688x64xf32, #tpu.memory_space<vmem>>, vector<8x64xf32>
    %c1928 = arith.constant 1928 : index
    %c0_175 = arith.constant 0 : index
    %334 = vector.load %arg14[%c1928, %c0_175] : memref<2688x64xf32, #tpu.memory_space<vmem>>, vector<8x64xf32>
    %335 = arith.maximumf %333, %334 : vector<8x64xf32>
    %c2112 = arith.constant 2112 : index
    %c0_176 = arith.constant 0 : index
    %336 = vector.load %arg14[%c2112, %c0_176] : memref<2688x64xf32, #tpu.memory_space<vmem>>, vector<8x64xf32>
    %c2120 = arith.constant 2120 : index
    %c0_177 = arith.constant 0 : index
    %337 = vector.load %arg14[%c2120, %c0_177] : memref<2688x64xf32, #tpu.memory_space<vmem>>, vector<8x64xf32>
    %338 = arith.maximumf %336, %337 : vector<8x64xf32>
    %339 = arith.maximumf %335, %338 : vector<8x64xf32>
    %340 = vector.broadcast %2 : vector<1x64xf32> to vector<8x64xf32>
    %341 = arith.addf %339, %340 : vector<8x64xf32>
    %342 = arith.truncf %341 : vector<8x64xf32> to vector<8x64xbf16>
    %c208_178 = arith.constant 208 : index
    %c0_179 = arith.constant 0 : index
    %343 = vector.load %arg15[%c208_178, %c0_179] : memref<288x64xbf16, #tpu.memory_space<vmem>>, vector<8x64xbf16>
    tpu.vector_store %arg15[%c208_178, %c0_179], %342 {strides = array<i32>} : memref<288x64xbf16, #tpu.memory_space<vmem>>, vector<8x64xbf16>,
    %c1936 = arith.constant 1936 : index
    %c0_180 = arith.constant 0 : index
    %344 = vector.load %arg14[%c1936, %c0_180] : memref<2688x64xf32, #tpu.memory_space<vmem>>, vector<8x64xf32>
    %c1944 = arith.constant 1944 : index
    %c0_181 = arith.constant 0 : index
    %345 = vector.load %arg14[%c1944, %c0_181] : memref<2688x64xf32, #tpu.memory_space<vmem>>, vector<8x64xf32>
    %346 = arith.maximumf %344, %345 : vector<8x64xf32>
    %c2128 = arith.constant 2128 : index
    %c0_182 = arith.constant 0 : index
    %347 = vector.load %arg14[%c2128, %c0_182] : memref<2688x64xf32, #tpu.memory_space<vmem>>, vector<8x64xf32>
    %c2136 = arith.constant 2136 : index
    %c0_183 = arith.constant 0 : index
    %348 = vector.load %arg14[%c2136, %c0_183] : memref<2688x64xf32, #tpu.memory_space<vmem>>, vector<8x64xf32>
    %349 = arith.maximumf %347, %348 : vector<8x64xf32>
    %350 = arith.maximumf %346, %349 : vector<8x64xf32>
    %351 = vector.broadcast %2 : vector<1x64xf32> to vector<8x64xf32>
    %352 = arith.addf %350, %351 : vector<8x64xf32>
    %353 = arith.truncf %352 : vector<8x64xf32> to vector<8x64xbf16>
    %c216_184 = arith.constant 216 : index
    %c0_185 = arith.constant 0 : index
    %354 = vector.load %arg15[%c216_184, %c0_185] : memref<288x64xbf16, #tpu.memory_space<vmem>>, vector<8x64xbf16>
    tpu.vector_store %arg15[%c216_184, %c0_185], %353 {strides = array<i32>} : memref<288x64xbf16, #tpu.memory_space<vmem>>, vector<8x64xbf16>,
    %c1952 = arith.constant 1952 : index
    %c0_186 = arith.constant 0 : index
    %355 = vector.load %arg14[%c1952, %c0_186] : memref<2688x64xf32, #tpu.memory_space<vmem>>, vector<8x64xf32>
    %c1960 = arith.constant 1960 : index
    %c0_187 = arith.constant 0 : index
    %356 = vector.load %arg14[%c1960, %c0_187] : memref<2688x64xf32, #tpu.memory_space<vmem>>, vector<8x64xf32>
    %357 = arith.maximumf %355, %356 : vector<8x64xf32>
    %c2144 = arith.constant 2144 : index
    %c0_188 = arith.constant 0 : index
    %358 = vector.load %arg14[%c2144, %c0_188] : memref<2688x64xf32, #tpu.memory_space<vmem>>, vector<8x64xf32>
    %c2152 = arith.constant 2152 : index
    %c0_189 = arith.constant 0 : index
    %359 = vector.load %arg14[%c2152, %c0_189] : memref<2688x64xf32, #tpu.memory_space<vmem>>, vector<8x64xf32>
    %360 = arith.maximumf %358, %359 : vector<8x64xf32>
    %361 = arith.maximumf %357, %360 : vector<8x64xf32>
    %362 = vector.broadcast %2 : vector<1x64xf32> to vector<8x64xf32>
    %363 = arith.addf %361, %362 : vector<8x64xf32>
    %364 = arith.truncf %363 : vector<8x64xf32> to vector<8x64xbf16>
    %c240_190 = arith.constant 240 : index
    %c0_191 = arith.constant 0 : index
    %365 = vector.load %arg15[%c240_190, %c0_191] : memref<288x64xbf16, #tpu.memory_space<vmem>>, vector<8x64xbf16>
    tpu.vector_store %arg15[%c240_190, %c0_191], %364 {strides = array<i32>} : memref<288x64xbf16, #tpu.memory_space<vmem>>, vector<8x64xbf16>,
    %c1968 = arith.constant 1968 : index
    %c0_192 = arith.constant 0 : index
    %366 = vector.load %arg14[%c1968, %c0_192] : memref<2688x64xf32, #tpu.memory_space<vmem>>, vector<8x64xf32>
    %c1976 = arith.constant 1976 : index
    %c0_193 = arith.constant 0 : index
    %367 = vector.load %arg14[%c1976, %c0_193] : memref<2688x64xf32, #tpu.memory_space<vmem>>, vector<8x64xf32>
    %368 = arith.maximumf %366, %367 : vector<8x64xf32>
    %c2160 = arith.constant 2160 : index
    %c0_194 = arith.constant 0 : index
    %369 = vector.load %arg14[%c2160, %c0_194] : memref<2688x64xf32, #tpu.memory_space<vmem>>, vector<8x64xf32>
    %c2168 = arith.constant 2168 : index
    %c0_195 = arith.constant 0 : index
    %370 = vector.load %arg14[%c2168, %c0_195] : memref<2688x64xf32, #tpu.memory_space<vmem>>, vector<8x64xf32>
    %371 = arith.maximumf %369, %370 : vector<8x64xf32>
    %372 = arith.maximumf %368, %371 : vector<8x64xf32>
    %373 = vector.broadcast %2 : vector<1x64xf32> to vector<8x64xf32>
    %374 = arith.addf %372, %373 : vector<8x64xf32>
    %375 = arith.truncf %374 : vector<8x64xf32> to vector<8x64xbf16>
    %c248_196 = arith.constant 248 : index
    %c0_197 = arith.constant 0 : index
    %376 = vector.load %arg15[%c248_196, %c0_197] : memref<288x64xbf16, #tpu.memory_space<vmem>>, vector<8x64xbf16>
    tpu.vector_store %arg15[%c248_196, %c0_197], %375 {strides = array<i32>} : memref<288x64xbf16, #tpu.memory_space<vmem>>, vector<8x64xbf16>,
    %c1984 = arith.constant 1984 : index
    %c0_198 = arith.constant 0 : index
    %377 = vector.load %arg14[%c1984, %c0_198] : memref<2688x64xf32, #tpu.memory_space<vmem>>, vector<8x64xf32>
    %c1992 = arith.constant 1992 : index
    %c0_199 = arith.constant 0 : index
    %378 = vector.load %arg14[%c1992, %c0_199] : memref<2688x64xf32, #tpu.memory_space<vmem>>, vector<8x64xf32>
    %379 = arith.maximumf %377, %378 : vector<8x64xf32>
    %c2176 = arith.constant 2176 : index
    %c0_200 = arith.constant 0 : index
    %380 = vector.load %arg14[%c2176, %c0_200] : memref<2688x64xf32, #tpu.memory_space<vmem>>, vector<8x64xf32>
    %c2184 = arith.constant 2184 : index
    %c0_201 = arith.constant 0 : index
    %381 = vector.load %arg14[%c2184, %c0_201] : memref<2688x64xf32, #tpu.memory_space<vmem>>, vector<8x64xf32>
    %382 = arith.maximumf %380, %381 : vector<8x64xf32>
    %383 = arith.maximumf %379, %382 : vector<8x64xf32>
    %384 = vector.broadcast %2 : vector<1x64xf32> to vector<8x64xf32>
    %385 = arith.addf %383, %384 : vector<8x64xf32>
    %386 = arith.truncf %385 : vector<8x64xf32> to vector<8x64xbf16>
    %c272_202 = arith.constant 272 : index
    %c0_203 = arith.constant 0 : index
    %387 = vector.load %arg15[%c272_202, %c0_203] : memref<288x64xbf16, #tpu.memory_space<vmem>>, vector<8x64xbf16>
    tpu.vector_store %arg15[%c272_202, %c0_203], %386 {strides = array<i32>} : memref<288x64xbf16, #tpu.memory_space<vmem>>, vector<8x64xbf16>,
    %c2000 = arith.constant 2000 : index
    %c0_204 = arith.constant 0 : index
    %388 = vector.load %arg14[%c2000, %c0_204] : memref<2688x64xf32, #tpu.memory_space<vmem>>, vector<8x64xf32>
    %c2008 = arith.constant 2008 : index
    %c0_205 = arith.constant 0 : index
    %389 = vector.load %arg14[%c2008, %c0_205] : memref<2688x64xf32, #tpu.memory_space<vmem>>, vector<8x64xf32>
    %390 = arith.maximumf %388, %389 : vector<8x64xf32>
    %c2192 = arith.constant 2192 : index
    %c0_206 = arith.constant 0 : index
    %391 = vector.load %arg14[%c2192, %c0_206] : memref<2688x64xf32, #tpu.memory_space<vmem>>, vector<8x64xf32>
    %c2200 = arith.constant 2200 : index
    %c0_207 = arith.constant 0 : index
    %392 = vector.load %arg14[%c2200, %c0_207] : memref<2688x64xf32, #tpu.memory_space<vmem>>, vector<8x64xf32>
    %393 = arith.maximumf %391, %392 : vector<8x64xf32>
    %394 = arith.maximumf %390, %393 : vector<8x64xf32>
    %395 = vector.broadcast %2 : vector<1x64xf32> to vector<8x64xf32>
    %396 = arith.addf %394, %395 : vector<8x64xf32>
    %397 = arith.truncf %396 : vector<8x64xf32> to vector<8x64xbf16>
    %c280_208 = arith.constant 280 : index
    %c0_209 = arith.constant 0 : index
    %398 = vector.load %arg15[%c280_208, %c0_209] : memref<288x64xbf16, #tpu.memory_space<vmem>>, vector<8x64xbf16>
    tpu.vector_store %arg15[%c280_208, %c0_209], %397 {strides = array<i32>} : memref<288x64xbf16, #tpu.memory_space<vmem>>, vector<8x64xbf16>,
    %c0_210 = arith.constant 0 : index
    %c0_211 = arith.constant 0 : index
    %399 = vector.load %arg15[%c0_210, %c0_211] : memref<288x64xbf16, #tpu.memory_space<vmem>>, vector<288x64xbf16>
    %c0_212 = arith.constant 0 : index
    %c0_213 = arith.constant 0 : index
    %400 = vector.load %arg6[%c0_212, %c0_213] : memref<64x128xbf16, #tpu.memory_space<vmem>>, vector<64x128xbf16>
    %cst = arith.constant dense<0.000000e+00> : vector<288x128xf32>
    %401 = tpu.matmul %399, %400, %cst {dimension_numbers = #tpu.dot_dimension_numbers<[1], [0], [0], [1], [0, 0, 1, 1], [], []>} : vector<288x64xbf16>, vector<64x128xbf16>, vector<288x128xf32> -> vector<288x128xf32>
    %c0_214 = arith.constant 0 : index
    %c0_215 = arith.constant 0 : index
    %402 = vector.load %arg16[%c0_214, %c0_215] : memref<288x128xf32, #tpu.memory_space<vmem>>, vector<288x128xf32>
    tpu.vector_store %arg16[%c0_214, %c0_215], %401 {strides = array<i32>} : memref<288x128xf32, #tpu.memory_space<vmem>>, vector<288x128xf32>,
    %c0_216 = arith.constant 0 : index
    %c0_217 = arith.constant 0 : index
    %403 = vector.load %arg7[%c0_216, %c0_217] : memref<1x128xf32, #tpu.memory_space<vmem>>, vector<1x128xf32>
    %c0_218 = arith.constant 0 : index
    %c0_219 = arith.constant 0 : index
    %404 = vector.load %arg16[%c0_218, %c0_219] : memref<288x128xf32, #tpu.memory_space<vmem>>, vector<8x128xf32>
    %c8_220 = arith.constant 8 : index
    %c0_221 = arith.constant 0 : index
    %405 = vector.load %arg16[%c8_220, %c0_221] : memref<288x128xf32, #tpu.memory_space<vmem>>, vector<8x128xf32>
    %406 = arith.maximumf %404, %405 : vector<8x128xf32>
    %c16_222 = arith.constant 16 : index
    %c0_223 = arith.constant 0 : index
    %407 = vector.load %arg16[%c16_222, %c0_223] : memref<288x128xf32, #tpu.memory_space<vmem>>, vector<8x128xf32>
    %c24_224 = arith.constant 24 : index
    %c0_225 = arith.constant 0 : index
    %408 = vector.load %arg16[%c24_224, %c0_225] : memref<288x128xf32, #tpu.memory_space<vmem>>, vector<8x128xf32>
    %409 = arith.maximumf %407, %408 : vector<8x128xf32>
    %410 = arith.maximumf %406, %409 : vector<8x128xf32>
    %411 = vector.broadcast %403 : vector<1x128xf32> to vector<8x128xf32>
    %412 = arith.addf %410, %411 : vector<8x128xf32>
    %413 = arith.truncf %412 : vector<8x128xf32> to vector<8x128xbf16>
    %c0_226 = arith.constant 0 : index
    %c0_227 = arith.constant 0 : index
    %414 = vector.load %arg17[%c0_226, %c0_227] : memref<8x1152xbf16, #tpu.memory_space<vmem>>, vector<8x128xbf16>
    tpu.vector_store %arg17[%c0_226, %c0_227], %413 {strides = array<i32>} : memref<8x1152xbf16, #tpu.memory_space<vmem>>, vector<8x128xbf16>,
    %c32_228 = arith.constant 32 : index
    %c0_229 = arith.constant 0 : index
    %415 = vector.load %arg16[%c32_228, %c0_229] : memref<288x128xf32, #tpu.memory_space<vmem>>, vector<8x128xf32>
    %c40_230 = arith.constant 40 : index
    %c0_231 = arith.constant 0 : index
    %416 = vector.load %arg16[%c40_230, %c0_231] : memref<288x128xf32, #tpu.memory_space<vmem>>, vector<8x128xf32>
    %417 = arith.maximumf %415, %416 : vector<8x128xf32>
    %c48_232 = arith.constant 48 : index
    %c0_233 = arith.constant 0 : index
    %418 = vector.load %arg16[%c48_232, %c0_233] : memref<288x128xf32, #tpu.memory_space<vmem>>, vector<8x128xf32>
    %c56_234 = arith.constant 56 : index
    %c0_235 = arith.constant 0 : index
    %419 = vector.load %arg16[%c56_234, %c0_235] : memref<288x128xf32, #tpu.memory_space<vmem>>, vector<8x128xf32>
    %420 = arith.maximumf %418, %419 : vector<8x128xf32>
    %421 = arith.maximumf %417, %420 : vector<8x128xf32>
    %422 = vector.broadcast %403 : vector<1x128xf32> to vector<8x128xf32>
    %423 = arith.addf %421, %422 : vector<8x128xf32>
    %424 = arith.truncf %423 : vector<8x128xf32> to vector<8x128xbf16>
    %c0_236 = arith.constant 0 : index
    %c128_237 = arith.constant 128 : index
    %425 = vector.load %arg17[%c0_236, %c128_237] : memref<8x1152xbf16, #tpu.memory_space<vmem>>, vector<8x128xbf16>
    tpu.vector_store %arg17[%c0_236, %c128_237], %424 {strides = array<i32>} : memref<8x1152xbf16, #tpu.memory_space<vmem>>, vector<8x128xbf16>,
    %c64_238 = arith.constant 64 : index
    %c0_239 = arith.constant 0 : index
    %426 = vector.load %arg16[%c64_238, %c0_239] : memref<288x128xf32, #tpu.memory_space<vmem>>, vector<8x128xf32>
    %c72_240 = arith.constant 72 : index
    %c0_241 = arith.constant 0 : index
    %427 = vector.load %arg16[%c72_240, %c0_241] : memref<288x128xf32, #tpu.memory_space<vmem>>, vector<8x128xf32>
    %428 = arith.maximumf %426, %427 : vector<8x128xf32>
    %c80_242 = arith.constant 80 : index
    %c0_243 = arith.constant 0 : index
    %429 = vector.load %arg16[%c80_242, %c0_243] : memref<288x128xf32, #tpu.memory_space<vmem>>, vector<8x128xf32>
    %c88_244 = arith.constant 88 : index
    %c0_245 = arith.constant 0 : index
    %430 = vector.load %arg16[%c88_244, %c0_245] : memref<288x128xf32, #tpu.memory_space<vmem>>, vector<8x128xf32>
    %431 = arith.maximumf %429, %430 : vector<8x128xf32>
    %432 = arith.maximumf %428, %431 : vector<8x128xf32>
    %433 = vector.broadcast %403 : vector<1x128xf32> to vector<8x128xf32>
    %434 = arith.addf %432, %433 : vector<8x128xf32>
    %435 = arith.truncf %434 : vector<8x128xf32> to vector<8x128xbf16>
    %c0_246 = arith.constant 0 : index
    %c256_247 = arith.constant 256 : index
    %436 = vector.load %arg17[%c0_246, %c256_247] : memref<8x1152xbf16, #tpu.memory_space<vmem>>, vector<8x128xbf16>
    tpu.vector_store %arg17[%c0_246, %c256_247], %435 {strides = array<i32>} : memref<8x1152xbf16, #tpu.memory_space<vmem>>, vector<8x128xbf16>,
    %c96_248 = arith.constant 96 : index
    %c0_249 = arith.constant 0 : index
    %437 = vector.load %arg16[%c96_248, %c0_249] : memref<288x128xf32, #tpu.memory_space<vmem>>, vector<8x128xf32>
    %c104_250 = arith.constant 104 : index
    %c0_251 = arith.constant 0 : index
    %438 = vector.load %arg16[%c104_250, %c0_251] : memref<288x128xf32, #tpu.memory_space<vmem>>, vector<8x128xf32>
    %439 = arith.maximumf %437, %438 : vector<8x128xf32>
    %c112_252 = arith.constant 112 : index
    %c0_253 = arith.constant 0 : index
    %440 = vector.load %arg16[%c112_252, %c0_253] : memref<288x128xf32, #tpu.memory_space<vmem>>, vector<8x128xf32>
    %c120_254 = arith.constant 120 : index
    %c0_255 = arith.constant 0 : index
    %441 = vector.load %arg16[%c120_254, %c0_255] : memref<288x128xf32, #tpu.memory_space<vmem>>, vector<8x128xf32>
    %442 = arith.maximumf %440, %441 : vector<8x128xf32>
    %443 = arith.maximumf %439, %442 : vector<8x128xf32>
    %444 = vector.broadcast %403 : vector<1x128xf32> to vector<8x128xf32>
    %445 = arith.addf %443, %444 : vector<8x128xf32>
    %446 = arith.truncf %445 : vector<8x128xf32> to vector<8x128xbf16>
    %c0_256 = arith.constant 0 : index
    %c384_257 = arith.constant 384 : index
    %447 = vector.load %arg17[%c0_256, %c384_257] : memref<8x1152xbf16, #tpu.memory_space<vmem>>, vector<8x128xbf16>
    tpu.vector_store %arg17[%c0_256, %c384_257], %446 {strides = array<i32>} : memref<8x1152xbf16, #tpu.memory_space<vmem>>, vector<8x128xbf16>,
    %c128_258 = arith.constant 128 : index
    %c0_259 = arith.constant 0 : index
    %448 = vector.load %arg16[%c128_258, %c0_259] : memref<288x128xf32, #tpu.memory_space<vmem>>, vector<8x128xf32>
    %c136_260 = arith.constant 136 : index
    %c0_261 = arith.constant 0 : index
    %449 = vector.load %arg16[%c136_260, %c0_261] : memref<288x128xf32, #tpu.memory_space<vmem>>, vector<8x128xf32>
    %450 = arith.maximumf %448, %449 : vector<8x128xf32>
    %c144_262 = arith.constant 144 : index
    %c0_263 = arith.constant 0 : index
    %451 = vector.load %arg16[%c144_262, %c0_263] : memref<288x128xf32, #tpu.memory_space<vmem>>, vector<8x128xf32>
    %c152_264 = arith.constant 152 : index
    %c0_265 = arith.constant 0 : index
    %452 = vector.load %arg16[%c152_264, %c0_265] : memref<288x128xf32, #tpu.memory_space<vmem>>, vector<8x128xf32>
    %453 = arith.maximumf %451, %452 : vector<8x128xf32>
    %454 = arith.maximumf %450, %453 : vector<8x128xf32>
    %455 = vector.broadcast %403 : vector<1x128xf32> to vector<8x128xf32>
    %456 = arith.addf %454, %455 : vector<8x128xf32>
    %457 = arith.truncf %456 : vector<8x128xf32> to vector<8x128xbf16>
    %c0_266 = arith.constant 0 : index
    %c512 = arith.constant 512 : index
    %458 = vector.load %arg17[%c0_266, %c512] : memref<8x1152xbf16, #tpu.memory_space<vmem>>, vector<8x128xbf16>
    tpu.vector_store %arg17[%c0_266, %c512], %457 {strides = array<i32>} : memref<8x1152xbf16, #tpu.memory_space<vmem>>, vector<8x128xbf16>,
    %c160_267 = arith.constant 160 : index
    %c0_268 = arith.constant 0 : index
    %459 = vector.load %arg16[%c160_267, %c0_268] : memref<288x128xf32, #tpu.memory_space<vmem>>, vector<8x128xf32>
    %c168_269 = arith.constant 168 : index
    %c0_270 = arith.constant 0 : index
    %460 = vector.load %arg16[%c168_269, %c0_270] : memref<288x128xf32, #tpu.memory_space<vmem>>, vector<8x128xf32>
    %461 = arith.maximumf %459, %460 : vector<8x128xf32>
    %c176_271 = arith.constant 176 : index
    %c0_272 = arith.constant 0 : index
    %462 = vector.load %arg16[%c176_271, %c0_272] : memref<288x128xf32, #tpu.memory_space<vmem>>, vector<8x128xf32>
    %c184_273 = arith.constant 184 : index
    %c0_274 = arith.constant 0 : index
    %463 = vector.load %arg16[%c184_273, %c0_274] : memref<288x128xf32, #tpu.memory_space<vmem>>, vector<8x128xf32>
    %464 = arith.maximumf %462, %463 : vector<8x128xf32>
    %465 = arith.maximumf %461, %464 : vector<8x128xf32>
    %466 = vector.broadcast %403 : vector<1x128xf32> to vector<8x128xf32>
    %467 = arith.addf %465, %466 : vector<8x128xf32>
    %468 = arith.truncf %467 : vector<8x128xf32> to vector<8x128xbf16>
    %c0_275 = arith.constant 0 : index
    %c640_276 = arith.constant 640 : index
    %469 = vector.load %arg17[%c0_275, %c640_276] : memref<8x1152xbf16, #tpu.memory_space<vmem>>, vector<8x128xbf16>
    tpu.vector_store %arg17[%c0_275, %c640_276], %468 {strides = array<i32>} : memref<8x1152xbf16, #tpu.memory_space<vmem>>, vector<8x128xbf16>,
    %c192_277 = arith.constant 192 : index
    %c0_278 = arith.constant 0 : index
    %470 = vector.load %arg16[%c192_277, %c0_278] : memref<288x128xf32, #tpu.memory_space<vmem>>, vector<8x128xf32>
    %c200_279 = arith.constant 200 : index
    %c0_280 = arith.constant 0 : index
    %471 = vector.load %arg16[%c200_279, %c0_280] : memref<288x128xf32, #tpu.memory_space<vmem>>, vector<8x128xf32>
    %472 = arith.maximumf %470, %471 : vector<8x128xf32>
    %c208_281 = arith.constant 208 : index
    %c0_282 = arith.constant 0 : index
    %473 = vector.load %arg16[%c208_281, %c0_282] : memref<288x128xf32, #tpu.memory_space<vmem>>, vector<8x128xf32>
    %c216_283 = arith.constant 216 : index
    %c0_284 = arith.constant 0 : index
    %474 = vector.load %arg16[%c216_283, %c0_284] : memref<288x128xf32, #tpu.memory_space<vmem>>, vector<8x128xf32>
    %475 = arith.maximumf %473, %474 : vector<8x128xf32>
    %476 = arith.maximumf %472, %475 : vector<8x128xf32>
    %477 = vector.broadcast %403 : vector<1x128xf32> to vector<8x128xf32>
    %478 = arith.addf %476, %477 : vector<8x128xf32>
    %479 = arith.truncf %478 : vector<8x128xf32> to vector<8x128xbf16>
    %c0_285 = arith.constant 0 : index
    %c768_286 = arith.constant 768 : index
    %480 = vector.load %arg17[%c0_285, %c768_286] : memref<8x1152xbf16, #tpu.memory_space<vmem>>, vector<8x128xbf16>
    tpu.vector_store %arg17[%c0_285, %c768_286], %479 {strides = array<i32>} : memref<8x1152xbf16, #tpu.memory_space<vmem>>, vector<8x128xbf16>,
    %c224_287 = arith.constant 224 : index
    %c0_288 = arith.constant 0 : index
    %481 = vector.load %arg16[%c224_287, %c0_288] : memref<288x128xf32, #tpu.memory_space<vmem>>, vector<8x128xf32>
    %c232_289 = arith.constant 232 : index
    %c0_290 = arith.constant 0 : index
    %482 = vector.load %arg16[%c232_289, %c0_290] : memref<288x128xf32, #tpu.memory_space<vmem>>, vector<8x128xf32>
    %483 = arith.maximumf %481, %482 : vector<8x128xf32>
    %c240_291 = arith.constant 240 : index
    %c0_292 = arith.constant 0 : index
    %484 = vector.load %arg16[%c240_291, %c0_292] : memref<288x128xf32, #tpu.memory_space<vmem>>, vector<8x128xf32>
    %c248_293 = arith.constant 248 : index
    %c0_294 = arith.constant 0 : index
    %485 = vector.load %arg16[%c248_293, %c0_294] : memref<288x128xf32, #tpu.memory_space<vmem>>, vector<8x128xf32>
    %486 = arith.maximumf %484, %485 : vector<8x128xf32>
    %487 = arith.maximumf %483, %486 : vector<8x128xf32>
    %488 = vector.broadcast %403 : vector<1x128xf32> to vector<8x128xf32>
    %489 = arith.addf %487, %488 : vector<8x128xf32>
    %490 = arith.truncf %489 : vector<8x128xf32> to vector<8x128xbf16>
    %c0_295 = arith.constant 0 : index
    %c896 = arith.constant 896 : index
    %491 = vector.load %arg17[%c0_295, %c896] : memref<8x1152xbf16, #tpu.memory_space<vmem>>, vector<8x128xbf16>
    tpu.vector_store %arg17[%c0_295, %c896], %490 {strides = array<i32>} : memref<8x1152xbf16, #tpu.memory_space<vmem>>, vector<8x128xbf16>,
    %c256_296 = arith.constant 256 : index
    %c0_297 = arith.constant 0 : index
    %492 = vector.load %arg16[%c256_296, %c0_297] : memref<288x128xf32, #tpu.memory_space<vmem>>, vector<8x128xf32>
    %c264_298 = arith.constant 264 : index
    %c0_299 = arith.constant 0 : index
    %493 = vector.load %arg16[%c264_298, %c0_299] : memref<288x128xf32, #tpu.memory_space<vmem>>, vector<8x128xf32>
    %494 = arith.maximumf %492, %493 : vector<8x128xf32>
    %c272_300 = arith.constant 272 : index
    %c0_301 = arith.constant 0 : index
    %495 = vector.load %arg16[%c272_300, %c0_301] : memref<288x128xf32, #tpu.memory_space<vmem>>, vector<8x128xf32>
    %c280_302 = arith.constant 280 : index
    %c0_303 = arith.constant 0 : index
    %496 = vector.load %arg16[%c280_302, %c0_303] : memref<288x128xf32, #tpu.memory_space<vmem>>, vector<8x128xf32>
    %497 = arith.maximumf %495, %496 : vector<8x128xf32>
    %498 = arith.maximumf %494, %497 : vector<8x128xf32>
    %499 = vector.broadcast %403 : vector<1x128xf32> to vector<8x128xf32>
    %500 = arith.addf %498, %499 : vector<8x128xf32>
    %501 = arith.truncf %500 : vector<8x128xf32> to vector<8x128xbf16>
    %c0_304 = arith.constant 0 : index
    %c1024_305 = arith.constant 1024 : index
    %502 = vector.load %arg17[%c0_304, %c1024_305] : memref<8x1152xbf16, #tpu.memory_space<vmem>>, vector<8x128xbf16>
    tpu.vector_store %arg17[%c0_304, %c1024_305], %501 {strides = array<i32>} : memref<8x1152xbf16, #tpu.memory_space<vmem>>, vector<8x128xbf16>,
    %c0_306 = arith.constant 0 : index
    %c0_307 = arith.constant 0 : index
    %503 = vector.load %arg17[%c0_306, %c0_307] : memref<8x1152xbf16, #tpu.memory_space<vmem>>, vector<8x1152xbf16>
    %c0_308 = arith.constant 0 : index
    %c0_309 = arith.constant 0 : index
    %504 = vector.load %arg8[%c0_308, %c0_309] : memref<1152x128xbf16, #tpu.memory_space<vmem>>, vector<1152x128xbf16>
    %cst_310 = arith.constant dense<0.000000e+00> : vector<8x128xf32>
    %505 = tpu.matmul %503, %504, %cst_310 {dimension_numbers = #tpu.dot_dimension_numbers<[1], [0], [0], [1], [0, 0, 1, 1], [], []>} : vector<8x1152xbf16>, vector<1152x128xbf16>, vector<8x128xf32> -> vector<8x128xf32>
    %c0_311 = arith.constant 0 : index
    %c0_312 = arith.constant 0 : index
    %506 = vector.load %arg9[%c0_311, %c0_312] : memref<1x128xf32, #tpu.memory_space<vmem>>, vector<1x128xf32>
    %507 = vector.broadcast %506 : vector<1x128xf32> to vector<8x128xf32>
    %508 = arith.addf %505, %507 : vector<8x128xf32>
    %cst_313 = arith.constant 0.000000e+00 : f32
    %509 = vector.broadcast %cst_313 : f32 to vector<8x128xf32>
    %510 = arith.maximumf %508, %509 : vector<8x128xf32>
    %c0_314 = arith.constant 0 : index
    %c0_315 = arith.constant 0 : index
    %511 = vector.load %arg2[%c0_314, %c0_315] : memref<8x128xf32, #tpu.memory_space<vmem>>, vector<8x128xf32>
    %512 = arith.mulf %510, %511 : vector<8x128xf32>
    %513 = arith.truncf %512 : vector<8x128xf32> to vector<8x128xbf16>
    %c0_316 = arith.constant 0 : index
    %c0_317 = arith.constant 0 : index
    %514 = vector.load %arg10[%c0_316, %c0_317] : memref<128x128xbf16, #tpu.memory_space<vmem>>, vector<128x128xbf16>
    %cst_318 = arith.constant dense<0.000000e+00> : vector<8x128xf32>
    %515 = tpu.matmul %513, %514, %cst_318 {dimension_numbers = #tpu.dot_dimension_numbers<[1], [0], [0], [1], [0, 0, 1, 1], [], []>} : vector<8x128xbf16>, vector<128x128xbf16>, vector<8x128xf32> -> vector<8x128xf32>
    %c0_319 = arith.constant 0 : index
    %c0_320 = arith.constant 0 : index
    %516 = vector.load %arg11[%c0_319, %c0_320] : memref<1x128xf32, #tpu.memory_space<vmem>>, vector<1x128xf32>
    %517 = vector.broadcast %516 : vector<1x128xf32> to vector<8x128xf32>
    %518 = arith.addf %515, %517 : vector<8x128xf32>
    %cst_321 = arith.constant dense<0xFF800000> : vector<8xf32>
    %519 = vector.multi_reduction <maximumf>, %518, %cst_321 [1] : vector<8x128xf32> to vector<8xf32>
    %520 = vector.shape_cast %519 : vector<8xf32> to vector<8x1xf32>
    %521 = vector.broadcast %520 : vector<8x1xf32> to vector<8x128xf32>
    %522 = arith.subf %518, %521 : vector<8x128xf32>
    %523 = math.exp %522 : vector<8x128xf32>
    %cst_322 = arith.constant dense<0.000000e+00> : vector<8xf32>
    %524 = vector.multi_reduction <add>, %523, %cst_322 [1] : vector<8x128xf32> to vector<8xf32>
    %525 = vector.shape_cast %524 : vector<8xf32> to vector<8x1xf32>
    %526 = vector.broadcast %525 : vector<8x1xf32> to vector<8x128xf32>
    %527 = arith.divf %523, %526 : vector<8x128xf32>
    %c0_323 = arith.constant 0 : index
    %c0_324 = arith.constant 0 : index
    %528 = vector.load %arg12[%c0_323, %c0_324] : memref<8x128xf32, #tpu.memory_space<vmem>>, vector<8x128xf32>
    tpu.vector_store %arg12[%c0_323, %c0_324], %527 {strides = array<i32>} : memref<8x128xf32, #tpu.memory_space<vmem>>, vector<8x128xf32>,
    return
  }
  func.func @transform_0(%arg0: i32) -> (i32, i32) {
    %c0_i32 = arith.constant 0 : i32
    %c0_i32_0 = arith.constant 0 : i32
    return %arg0, %c0_i32 : i32, i32
  }
  func.func @transform_1(%arg0: i32) -> (i32, i32) {
    %c0_i32 = arith.constant 0 : i32
    %c0_i32_0 = arith.constant 0 : i32
    return %arg0, %c0_i32 : i32, i32
  }
  func.func @transform_2(%arg0: i32) -> (i32, i32) {
    %c0_i32 = arith.constant 0 : i32
    %c0_i32_0 = arith.constant 0 : i32
    %c0_i32_1 = arith.constant 0 : i32
    return %c0_i32, %c0_i32_0 : i32, i32
  }
  func.func @transform_3(%arg0: i32) -> (i32, i32) {
    %c0_i32 = arith.constant 0 : i32
    %c0_i32_0 = arith.constant 0 : i32
    %c0_i32_1 = arith.constant 0 : i32
    return %c0_i32, %c0_i32_0 : i32, i32
  }
  func.func @transform_4(%arg0: i32) -> (i32, i32) {
    %c0_i32 = arith.constant 0 : i32
    %c0_i32_0 = arith.constant 0 : i32
    %c0_i32_1 = arith.constant 0 : i32
    return %c0_i32, %c0_i32_0 : i32, i32
  }
  func.func @transform_5(%arg0: i32) -> (i32, i32) {
    %c0_i32 = arith.constant 0 : i32
    %c0_i32_0 = arith.constant 0 : i32
    %c0_i32_1 = arith.constant 0 : i32
    return %c0_i32, %c0_i32_0 : i32, i32
  }
  func.func @transform_6(%arg0: i32) -> (i32, i32) {
    %c0_i32 = arith.constant 0 : i32
    %c0_i32_0 = arith.constant 0 : i32
    %c0_i32_1 = arith.constant 0 : i32
    return %c0_i32, %c0_i32_0 : i32, i32
  }
  func.func @transform_7(%arg0: i32) -> (i32, i32) {
    %c0_i32 = arith.constant 0 : i32
    %c0_i32_0 = arith.constant 0 : i32
    %c0_i32_1 = arith.constant 0 : i32
    return %c0_i32, %c0_i32_0 : i32, i32
  }
  func.func @transform_8(%arg0: i32) -> (i32, i32) {
    %c0_i32 = arith.constant 0 : i32
    %c0_i32_0 = arith.constant 0 : i32
    %c0_i32_1 = arith.constant 0 : i32
    return %c0_i32, %c0_i32_0 : i32, i32
  }
  func.func @transform_9(%arg0: i32) -> (i32, i32) {
    %c0_i32 = arith.constant 0 : i32
    %c0_i32_0 = arith.constant 0 : i32
    %c0_i32_1 = arith.constant 0 : i32
    return %c0_i32, %c0_i32_0 : i32, i32
  }
  func.func @transform_10(%arg0: i32) -> (i32, i32) {
    %c0_i32 = arith.constant 0 : i32
    %c0_i32_0 = arith.constant 0 : i32
    %c0_i32_1 = arith.constant 0 : i32
    return %c0_i32, %c0_i32_0 : i32, i32
  }
  func.func @transform_11(%arg0: i32) -> (i32, i32) {
    %c0_i32 = arith.constant 0 : i32
    %c0_i32_0 = arith.constant 0 : i32
    return %arg0, %c0_i32 : i32, i32
  }
}

</mosaic_0001>

<llo_original>
// kernel: neural_network_forward.1
$region0: #{neural_network_forward.1}
  #allocation0 [shape = 'u32[]', space=smem, size = 0x4, offset = 0x4, fixed_abs, tag = 'smem constant byte address 0x4 - core index']
  #allocation1 [shape = 'u32[144,128]{1,0:T(1,128)}', space=vmem, size = 0x12000, scoped, tag = 'internal scratch']
  #allocation2 [shape = 'bf16[3200,32]{1,0:T(8,128)(2,1)}', space=vmem, size = 0xc8000, scoped, tag = 'scratch operand']
  #allocation3 [shape = 'f32[2688,64]{1,0:T(8,128)}', space=vmem, size = 0x150000, scoped, tag = 'scratch operand']
  #allocation4 [shape = 'bf16[288,64]{1,0:T(8,128)(2,1)}', space=vmem, size = 0x12000, scoped, tag = 'scratch operand']
  #allocation5 [shape = 'f32[288,128]{1,0:T(8,128)}', space=vmem, size = 0x24000, scoped, tag = 'scratch operand']
  #allocation6 [shape = 'bf16[8,1152]{1,0:T(8,128)(2,1)}', space=vmem, size = 0x4800, scoped, tag = 'scratch operand']
  %s0 = inlined_call_operand.vmem [shape: bf16[3072,200], index: 0, kind: input, shape index: {}]
  %s1 = inlined_call_operand.vmem [shape: f32[8,128], index: 1, kind: input, shape index: {}]
  %s2 = inlined_call_operand.vmem [shape: bf16[200,128], index: 2, kind: input, shape index: {}]
  %s3 = inlined_call_operand.vmem [shape: bf16[288,64], index: 3, kind: input, shape index: {}]
  %s4 = inlined_call_operand.vmem [shape: f32[1,64], index: 4, kind: input, shape index: {}]
  %s5 = inlined_call_operand.vmem [shape: bf16[64,128], index: 5, kind: input, shape index: {}]
  %s6 = inlined_call_operand.vmem [shape: f32[1,128], index: 6, kind: input, shape index: {}]
  %s7 = inlined_call_operand.vmem [shape: bf16[1152,128], index: 7, kind: input, shape index: {}]
  %s8 = inlined_call_operand.vmem [shape: f32[1,128], index: 8, kind: input, shape index: {}]
  %s9 = inlined_call_operand.vmem [shape: bf16[128,128], index: 9, kind: input, shape index: {}]
  %s10 = inlined_call_operand.vmem [shape: f32[1,128], index: 10, kind: input, shape index: {}]
  %s11 = inlined_call_operand.vmem [shape: f32[8,128], index: 11, kind: output, shape index: {}]
  %s12 = sld [smem:[#allocation0]]
  $region68: #{neural_network_forward.1} parent=0
    _
  %s14 = ssub.s32 1, %s12
  %s15 = scalar_select 0, %s14, %s12
  // Predicated region
  $region2: #{neural_network_forward.1} parent=0 // pred_check
    _
  $region3: #{neural_network_forward.1} parent=0 // pred_check_branch
    %17 = sbr.rel (0) target = $region5
  $region4: #{neural_network_forward.1} parent=0 // pred_region
    _
  $region5: #{neural_network_forward.1} parent=0 // pred_fallthru
    _
  // Predicated region
  $region6: #{neural_network_forward.1} parent=0 // pred_check
    _
  $region7: #{neural_network_forward.1} parent=0 // pred_check_branch
    %19 = sbr.rel (0) target = $region9
  $region8: #{neural_network_forward.1} parent=0 // pred_region
    _
  $region9: #{neural_network_forward.1} parent=0 // pred_fallthru
    _
  // Predicated region
  $region10: #{neural_network_forward.1} parent=0 // pred_check
    _
  $region11: #{neural_network_forward.1} parent=0 // pred_check_branch
    %21 = sbr.rel (0) target = $region13
  $region12: #{neural_network_forward.1} parent=0 // pred_region
    _
  $region13: #{neural_network_forward.1} parent=0 // pred_fallthru
    _
  // Predicated region
  $region14: #{neural_network_forward.1} parent=0 // pred_check
    _
  $region15: #{neural_network_forward.1} parent=0 // pred_check_branch
    %23 = sbr.rel (0) target = $region17
  $region16: #{neural_network_forward.1} parent=0 // pred_region
    _
  $region17: #{neural_network_forward.1} parent=0 // pred_fallthru
    _
  // Predicated region
  $region18: #{neural_network_forward.1} parent=0 // pred_check
    _
  $region19: #{neural_network_forward.1} parent=0 // pred_check_branch
    %25 = sbr.rel (0) target = $region21
  $region20: #{neural_network_forward.1} parent=0 // pred_region
    _
  $region21: #{neural_network_forward.1} parent=0 // pred_fallthru
    _
  // Predicated region
  $region22: #{neural_network_forward.1} parent=0 // pred_check
    _
  $region23: #{neural_network_forward.1} parent=0 // pred_check_branch
    %27 = sbr.rel (0) target = $region25
  $region24: #{neural_network_forward.1} parent=0 // pred_region
    _
  $region25: #{neural_network_forward.1} parent=0 // pred_fallthru
    _
  // Predicated region
  $region26: #{neural_network_forward.1} parent=0 // pred_check
    _
  $region27: #{neural_network_forward.1} parent=0 // pred_check_branch
    %29 = sbr.rel (0) target = $region29
  $region28: #{neural_network_forward.1} parent=0 // pred_region
    _
  $region29: #{neural_network_forward.1} parent=0 // pred_fallthru
    _
  // Predicated region
  $region30: #{neural_network_forward.1} parent=0 // pred_check
    _
  $region31: #{neural_network_forward.1} parent=0 // pred_check_branch
    %31 = sbr.rel (0) target = $region33
  $region32: #{neural_network_forward.1} parent=0 // pred_region
    _
  $region33: #{neural_network_forward.1} parent=0 // pred_fallthru
    _
  // Predicated region
  $region34: #{neural_network_forward.1} parent=0 // pred_check
    _
  $region35: #{neural_network_forward.1} parent=0 // pred_check_branch
    %33 = sbr.rel (0) target = $region37
  $region36: #{neural_network_forward.1} parent=0 // pred_region
    _
  $region37: #{neural_network_forward.1} parent=0 // pred_fallthru
    _
  // Predicated region
  $region38: #{neural_network_forward.1} parent=0 // pred_check
    _
  $region39: #{neural_network_forward.1} parent=0 // pred_check_branch
    %35 = sbr.rel (0) target = $region41
  $region40: #{neural_network_forward.1} parent=0 // pred_region
    _
  $region41: #{neural_network_forward.1} parent=0 // pred_fallthru
    _
  // Predicated region
  $region42: #{neural_network_forward.1} parent=0 // pred_check
    _
  $region43: #{neural_network_forward.1} parent=0 // pred_check_branch
    %37 = sbr.rel (0) target = $region45
  $region44: #{neural_network_forward.1} parent=0 // pred_region
    _
  $region45: #{neural_network_forward.1} parent=0 // pred_fallthru
    _
  loop: start=0, step=1, limit=24
  $region46: #{neural_network_forward.1} parent=0 // loop_pre_header
    _
  $region47: #{neural_network_forward.1} parent=0 // loop_header
    %s40 = sphi 0, %s44
    %p41 = scmp.ge.s32.totalorder %s40, 24
  $region48: #{neural_network_forward.1} parent=0 // loop_header_branch
    %43 = sbr.rel (%p41) target = $region52
  $region49: #{neural_network_forward.1} parent=0 // loop_body
    %s45 = smul.u32 %s40, 128
    %s46 = sshra.s32 %s45, 3
    %s47 = sand.u32 %s45, 7
    %s48 = smul.u32 %s46, 2
    %s49 = smul.addr %s48, 4
    %s50 = scalar_lea.vmem %s0, %s49
    %v51 = vld [vmem:[%s50] sm:$0xff]
    %v52 = vld [vmem:[%s50 + $0x8] sm:$0xff]
    %v53 = vld [vmem:[%s50 + $0x10] sm:$0xff]
    %v54 = vld [vmem:[%s50 + $0x18] sm:$0xff]
    %v55 = vld [vmem:[%s50 + $0x20] sm:$0xff]
    %v56 = vld [vmem:[%s50 + $0x28] sm:$0xff]
    %v57 = vld [vmem:[%s50 + $0x30] sm:$0xff]
    %v58 = vld [vmem:[%s50 + $0x38] sm:$0xff]
    %v59 = vld [vmem:[%s50 + $0x40] sm:$0xff]
    %v60 = vld [vmem:[%s50 + $0x48] sm:$0xff]
    %v61 = vld [vmem:[%s50 + $0x50] sm:$0xff]
    %v62 = vld [vmem:[%s50 + $0x58] sm:$0xff]
    %v63 = vld [vmem:[%s50 + $0x60] sm:$0xff]
    %v64 = vld [vmem:[%s50 + $0x68] sm:$0xff]
    %v65 = vld [vmem:[%s50 + $0x70] sm:$0xff]
    %v66 = vld [vmem:[%s50 + $0x78] sm:$0xff]
    %v67 = vld [vmem:[%s2] sm:$0xf]
    %v68 = vld [vmem:[%s2 + $0x4] sm:$0xf]
    %v69 = vld [vmem:[%s2 + $0x8] sm:$0xf]
    %v70 = vld [vmem:[%s2 + $0xc] sm:$0xf]
    %v71 = vld [vmem:[%s2 + $0x10] sm:$0xf]
    %v72 = vld [vmem:[%s2 + $0x14] sm:$0xf]
    %v73 = vld [vmem:[%s2 + $0x18] sm:$0xf]
    %v74 = vld [vmem:[%s2 + $0x1c] sm:$0xf]
    %v75 = vld [vmem:[%s2 + $0x20] sm:$0xf]
    %v76 = vld [vmem:[%s2 + $0x24] sm:$0xf]
    %v77 = vld [vmem:[%s2 + $0x28] sm:$0xf]
    %v78 = vld [vmem:[%s2 + $0x2c] sm:$0xf]
    %v79 = vld [vmem:[%s2 + $0x30] sm:$0xf]
    %v80 = vld [vmem:[%s2 + $0x34] sm:$0xf]
    %v81 = vld [vmem:[%s2 + $0x38] sm:$0xf]
    %v82 = vld [vmem:[%s2 + $0x3c] sm:$0xf]
    %v83 = vld [vmem:[%s2 + $0x40] sm:$0xf]
    %v84 = vld [vmem:[%s2 + $0x44] sm:$0xf]
    %v85 = vld [vmem:[%s2 + $0x48] sm:$0xf]
    %v86 = vld [vmem:[%s2 + $0x4c] sm:$0xf]
    %v87 = vld [vmem:[%s2 + $0x50] sm:$0xf]
    %v88 = vld [vmem:[%s2 + $0x54] sm:$0xf]
    %v89 = vld [vmem:[%s2 + $0x58] sm:$0xf]
    %v90 = vld [vmem:[%s2 + $0x5c] sm:$0xf]
    %v91 = vld [vmem:[%s2 + $0x60] sm:$0xf]
    %v108 = vunpack.c.l.b16 %v51
    %v109 = vunpack.c.h.b16 %v51
    %v110 = vunpack.c.l.b16 %v52
    %v111 = vunpack.c.h.b16 %v52
    %v112 = vunpack.c.l.b16 %v53
    %v113 = vunpack.c.h.b16 %v53
    %v114 = vunpack.c.l.b16 %v54
    %v115 = vunpack.c.h.b16 %v54
    %v116 = vunpack.c.l.b16 %v55
    %v117 = vunpack.c.h.b16 %v55
    %v118 = vunpack.c.l.b16 %v56
    %v119 = vunpack.c.h.b16 %v56
    %v120 = vunpack.c.l.b16 %v57
    %v121 = vunpack.c.h.b16 %v57
    %v122 = vunpack.c.l.b16 %v58
    %v123 = vunpack.c.h.b16 %v58
    %v124 = vunpack.c.l.b16 %v59
    %v125 = vunpack.c.h.b16 %v59
    %v126 = vunpack.c.l.b16 %v60
    %v127 = vunpack.c.h.b16 %v60
    %v128 = vunpack.c.l.b16 %v61
    %v129 = vunpack.c.h.b16 %v61
    %v130 = vunpack.c.l.b16 %v62
    %v131 = vunpack.c.h.b16 %v62
    %v132 = vunpack.c.l.b16 %v63
    %v133 = vunpack.c.h.b16 %v63
    %v134 = vunpack.c.l.b16 %v64
    %v135 = vunpack.c.h.b16 %v64
    %v136 = vunpack.c.l.b16 %v65
    %v137 = vunpack.c.h.b16 %v65
    %v138 = vunpack.c.l.b16 %v66
    %v139 = vunpack.c.h.b16 %v66
    %v140 = vpack.c.b16 %v110, %v108
    %v141 = vpack.c.b16 %v111, %v109
    %v142 = vpack.c.b16 %v114, %v112
    %v143 = vpack.c.b16 %v115, %v113
    %v144 = vpack.c.b16 %v118, %v116
    %v145 = vpack.c.b16 %v119, %v117
    %v146 = vpack.c.b16 %v122, %v120
    %v147 = vpack.c.b16 %v123, %v121
    %v148 = vpack.c.b16 %v126, %v124
    %v149 = vpack.c.b16 %v127, %v125
    %v150 = vpack.c.b16 %v130, %v128
    %v151 = vpack.c.b16 %v131, %v129
    %v152 = vpack.c.b16 %v134, %v132
    %v153 = vpack.c.b16 %v135, %v133
    %v154 = vpack.c.b16 %v138, %v136
    %v155 = vpack.c.b16 %v139, %v137
    %v189 = vunpack.c.l.b16 %v67
    %v190 = vunpack.c.l.b16 %v68
    %v191 = vunpack.c.l.b16 %v69
    %v192 = vunpack.c.l.b16 %v70
    %v193 = vunpack.c.l.b16 %v71
    %v194 = vunpack.c.l.b16 %v72
    %v195 = vunpack.c.l.b16 %v73
    %v196 = vunpack.c.l.b16 %v74
    %v197 = vunpack.c.l.b16 %v75
    %v198 = vunpack.c.l.b16 %v76
    %v199 = vunpack.c.l.b16 %v77
    %v200 = vunpack.c.l.b16 %v78
    %v201 = vunpack.c.l.b16 %v79
    %v202 = vunpack.c.l.b16 %v80
    %v203 = vunpack.c.l.b16 %v81
    %v204 = vunpack.c.l.b16 %v82
    %v205 = vunpack.c.l.b16 %v83
    %v206 = vunpack.c.l.b16 %v84
    %v207 = vunpack.c.l.b16 %v85
    %v208 = vunpack.c.l.b16 %v86
    %v209 = vunpack.c.l.b16 %v87
    %v210 = vunpack.c.l.b16 %v88
    %v211 = vunpack.c.l.b16 %v89
    %v212 = vunpack.c.l.b16 %v90
    %v213 = vunpack.c.l.b16 %v91
    %v214 = vpack.c.b16 %v190, %v189
    %v215 = vpack.c.b16 %v192, %v191
    %v216 = vpack.c.b16 %v194, %v193
    %v217 = vpack.c.b16 %v196, %v195
    %v218 = vpack.c.b16 %v198, %v197
    %v219 = vpack.c.b16 %v200, %v199
    %v220 = vpack.c.b16 %v202, %v201
    %v221 = vpack.c.b16 %v204, %v203
    %v222 = vpack.c.b16 %v206, %v205
    %v223 = vpack.c.b16 %v208, %v207
    %v224 = vpack.c.b16 %v210, %v209
    %v225 = vpack.c.b16 %v212, %v211
    %v226 = vpack.c.b16 %v213, %v213
    %vm239 = vcmask 588800
    %v241 = vsel %vm239, %v141, 0
    %v244 = vsel %vm239, %v143, 0
    %v247 = vsel %vm239, %v145, 0
    %v250 = vsel %vm239, %v147, 0
    %v253 = vsel %vm239, %v149, 0
    %v256 = vsel %vm239, %v151, 0
    %v259 = vsel %vm239, %v153, 0
    %v262 = vsel %vm239, %v155, 0
    %vm264 = vcmask 1043456
    %v266 = vsel %vm264, %v226, 0
    %268 = vmatprep.subr.bf16.mxu0 0
    %269 = vmatpush1.bf16.msra.mxu0 %v221
    %270 = vmatprep.subr.bf16.mxu0 0
    %271 = vmatpush1.bf16.msra.mxu0 %v220
    %272 = vmatprep.subr.bf16.mxu0 0
    %273 = vmatpush1.bf16.msra.mxu0 %v219
    %274 = vmatprep.subr.bf16.mxu0 0
    %275 = vmatpush1.bf16.msra.mxu0 %v218
    %276 = vmatprep.subr.bf16.mxu0 0
    %277 = vmatpush1.bf16.msra.mxu0 %v217
    %278 = vmatprep.subr.bf16.mxu0 0
    %279 = vmatpush1.bf16.msra.mxu0 %v216
    %280 = vmatprep.subr.bf16.mxu0 0
    %281 = vmatpush1.bf16.msra.mxu0 %v215
    %282 = vmatprep.subr.bf16.mxu0 0
    %283 = vmatpush1.bf16.msra.mxu0 %v214
    %284 = vmatprep.subr.bf16.mxu0 0
    %285 = vmatpush2.bf16.msra.mxu0 0
    %286 = vmatprep.subr.bf16.mxu0 0
    %287 = vmatpush2.bf16.msra.mxu0 0
    %288 = vmatprep.subr.bf16.mxu0 0
    %289 = vmatpush2.bf16.msra.mxu0 0
    %290 = vmatprep.subr.bf16.mxu0 0
    %291 = vmatpush2.bf16.msra.mxu0 %v266
    %292 = vmatprep.subr.bf16.mxu0 0
    %293 = vmatpush2.bf16.msra.mxu0 %v225
    %294 = vmatprep.subr.bf16.mxu0 0
    %295 = vmatpush2.bf16.msra.mxu0 %v224
    %296 = vmatprep.subr.bf16.mxu0 0
    %297 = vmatpush2.bf16.msra.mxu0 %v223
    %298 = vmatprep.subr.bf16.mxu0 0
    %299 = vmatpush2.bf16.msra.mxu0 %v222
    %300 = vmatprep.mubr.bf16.mxu0 %v241
    %301 = vmatmul.mubr.bf16.gmra.mxu0 %v140
    %v302 = vpop.f32.mrf.mxu0
    %v303 = vadd.f32 0.0, %v302
    %v304 = vpop.f32.mrf.mxu0
    %v305 = vpop.f32.mrf.mxu0
    %v306 = vadd.f32 0.0, %v305
    %v307 = vpop.f32.mrf.mxu0
    %308 = vmatprep.mubr.bf16.mxu0 %v244
    %309 = vmatmul.mubr.bf16.gmra.mxu0 %v142
    %v310 = vpop.f32.mrf.mxu0
    %v311 = vadd.f32 0.0, %v310
    %v312 = vpop.f32.mrf.mxu0
    %v313 = vpop.f32.mrf.mxu0
    %v314 = vadd.f32 0.0, %v313
    %v315 = vpop.f32.mrf.mxu0
    %316 = vmatprep.mubr.bf16.mxu0 %v247
    %317 = vmatmul.mubr.bf16.gmra.mxu0 %v144
    %v318 = vpop.f32.mrf.mxu0
    %v319 = vadd.f32 0.0, %v318
    %v320 = vpop.f32.mrf.mxu0
    %v321 = vpop.f32.mrf.mxu0
    %v322 = vadd.f32 0.0, %v321
    %v323 = vpop.f32.mrf.mxu0
    %324 = vmatprep.mubr.bf16.mxu0 %v250
    %325 = vmatmul.mubr.bf16.gmra.mxu0 %v146
    %v326 = vpop.f32.mrf.mxu0
    %v327 = vadd.f32 0.0, %v326
    %v328 = vpop.f32.mrf.mxu0
    %v329 = vpop.f32.mrf.mxu0
    %v330 = vadd.f32 0.0, %v329
    %v331 = vpop.f32.mrf.mxu0
    %332 = vmatprep.mubr.bf16.mxu0 %v253
    %333 = vmatmul.mubr.bf16.gmra.mxu0 %v148
    %v334 = vpop.f32.mrf.mxu0
    %v335 = vadd.f32 0.0, %v334
    %v336 = vpop.f32.mrf.mxu0
    %v337 = vpop.f32.mrf.mxu0
    %v338 = vadd.f32 0.0, %v337
    %v339 = vpop.f32.mrf.mxu0
    %340 = vmatprep.mubr.bf16.mxu0 %v256
    %341 = vmatmul.mubr.bf16.gmra.mxu0 %v150
    %v342 = vpop.f32.mrf.mxu0
    %v343 = vadd.f32 0.0, %v342
    %v344 = vpop.f32.mrf.mxu0
    %v345 = vpop.f32.mrf.mxu0
    %v346 = vadd.f32 0.0, %v345
    %v347 = vpop.f32.mrf.mxu0
    %348 = vmatprep.mubr.bf16.mxu0 %v259
    %349 = vmatmul.mubr.bf16.gmra.mxu0 %v152
    %v350 = vpop.f32.mrf.mxu0
    %v351 = vadd.f32 0.0, %v350
    %v352 = vpop.f32.mrf.mxu0
    %v353 = vpop.f32.mrf.mxu0
    %v354 = vadd.f32 0.0, %v353
    %v355 = vpop.f32.mrf.mxu0
    %356 = vmatprep.mubr.bf16.mxu0 %v262
    %357 = vmatmul.mubr.bf16.gmra.mxu0 %v154
    %v358 = vpop.f32.mrf.mxu0
    %v359 = vadd.f32 0.0, %v358
    %v360 = vpop.f32.mrf.mxu0
    %v361 = vpop.f32.mrf.mxu0
    %v362 = vadd.f32 0.0, %v361
    %v363 = vpop.f32.mrf.mxu0
    %364 = vdwg.mxu0
    %381 = vrot.lane.b32.xlu0 %v303, 96
    %v382 = vpop.permute.xlu0 %381
    %383 = vrot.lane.b32.xlu0 %v306, 96
    %v384 = vpop.permute.xlu0 %383
    %385 = vrot.lane.b32.xlu0 %v311, 96
    %v386 = vpop.permute.xlu0 %385
    %387 = vrot.lane.b32.xlu0 %v314, 96
    %v388 = vpop.permute.xlu0 %387
    %389 = vrot.lane.b32.xlu0 %v319, 96
    %v390 = vpop.permute.xlu0 %389
    %391 = vrot.lane.b32.xlu0 %v322, 96
    %v392 = vpop.permute.xlu0 %391
    %393 = vrot.lane.b32.xlu0 %v327, 96
    %v394 = vpop.permute.xlu0 %393
    %395 = vrot.lane.b32.xlu0 %v330, 96
    %v396 = vpop.permute.xlu0 %395
    %397 = vrot.lane.b32.xlu0 %v335, 96
    %v398 = vpop.permute.xlu0 %397
    %399 = vrot.lane.b32.xlu0 %v338, 96
    %v400 = vpop.permute.xlu0 %399
    %401 = vrot.lane.b32.xlu0 %v343, 96
    %v402 = vpop.permute.xlu0 %401
    %403 = vrot.lane.b32.xlu0 %v346, 96
    %v404 = vpop.permute.xlu0 %403
    %405 = vrot.lane.b32.xlu0 %v351, 96
    %v406 = vpop.permute.xlu0 %405
    %407 = vrot.lane.b32.xlu0 %v354, 96
    %v408 = vpop.permute.xlu0 %407
    %409 = vrot.lane.b32.xlu0 %v359, 96
    %v410 = vpop.permute.xlu0 %409
    %411 = vrot.lane.b32.xlu0 %v362, 96
    %v412 = vpop.permute.xlu0 %411
    %v429 = vmax.f32 %v303, %v382
    %v430 = vmax.f32 %v306, %v384
    %v431 = vmax.f32 %v311, %v386
    %v432 = vmax.f32 %v314, %v388
    %v433 = vmax.f32 %v319, %v390
    %v434 = vmax.f32 %v322, %v392
    %v435 = vmax.f32 %v327, %v394
    %v436 = vmax.f32 %v330, %v396
    %v437 = vmax.f32 %v335, %v398
    %v438 = vmax.f32 %v338, %v400
    %v439 = vmax.f32 %v343, %v402
    %v440 = vmax.f32 %v346, %v404
    %v441 = vmax.f32 %v351, %v406
    %v442 = vmax.f32 %v354, %v408
    %v443 = vmax.f32 %v359, %v410
    %v444 = vmax.f32 %v362, %v412
    %461 = vrot.lane.b32.xlu0 %v429, 64
    %v462 = vpop.permute.xlu0 %461
    %463 = vrot.lane.b32.xlu0 %v430, 64
    %v464 = vpop.permute.xlu0 %463
    %465 = vrot.lane.b32.xlu0 %v431, 64
    %v466 = vpop.permute.xlu0 %465
    %467 = vrot.lane.b32.xlu0 %v432, 64
    %v468 = vpop.permute.xlu0 %467
    %469 = vrot.lane.b32.xlu0 %v433, 64
    %v470 = vpop.permute.xlu0 %469
    %471 = vrot.lane.b32.xlu0 %v434, 64
    %v472 = vpop.permute.xlu0 %471
    %473 = vrot.lane.b32.xlu0 %v435, 64
    %v474 = vpop.permute.xlu0 %473
    %475 = vrot.lane.b32.xlu0 %v436, 64
    %v476 = vpop.permute.xlu0 %475
    %477 = vrot.lane.b32.xlu0 %v437, 64
    %v478 = vpop.permute.xlu0 %477
    %479 = vrot.lane.b32.xlu0 %v438, 64
    %v480 = vpop.permute.xlu0 %479
    %481 = vrot.lane.b32.xlu0 %v439, 64
    %v482 = vpop.permute.xlu0 %481
    %483 = vrot.lane.b32.xlu0 %v440, 64
    %v484 = vpop.permute.xlu0 %483
    %485 = vrot.lane.b32.xlu0 %v441, 64
    %v486 = vpop.permute.xlu0 %485
    %487 = vrot.lane.b32.xlu0 %v442, 64
    %v488 = vpop.permute.xlu0 %487
    %489 = vrot.lane.b32.xlu0 %v443, 64
    %v490 = vpop.permute.xlu0 %489
    %491 = vrot.lane.b32.xlu0 %v444, 64
    %v492 = vpop.permute.xlu0 %491
    %v509 = vmax.f32 %v429, %v462
    %v510 = vmax.f32 %v430, %v464
    %v511 = vmax.f32 %v431, %v466
    %v512 = vmax.f32 %v432, %v468
    %v513 = vmax.f32 %v433, %v470
    %v514 = vmax.f32 %v434, %v472
    %v515 = vmax.f32 %v435, %v474
    %v516 = vmax.f32 %v436, %v476
    %v517 = vmax.f32 %v437, %v478
    %v518 = vmax.f32 %v438, %v480
    %v519 = vmax.f32 %v439, %v482
    %v520 = vmax.f32 %v440, %v484
    %v521 = vmax.f32 %v441, %v486
    %v522 = vmax.f32 %v442, %v488
    %v523 = vmax.f32 %v443, %v490
    %v524 = vmax.f32 %v444, %v492
    %v525 = vpack.c.bf16 %v510, %v509
    %v526 = vpack.c.bf16 %v512, %v511
    %v527 = vpack.c.bf16 %v514, %v513
    %v528 = vpack.c.bf16 %v516, %v515
    %v529 = vpack.c.bf16 %v518, %v517
    %v530 = vpack.c.bf16 %v520, %v519
    %v531 = vpack.c.bf16 %v522, %v521
    %v532 = vpack.c.bf16 %v524, %v523
    %v541 = vunpack.c.l.b16 %v525
    %v542 = vunpack.c.h.b16 %v525
    %v543 = vunpack.c.l.b16 %v526
    %v544 = vunpack.c.h.b16 %v526
    %v545 = vunpack.c.l.b16 %v527
    %v546 = vunpack.c.h.b16 %v527
    %v547 = vunpack.c.l.b16 %v528
    %v548 = vunpack.c.h.b16 %v528
    %v549 = vunpack.c.l.b16 %v529
    %v550 = vunpack.c.h.b16 %v529
    %v551 = vunpack.c.l.b16 %v530
    %v552 = vunpack.c.h.b16 %v530
    %v553 = vunpack.c.l.b16 %v531
    %v554 = vunpack.c.h.b16 %v531
    %v555 = vunpack.c.l.b16 %v532
    %v556 = vunpack.c.h.b16 %v532
    %v557 = vpack.c.b16 %v541, %v541
    %v558 = vpack.c.b16 %v542, %v542
    %v559 = vpack.c.b16 %v543, %v543
    %v560 = vpack.c.b16 %v544, %v544
    %v561 = vpack.c.b16 %v545, %v545
    %v562 = vpack.c.b16 %v546, %v546
    %v563 = vpack.c.b16 %v547, %v547
    %v564 = vpack.c.b16 %v548, %v548
    %v565 = vpack.c.b16 %v549, %v549
    %v566 = vpack.c.b16 %v550, %v550
    %v567 = vpack.c.b16 %v551, %v551
    %v568 = vpack.c.b16 %v552, %v552
    %v569 = vpack.c.b16 %v553, %v553
    %v570 = vpack.c.b16 %v554, %v554
    %v571 = vpack.c.b16 %v555, %v555
    %v572 = vpack.c.b16 %v556, %v556
    %s589 = smul.addr %s46, 4
    %s590 = scalar_lea.vmem [#allocation2], %s589
    %vm591 = vcmask 257024
    %592 = vst.msk [vmem:[%s590] sm:$0xf] %vm591, %v557
    %593 = vst.msk [vmem:[%s590 + $0x4] sm:$0xf] %vm591, %v558
    %594 = vst.msk [vmem:[%s590 + $0x8] sm:$0xf] %vm591, %v559
    %595 = vst.msk [vmem:[%s590 + $0xc] sm:$0xf] %vm591, %v560
    %596 = vst.msk [vmem:[%s590 + $0x10] sm:$0xf] %vm591, %v561
    %597 = vst.msk [vmem:[%s590 + $0x14] sm:$0xf] %vm591, %v562
    %598 = vst.msk [vmem:[%s590 + $0x18] sm:$0xf] %vm591, %v563
    %599 = vst.msk [vmem:[%s590 + $0x1c] sm:$0xf] %vm591, %v564
    %600 = vst.msk [vmem:[%s590 + $0x20] sm:$0xf] %vm591, %v565
    %601 = vst.msk [vmem:[%s590 + $0x24] sm:$0xf] %vm591, %v566
    %602 = vst.msk [vmem:[%s590 + $0x28] sm:$0xf] %vm591, %v567
    %603 = vst.msk [vmem:[%s590 + $0x2c] sm:$0xf] %vm591, %v568
    %604 = vst.msk [vmem:[%s590 + $0x30] sm:$0xf] %vm591, %v569
    %605 = vst.msk [vmem:[%s590 + $0x34] sm:$0xf] %vm591, %v570
    %606 = vst.msk [vmem:[%s590 + $0x38] sm:$0xf] %vm591, %v571
    %607 = vst.msk [vmem:[%s590 + $0x3c] sm:$0xf] %vm591, %v572
  $region50: #{neural_network_forward.1} parent=0 // loop_footer
    %s44 = sadd.s32 1, %s40
  $region51: #{neural_network_forward.1} parent=0 // loop_footer_branch
    %39 = sbr.rel target = $region47
  $region52: #{neural_network_forward.1} parent=0 // loop_exit
    _
  loop: start=0, step=1, limit=21
  $region53: #{neural_network_forward.1} parent=0 // loop_pre_header
    _
  $region54: #{neural_network_forward.1} parent=0 // loop_header
    %s609 = sphi 0, %s613
    %p610 = scmp.ge.s32.totalorder %s609, 21
  $region55: #{neural_network_forward.1} parent=0 // loop_header_branch
    %612 = sbr.rel (%p610) target = $region59
  $region56: #{neural_network_forward.1} parent=0 // loop_body
    %s614 = smul.u32 %s609, 128
    %s615 = sadd.s32 %s614, 56
    %s616 = sshra.s32 %s615, 3
    %s617 = sand.u32 %s615, 7
    %s618 = smul.addr %s616, 4
    %s619 = scalar_lea.vmem [#allocation2], %s618
    %v620 = vld [vmem:[%s619] sm:$0xf]
    %v621 = vld [vmem:[%s619 + $0x4] sm:$0xf]
    %v622 = vld [vmem:[%s619 + $0x8] sm:$0xf]
    %v623 = vld [vmem:[%s619 + $0xc] sm:$0xf]
    %v624 = vld [vmem:[%s619 + $0x10] sm:$0xf]
    %v625 = vld [vmem:[%s619 + $0x14] sm:$0xf]
    %v626 = vld [vmem:[%s619 + $0x18] sm:$0xf]
    %v627 = vld [vmem:[%s619 + $0x1c] sm:$0xf]
    %v628 = vld [vmem:[%s619 + $0x20] sm:$0xf]
    %v629 = vld [vmem:[%s619 + $0x24] sm:$0xf]
    %v630 = vld [vmem:[%s619 + $0x28] sm:$0xf]
    %v631 = vld [vmem:[%s619 + $0x2c] sm:$0xf]
    %v632 = vld [vmem:[%s619 + $0x30] sm:$0xf]
    %v633 = vld [vmem:[%s619 + $0x34] sm:$0xf]
    %v634 = vld [vmem:[%s619 + $0x38] sm:$0xf]
    %v635 = vld [vmem:[%s619 + $0x3c] sm:$0xf]
    %v636 = vld [vmem:[%s3] sm:$0xf]
    %v637 = vld [vmem:[%s3 + $0x4] sm:$0xf]
    %v638 = vld [vmem:[%s3 + $0x8] sm:$0xf]
    %v639 = vld [vmem:[%s3 + $0xc] sm:$0xf]
    %s640 = sadd.s32 %s614, 64
    %s641 = sshra.s32 %s640, 3
    %s642 = sand.u32 %s640, 7
    %s643 = smul.addr %s641, 4
    %s644 = scalar_lea.vmem [#allocation2], %s643
    %v645 = vld [vmem:[%s644] sm:$0xf]
    %v646 = vld [vmem:[%s644 + $0x4] sm:$0xf]
    %v647 = vld [vmem:[%s644 + $0x8] sm:$0xf]
    %v648 = vld [vmem:[%s644 + $0xc] sm:$0xf]
    %v649 = vld [vmem:[%s644 + $0x10] sm:$0xf]
    %v650 = vld [vmem:[%s644 + $0x14] sm:$0xf]
    %v651 = vld [vmem:[%s644 + $0x18] sm:$0xf]
    %v652 = vld [vmem:[%s644 + $0x1c] sm:$0xf]
    %v653 = vld [vmem:[%s644 + $0x20] sm:$0xf]
    %v654 = vld [vmem:[%s644 + $0x24] sm:$0xf]
    %v655 = vld [vmem:[%s644 + $0x28] sm:$0xf]
    %v656 = vld [vmem:[%s644 + $0x2c] sm:$0xf]
    %v657 = vld [vmem:[%s644 + $0x30] sm:$0xf]
    %v658 = vld [vmem:[%s644 + $0x34] sm:$0xf]
    %v659 = vld [vmem:[%s644 + $0x38] sm:$0xf]
    %v660 = vld [vmem:[%s644 + $0x3c] sm:$0xf]
    %v661 = vld [vmem:[%s3 + $0x10] sm:$0xf]
    %v662 = vld [vmem:[%s3 + $0x14] sm:$0xf]
    %v663 = vld [vmem:[%s3 + $0x18] sm:$0xf]
    %v664 = vld [vmem:[%s3 + $0x1c] sm:$0xf]
    %v681 = vunpack.c.l.b16 %v645
    %v682 = vunpack.c.l.b16 %v646
    %v683 = vunpack.c.l.b16 %v647
    %v684 = vunpack.c.l.b16 %v648
    %v685 = vunpack.c.l.b16 %v649
    %v686 = vunpack.c.l.b16 %v650
    %v687 = vunpack.c.l.b16 %v651
    %v688 = vunpack.c.l.b16 %v652
    %v689 = vunpack.c.l.b16 %v653
    %v690 = vunpack.c.l.b16 %v654
    %v691 = vunpack.c.l.b16 %v655
    %v692 = vunpack.c.l.b16 %v656
    %v693 = vunpack.c.l.b16 %v657
    %v694 = vunpack.c.l.b16 %v658
    %v695 = vunpack.c.l.b16 %v659
    %v696 = vunpack.c.l.b16 %v660
    %v697 = vpack.c.b16 %v682, %v681
    %v698 = vpack.c.b16 %v684, %v683
    %v699 = vpack.c.b16 %v686, %v685
    %v700 = vpack.c.b16 %v688, %v687
    %v701 = vpack.c.b16 %v690, %v689
    %v702 = vpack.c.b16 %v692, %v691
    %v703 = vpack.c.b16 %v694, %v693
    %v704 = vpack.c.b16 %v696, %v695
    %v709 = vunpack.c.l.b16 %v661
    %v710 = vunpack.c.l.b16 %v662
    %v711 = vunpack.c.l.b16 %v663
    %v712 = vunpack.c.l.b16 %v664
    %v713 = vpack.c.b16 %v710, %v709
    %v714 = vpack.c.b16 %v712, %v711
    %vm717 = vcmask 261120
    %v719 = vsel %vm717, %v697, 0
    %v722 = vsel %vm717, %v698, 0
    %v725 = vsel %vm717, %v699, 0
    %v728 = vsel %vm717, %v700, 0
    %v731 = vsel %vm717, %v701, 0
    %v734 = vsel %vm717, %v702, 0
    %v737 = vsel %vm717, %v703, 0
    %v740 = vsel %vm717, %v704, 0
    %742 = vmatprep.subr.bf16.mxu0 0
    %743 = vmatpush1.bf16.msra.mxu0 0
    %744 = vmatprep.subr.bf16.mxu0 0
    %745 = vmatpush1.bf16.msra.mxu0 0
    %746 = vmatprep.subr.bf16.mxu0 0
    %747 = vmatpush1.bf16.msra.mxu0 0
    %748 = vmatprep.subr.bf16.mxu0 0
    %749 = vmatpush1.bf16.msra.mxu0 0
    %750 = vmatprep.subr.bf16.mxu0 0
    %751 = vmatpush1.bf16.msra.mxu0 0
    %752 = vmatprep.subr.bf16.mxu0 0
    %753 = vmatpush1.bf16.msra.mxu0 0
    %754 = vmatprep.subr.bf16.mxu0 0
    %755 = vmatpush1.bf16.msra.mxu0 %v714
    %756 = vmatprep.subr.bf16.mxu0 0
    %757 = vmatpush1.bf16.msra.mxu0 %v713
    %758 = vmatprep.subr.bf16.mxu0 0
    %759 = vmatpush2.bf16.msra.mxu0 0
    %760 = vmatprep.subr.bf16.mxu0 0
    %761 = vmatpush2.bf16.msra.mxu0 0
    %762 = vmatprep.subr.bf16.mxu0 0
    %763 = vmatpush2.bf16.msra.mxu0 0
    %764 = vmatprep.subr.bf16.mxu0 0
    %765 = vmatpush2.bf16.msra.mxu0 0
    %766 = vmatprep.subr.bf16.mxu0 0
    %767 = vmatpush2.bf16.msra.mxu0 0
    %768 = vmatprep.subr.bf16.mxu0 0
    %769 = vmatpush2.bf16.msra.mxu0 0
    %770 = vmatprep.subr.bf16.mxu0 0
    %771 = vmatpush2.bf16.msra.mxu0 0
    %772 = vmatprep.subr.bf16.mxu0 0
    %773 = vmatpush2.bf16.msra.mxu0 0
    %774 = vmatprep.mubr.bf16.mxu0 0
    %775 = vmatmul.mubr.bf16.gmra.mxu0 %v719
    %v776 = vpop.f32.mrf.mxu0
    %v777 = vadd.f32 0.0, %v776
    %v778 = vpop.f32.mrf.mxu0
    %v779 = vpop.f32.mrf.mxu0
    %v780 = vadd.f32 0.0, %v779
    %v781 = vpop.f32.mrf.mxu0
    %782 = vmatprep.mubr.bf16.mxu0 0
    %783 = vmatmul.mubr.bf16.gmra.mxu0 %v722
    %v784 = vpop.f32.mrf.mxu0
    %v785 = vadd.f32 0.0, %v784
    %v786 = vpop.f32.mrf.mxu0
    %v787 = vpop.f32.mrf.mxu0
    %v788 = vadd.f32 0.0, %v787
    %v789 = vpop.f32.mrf.mxu0
    %790 = vmatprep.mubr.bf16.mxu0 0
    %791 = vmatmul.mubr.bf16.gmra.mxu0 %v725
    %v792 = vpop.f32.mrf.mxu0
    %v793 = vadd.f32 0.0, %v792
    %v794 = vpop.f32.mrf.mxu0
    %v795 = vpop.f32.mrf.mxu0
    %v796 = vadd.f32 0.0, %v795
    %v797 = vpop.f32.mrf.mxu0
    %798 = vmatprep.mubr.bf16.mxu0 0
    %799 = vmatmul.mubr.bf16.gmra.mxu0 %v728
    %v800 = vpop.f32.mrf.mxu0
    %v801 = vadd.f32 0.0, %v800
    %v802 = vpop.f32.mrf.mxu0
    %v803 = vpop.f32.mrf.mxu0
    %v804 = vadd.f32 0.0, %v803
    %v805 = vpop.f32.mrf.mxu0
    %806 = vmatprep.mubr.bf16.mxu0 0
    %807 = vmatmul.mubr.bf16.gmra.mxu0 %v731
    %v808 = vpop.f32.mrf.mxu0
    %v809 = vadd.f32 0.0, %v808
    %v810 = vpop.f32.mrf.mxu0
    %v811 = vpop.f32.mrf.mxu0
    %v812 = vadd.f32 0.0, %v811
    %v813 = vpop.f32.mrf.mxu0
    %814 = vmatprep.mubr.bf16.mxu0 0
    %815 = vmatmul.mubr.bf16.gmra.mxu0 %v734
    %v816 = vpop.f32.mrf.mxu0
    %v817 = vadd.f32 0.0, %v816
    %v818 = vpop.f32.mrf.mxu0
    %v819 = vpop.f32.mrf.mxu0
    %v820 = vadd.f32 0.0, %v819
    %v821 = vpop.f32.mrf.mxu0
    %822 = vmatprep.mubr.bf16.mxu0 0
    %823 = vmatmul.mubr.bf16.gmra.mxu0 %v737
    %v824 = vpop.f32.mrf.mxu0
    %v825 = vadd.f32 0.0, %v824
    %v826 = vpop.f32.mrf.mxu0
    %v827 = vpop.f32.mrf.mxu0
    %v828 = vadd.f32 0.0, %v827
    %v829 = vpop.f32.mrf.mxu0
    %830 = vmatprep.mubr.bf16.mxu0 0
    %831 = vmatmul.mubr.bf16.gmra.mxu0 %v740
    %v832 = vpop.f32.mrf.mxu0
    %v833 = vadd.f32 0.0, %v832
    %v834 = vpop.f32.mrf.mxu0
    %v835 = vpop.f32.mrf.mxu0
    %v836 = vadd.f32 0.0, %v835
    %v837 = vpop.f32.mrf.mxu0
    %838 = vdwg.mxu0
    %v855 = vunpack.c.l.b16 %v620
    %v856 = vunpack.c.l.b16 %v621
    %v857 = vunpack.c.l.b16 %v622
    %v858 = vunpack.c.l.b16 %v623
    %v859 = vunpack.c.l.b16 %v624
    %v860 = vunpack.c.l.b16 %v625
    %v861 = vunpack.c.l.b16 %v626
    %v862 = vunpack.c.l.b16 %v627
    %v863 = vunpack.c.l.b16 %v628
    %v864 = vunpack.c.l.b16 %v629
    %v865 = vunpack.c.l.b16 %v630
    %v866 = vunpack.c.l.b16 %v631
    %v867 = vunpack.c.l.b16 %v632
    %v868 = vunpack.c.l.b16 %v633
    %v869 = vunpack.c.l.b16 %v634
    %v870 = vunpack.c.l.b16 %v635
    %v871 = vpack.c.b16 %v856, %v855
    %v872 = vpack.c.b16 %v858, %v857
    %v873 = vpack.c.b16 %v860, %v859
    %v874 = vpack.c.b16 %v862, %v861
    %v875 = vpack.c.b16 %v864, %v863
    %v876 = vpack.c.b16 %v866, %v865
    %v877 = vpack.c.b16 %v868, %v867
    %v878 = vpack.c.b16 %v870, %v869
    %v883 = vunpack.c.l.b16 %v636
    %v884 = vunpack.c.l.b16 %v637
    %v885 = vunpack.c.l.b16 %v638
    %v886 = vunpack.c.l.b16 %v639
    %v887 = vpack.c.b16 %v884, %v883
    %v888 = vpack.c.b16 %v886, %v885
    %v892 = vsel %vm717, %v871, 0
    %v895 = vsel %vm717, %v872, 0
    %v898 = vsel %vm717, %v873, 0
    %v901 = vsel %vm717, %v874, 0
    %v904 = vsel %vm717, %v875, 0
    %v907 = vsel %vm717, %v876, 0
    %v910 = vsel %vm717, %v877, 0
    %v913 = vsel %vm717, %v878, 0
    %915 = vmatprep.subr.bf16.mxu0 0
    %916 = vmatpush1.bf16.msra.mxu0 0
    %917 = vmatprep.subr.bf16.mxu0 0
    %918 = vmatpush1.bf16.msra.mxu0 0
    %919 = vmatprep.subr.bf16.mxu0 0
    %920 = vmatpush1.bf16.msra.mxu0 0
    %921 = vmatprep.subr.bf16.mxu0 0
    %922 = vmatpush1.bf16.msra.mxu0 0
    %923 = vmatprep.subr.bf16.mxu0 0
    %924 = vmatpush1.bf16.msra.mxu0 0
    %925 = vmatprep.subr.bf16.mxu0 0
    %926 = vmatpush1.bf16.msra.mxu0 0
    %927 = vmatprep.subr.bf16.mxu0 0
    %928 = vmatpush1.bf16.msra.mxu0 %v888
    %929 = vmatprep.subr.bf16.mxu0 0
    %930 = vmatpush1.bf16.msra.mxu0 %v887
    %931 = vmatprep.subr.bf16.mxu0 0
    %932 = vmatpush2.bf16.msra.mxu0 0
    %933 = vmatprep.subr.bf16.mxu0 0
    %934 = vmatpush2.bf16.msra.mxu0 0
    %935 = vmatprep.subr.bf16.mxu0 0
    %936 = vmatpush2.bf16.msra.mxu0 0
    %937 = vmatprep.subr.bf16.mxu0 0
    %938 = vmatpush2.bf16.msra.mxu0 0
    %939 = vmatprep.subr.bf16.mxu0 0
    %940 = vmatpush2.bf16.msra.mxu0 0
    %941 = vmatprep.subr.bf16.mxu0 0
    %942 = vmatpush2.bf16.msra.mxu0 0
    %943 = vmatprep.subr.bf16.mxu0 0
    %944 = vmatpush2.bf16.msra.mxu0 0
    %945 = vmatprep.subr.bf16.mxu0 0
    %946 = vmatpush2.bf16.msra.mxu0 0
    %947 = vmatprep.mubr.bf16.mxu0 0
    %948 = vmatmul.mubr.bf16.gmra.mxu0 %v892
    %v949 = vpop.f32.mrf.mxu0
    %v950 = vadd.f32 %v777, %v949
    %v951 = vpop.f32.mrf.mxu0
    %v952 = vpop.f32.mrf.mxu0
    %v953 = vadd.f32 %v780, %v952
    %v954 = vpop.f32.mrf.mxu0
    %955 = vmatprep.mubr.bf16.mxu0 0
    %956 = vmatmul.mubr.bf16.gmra.mxu0 %v895
    %v957 = vpop.f32.mrf.mxu0
    %v958 = vadd.f32 %v785, %v957
    %v959 = vpop.f32.mrf.mxu0
    %v960 = vpop.f32.mrf.mxu0
    %v961 = vadd.f32 %v788, %v960
    %v962 = vpop.f32.mrf.mxu0
    %963 = vmatprep.mubr.bf16.mxu0 0
    %964 = vmatmul.mubr.bf16.gmra.mxu0 %v898
    %v965 = vpop.f32.mrf.mxu0
    %v966 = vadd.f32 %v793, %v965
    %v967 = vpop.f32.mrf.mxu0
    %v968 = vpop.f32.mrf.mxu0
    %v969 = vadd.f32 %v796, %v968
    %v970 = vpop.f32.mrf.mxu0
    %971 = vmatprep.mubr.bf16.mxu0 0
    %972 = vmatmul.mubr.bf16.gmra.mxu0 %v901
    %v973 = vpop.f32.mrf.mxu0
    %v974 = vadd.f32 %v801, %v973
    %v975 = vpop.f32.mrf.mxu0
    %v976 = vpop.f32.mrf.mxu0
    %v977 = vadd.f32 %v804, %v976
    %v978 = vpop.f32.mrf.mxu0
    %979 = vmatprep.mubr.bf16.mxu0 0
    %980 = vmatmul.mubr.bf16.gmra.mxu0 %v904
    %v981 = vpop.f32.mrf.mxu0
    %v982 = vadd.f32 %v809, %v981
    %v983 = vpop.f32.mrf.mxu0
    %v984 = vpop.f32.mrf.mxu0
    %v985 = vadd.f32 %v812, %v984
    %v986 = vpop.f32.mrf.mxu0
    %987 = vmatprep.mubr.bf16.mxu0 0
    %988 = vmatmul.mubr.bf16.gmra.mxu0 %v907
    %v989 = vpop.f32.mrf.mxu0
    %v990 = vadd.f32 %v817, %v989
    %v991 = vpop.f32.mrf.mxu0
    %v992 = vpop.f32.mrf.mxu0
    %v993 = vadd.f32 %v820, %v992
    %v994 = vpop.f32.mrf.mxu0
    %995 = vmatprep.mubr.bf16.mxu0 0
    %996 = vmatmul.mubr.bf16.gmra.mxu0 %v910
    %v997 = vpop.f32.mrf.mxu0
    %v998 = vadd.f32 %v825, %v997
    %v999 = vpop.f32.mrf.mxu0
    %v1000 = vpop.f32.mrf.mxu0
    %v1001 = vadd.f32 %v828, %v1000
    %v1002 = vpop.f32.mrf.mxu0
    %1003 = vmatprep.mubr.bf16.mxu0 0
    %1004 = vmatmul.mubr.bf16.gmra.mxu0 %v913
    %v1005 = vpop.f32.mrf.mxu0
    %v1006 = vadd.f32 %v833, %v1005
    %v1007 = vpop.f32.mrf.mxu0
    %v1008 = vpop.f32.mrf.mxu0
    %v1009 = vadd.f32 %v836, %v1008
    %v1010 = vpop.f32.mrf.mxu0
    %1011 = vdwg.mxu0
    %s1012 = sadd.s32 %s614, 72
    %s1013 = sshra.s32 %s1012, 3
    %s1014 = sand.u32 %s1012, 7
    %s1015 = smul.addr %s1013, 4
    %s1016 = scalar_lea.vmem [#allocation2], %s1015
    %v1017 = vld [vmem:[%s1016] sm:$0xf]
    %v1018 = vld [vmem:[%s1016 + $0x4] sm:$0xf]
    %v1019 = vld [vmem:[%s1016 + $0x8] sm:$0xf]
    %v1020 = vld [vmem:[%s1016 + $0xc] sm:$0xf]
    %v1021 = vld [vmem:[%s1016 + $0x10] sm:$0xf]
    %v1022 = vld [vmem:[%s1016 + $0x14] sm:$0xf]
    %v1023 = vld [vmem:[%s1016 + $0x18] sm:$0xf]
    %v1024 = vld [vmem:[%s1016 + $0x1c] sm:$0xf]
    %v1025 = vld [vmem:[%s1016 + $0x20] sm:$0xf]
    %v1026 = vld [vmem:[%s1016 + $0x24] sm:$0xf]
    %v1027 = vld [vmem:[%s1016 + $0x28] sm:$0xf]
    %v1028 = vld [vmem:[%s1016 + $0x2c] sm:$0xf]
    %v1029 = vld [vmem:[%s1016 + $0x30] sm:$0xf]
    %v1030 = vld [vmem:[%s1016 + $0x34] sm:$0xf]
    %v1031 = vld [vmem:[%s1016 + $0x38] sm:$0xf]
    %v1032 = vld [vmem:[%s1016 + $0x3c] sm:$0xf]
    %v1033 = vld [vmem:[%s3 + $0x20] sm:$0xf]
    %v1034 = vld [vmem:[%s3 + $0x24] sm:$0xf]
    %v1035 = vld [vmem:[%s3 + $0x28] sm:$0xf]
    %v1036 = vld [vmem:[%s3 + $0x2c] sm:$0xf]
    %v1053 = vunpack.c.l.b16 %v1017
    %v1054 = vunpack.c.l.b16 %v1018
    %v1055 = vunpack.c.l.b16 %v1019
    %v1056 = vunpack.c.l.b16 %v1020
    %v1057 = vunpack.c.l.b16 %v1021
    %v1058 = vunpack.c.l.b16 %v1022
    %v1059 = vunpack.c.l.b16 %v1023
    %v1060 = vunpack.c.l.b16 %v1024
    %v1061 = vunpack.c.l.b16 %v1025
    %v1062 = vunpack.c.l.b16 %v1026
    %v1063 = vunpack.c.l.b16 %v1027
    %v1064 = vunpack.c.l.b16 %v1028
    %v1065 = vunpack.c.l.b16 %v1029
    %v1066 = vunpack.c.l.b16 %v1030
    %v1067 = vunpack.c.l.b16 %v1031
    %v1068 = vunpack.c.l.b16 %v1032
    %v1069 = vpack.c.b16 %v1054, %v1053
    %v1070 = vpack.c.b16 %v1056, %v1055
    %v1071 = vpack.c.b16 %v1058, %v1057
    %v1072 = vpack.c.b16 %v1060, %v1059
    %v1073 = vpack.c.b16 %v1062, %v1061
    %v1074 = vpack.c.b16 %v1064, %v1063
    %v1075 = vpack.c.b16 %v1066, %v1065
    %v1076 = vpack.c.b16 %v1068, %v1067
    %v1081 = vunpack.c.l.b16 %v1033
    %v1082 = vunpack.c.l.b16 %v1034
    %v1083 = vunpack.c.l.b16 %v1035
    %v1084 = vunpack.c.l.b16 %v1036
    %v1085 = vpack.c.b16 %v1082, %v1081
    %v1086 = vpack.c.b16 %v1084, %v1083
    %v1090 = vsel %vm717, %v1069, 0
    %v1093 = vsel %vm717, %v1070, 0
    %v1096 = vsel %vm717, %v1071, 0
    %v1099 = vsel %vm717, %v1072, 0
    %v1102 = vsel %vm717, %v1073, 0
    %v1105 = vsel %vm717, %v1074, 0
    %v1108 = vsel %vm717, %v1075, 0
    %v1111 = vsel %vm717, %v1076, 0
    %1113 = vmatprep.subr.bf16.mxu0 0
    %1114 = vmatpush1.bf16.msra.mxu0 0
    %1115 = vmatprep.subr.bf16.mxu0 0
    %1116 = vmatpush1.bf16.msra.mxu0 0
    %1117 = vmatprep.subr.bf16.mxu0 0
    %1118 = vmatpush1.bf16.msra.mxu0 0
    %1119 = vmatprep.subr.bf16.mxu0 0
    %1120 = vmatpush1.bf16.msra.mxu0 0
    %1121 = vmatprep.subr.bf16.mxu0 0
    %1122 = vmatpush1.bf16.msra.mxu0 0
    %1123 = vmatprep.subr.bf16.mxu0 0
    %1124 = vmatpush1.bf16.msra.mxu0 0
    %1125 = vmatprep.subr.bf16.mxu0 0
    %1126 = vmatpush1.bf16.msra.mxu0 %v1086
    %1127 = vmatprep.subr.bf16.mxu0 0
    %1128 = vmatpush1.bf16.msra.mxu0 %v1085
    %1129 = vmatprep.subr.bf16.mxu0 0
    %1130 = vmatpush2.bf16.msra.mxu0 0
    %1131 = vmatprep.subr.bf16.mxu0 0
    %1132 = vmatpush2.bf16.msra.mxu0 0
    %1133 = vmatprep.subr.bf16.mxu0 0
    %1134 = vmatpush2.bf16.msra.mxu0 0
    %1135 = vmatprep.subr.bf16.mxu0 0
    %1136 = vmatpush2.bf16.msra.mxu0 0
    %1137 = vmatprep.subr.bf16.mxu0 0
    %1138 = vmatpush2.bf16.msra.mxu0 0
    %1139 = vmatprep.subr.bf16.mxu0 0
    %1140 = vmatpush2.bf16.msra.mxu0 0
    %1141 = vmatprep.subr.bf16.mxu0 0
    %1142 = vmatpush2.bf16.msra.mxu0 0
    %1143 = vmatprep.subr.bf16.mxu0 0
    %1144 = vmatpush2.bf16.msra.mxu0 0
    %1145 = vmatprep.mubr.bf16.mxu0 0
    %1146 = vmatmul.mubr.bf16.gmra.mxu0 %v1090
    %v1147 = vpop.f32.mrf.mxu0
    %v1148 = vadd.f32 0.0, %v1147
    %v1149 = vpop.f32.mrf.mxu0
    %v1150 = vpop.f32.mrf.mxu0
    %v1151 = vadd.f32 0.0, %v1150
    %v1152 = vpop.f32.mrf.mxu0
    %1153 = vmatprep.mubr.bf16.mxu0 0
    %1154 = vmatmul.mubr.bf16.gmra.mxu0 %v1093
    %v1155 = vpop.f32.mrf.mxu0
    %v1156 = vadd.f32 0.0, %v1155
    %v1157 = vpop.f32.mrf.mxu0
    %v1158 = vpop.f32.mrf.mxu0
    %v1159 = vadd.f32 0.0, %v1158
    %v1160 = vpop.f32.mrf.mxu0
    %1161 = vmatprep.mubr.bf16.mxu0 0
    %1162 = vmatmul.mubr.bf16.gmra.mxu0 %v1096
    %v1163 = vpop.f32.mrf.mxu0
    %v1164 = vadd.f32 0.0, %v1163
    %v1165 = vpop.f32.mrf.mxu0
    %v1166 = vpop.f32.mrf.mxu0
    %v1167 = vadd.f32 0.0, %v1166
    %v1168 = vpop.f32.mrf.mxu0
    %1169 = vmatprep.mubr.bf16.mxu0 0
    %1170 = vmatmul.mubr.bf16.gmra.mxu0 %v1099
    %v1171 = vpop.f32.mrf.mxu0
    %v1172 = vadd.f32 0.0, %v1171
    %v1173 = vpop.f32.mrf.mxu0
    %v1174 = vpop.f32.mrf.mxu0
    %v1175 = vadd.f32 0.0, %v1174
    %v1176 = vpop.f32.mrf.mxu0
    %1177 = vmatprep.mubr.bf16.mxu0 0
    %1178 = vmatmul.mubr.bf16.gmra.mxu0 %v1102
    %v1179 = vpop.f32.mrf.mxu0
    %v1180 = vadd.f32 0.0, %v1179
    %v1181 = vpop.f32.mrf.mxu0
    %v1182 = vpop.f32.mrf.mxu0
    %v1183 = vadd.f32 0.0, %v1182
    %v1184 = vpop.f32.mrf.mxu0
    %1185 = vmatprep.mubr.bf16.mxu0 0
    %1186 = vmatmul.mubr.bf16.gmra.mxu0 %v1105
    %v1187 = vpop.f32.mrf.mxu0
    %v1188 = vadd.f32 0.0, %v1187
    %v1189 = vpop.f32.mrf.mxu0
    %v1190 = vpop.f32.mrf.mxu0
    %v1191 = vadd.f32 0.0, %v1190
    %v1192 = vpop.f32.mrf.mxu0
    %1193 = vmatprep.mubr.bf16.mxu0 0
    %1194 = vmatmul.mubr.bf16.gmra.mxu0 %v1108
    %v1195 = vpop.f32.mrf.mxu0
    %v1196 = vadd.f32 0.0, %v1195
    %v1197 = vpop.f32.mrf.mxu0
    %v1198 = vpop.f32.mrf.mxu0
    %v1199 = vadd.f32 0.0, %v1198
    %v1200 = vpop.f32.mrf.mxu0
    %1201 = vmatprep.mubr.bf16.mxu0 0
    %1202 = vmatmul.mubr.bf16.gmra.mxu0 %v1111
    %v1203 = vpop.f32.mrf.mxu0
    %v1204 = vadd.f32 0.0, %v1203
    %v1205 = vpop.f32.mrf.mxu0
    %v1206 = vpop.f32.mrf.mxu0
    %v1207 = vadd.f32 0.0, %v1206
    %v1208 = vpop.f32.mrf.mxu0
    %1209 = vdwg.mxu0
    %v1210 = vadd.f32 %v950, %v1148
    %v1211 = vadd.f32 %v953, %v1151
    %v1212 = vadd.f32 %v958, %v1156
    %v1213 = vadd.f32 %v961, %v1159
    %v1214 = vadd.f32 %v966, %v1164
    %v1215 = vadd.f32 %v969, %v1167
    %v1216 = vadd.f32 %v974, %v1172
    %v1217 = vadd.f32 %v977, %v1175
    %v1218 = vadd.f32 %v982, %v1180
    %v1219 = vadd.f32 %v985, %v1183
    %v1220 = vadd.f32 %v990, %v1188
    %v1221 = vadd.f32 %v993, %v1191
    %v1222 = vadd.f32 %v998, %v1196
    %v1223 = vadd.f32 %v1001, %v1199
    %v1224 = vadd.f32 %v1006, %v1204
    %v1225 = vadd.f32 %v1009, %v1207
    %s1226 = sadd.s32 %s614, 248
    %s1227 = sshra.s32 %s1226, 3
    %s1228 = sand.u32 %s1226, 7
    %s1229 = smul.addr %s1227, 4
    %s1230 = scalar_lea.vmem [#allocation2], %s1229
    %v1231 = vld [vmem:[%s1230] sm:$0xf]
    %v1232 = vld [vmem:[%s1230 + $0x4] sm:$0xf]
    %v1233 = vld [vmem:[%s1230 + $0x8] sm:$0xf]
    %v1234 = vld [vmem:[%s1230 + $0xc] sm:$0xf]
    %v1235 = vld [vmem:[%s1230 + $0x10] sm:$0xf]
    %v1236 = vld [vmem:[%s1230 + $0x14] sm:$0xf]
    %v1237 = vld [vmem:[%s1230 + $0x18] sm:$0xf]
    %v1238 = vld [vmem:[%s1230 + $0x1c] sm:$0xf]
    %v1239 = vld [vmem:[%s1230 + $0x20] sm:$0xf]
    %v1240 = vld [vmem:[%s1230 + $0x24] sm:$0xf]
    %v1241 = vld [vmem:[%s1230 + $0x28] sm:$0xf]
    %v1242 = vld [vmem:[%s1230 + $0x2c] sm:$0xf]
    %v1243 = vld [vmem:[%s1230 + $0x30] sm:$0xf]
    %v1244 = vld [vmem:[%s1230 + $0x34] sm:$0xf]
    %v1245 = vld [vmem:[%s1230 + $0x38] sm:$0xf]
    %v1246 = vld [vmem:[%s1230 + $0x3c] sm:$0xf]
    %v1247 = vld [vmem:[%s3 + $0x30] sm:$0xf]
    %v1248 = vld [vmem:[%s3 + $0x34] sm:$0xf]
    %v1249 = vld [vmem:[%s3 + $0x38] sm:$0xf]
    %v1250 = vld [vmem:[%s3 + $0x3c] sm:$0xf]
    %v1267 = vunpack.c.l.b16 %v1231
    %v1268 = vunpack.c.l.b16 %v1232
    %v1269 = vunpack.c.l.b16 %v1233
    %v1270 = vunpack.c.l.b16 %v1234
    %v1271 = vunpack.c.l.b16 %v1235
    %v1272 = vunpack.c.l.b16 %v1236
    %v1273 = vunpack.c.l.b16 %v1237
    %v1274 = vunpack.c.l.b16 %v1238
    %v1275 = vunpack.c.l.b16 %v1239
    %v1276 = vunpack.c.l.b16 %v1240
    %v1277 = vunpack.c.l.b16 %v1241
    %v1278 = vunpack.c.l.b16 %v1242
    %v1279 = vunpack.c.l.b16 %v1243
    %v1280 = vunpack.c.l.b16 %v1244
    %v1281 = vunpack.c.l.b16 %v1245
    %v1282 = vunpack.c.l.b16 %v1246
    %v1283 = vpack.c.b16 %v1268, %v1267
    %v1284 = vpack.c.b16 %v1270, %v1269
    %v1285 = vpack.c.b16 %v1272, %v1271
    %v1286 = vpack.c.b16 %v1274, %v1273
    %v1287 = vpack.c.b16 %v1276, %v1275
    %v1288 = vpack.c.b16 %v1278, %v1277
    %v1289 = vpack.c.b16 %v1280, %v1279
    %v1290 = vpack.c.b16 %v1282, %v1281
    %v1295 = vunpack.c.l.b16 %v1247
    %v1296 = vunpack.c.l.b16 %v1248
    %v1297 = vunpack.c.l.b16 %v1249
    %v1298 = vunpack.c.l.b16 %v1250
    %v1299 = vpack.c.b16 %v1296, %v1295
    %v1300 = vpack.c.b16 %v1298, %v1297
    %v1304 = vsel %vm717, %v1283, 0
    %v1307 = vsel %vm717, %v1284, 0
    %v1310 = vsel %vm717, %v1285, 0
    %v1313 = vsel %vm717, %v1286, 0
    %v1316 = vsel %vm717, %v1287, 0
    %v1319 = vsel %vm717, %v1288, 0
    %v1322 = vsel %vm717, %v1289, 0
    %v1325 = vsel %vm717, %v1290, 0
    %1327 = vmatprep.subr.bf16.mxu0 0
    %1328 = vmatpush1.bf16.msra.mxu0 0
    %1329 = vmatprep.subr.bf16.mxu0 0
    %1330 = vmatpush1.bf16.msra.mxu0 0
    %1331 = vmatprep.subr.bf16.mxu0 0
    %1332 = vmatpush1.bf16.msra.mxu0 0
    %1333 = vmatprep.subr.bf16.mxu0 0
    %1334 = vmatpush1.bf16.msra.mxu0 0
    %1335 = vmatprep.subr.bf16.mxu0 0
    %1336 = vmatpush1.bf16.msra.mxu0 0
    %1337 = vmatprep.subr.bf16.mxu0 0
    %1338 = vmatpush1.bf16.msra.mxu0 0
    %1339 = vmatprep.subr.bf16.mxu0 0
    %1340 = vmatpush1.bf16.msra.mxu0 %v1300
    %1341 = vmatprep.subr.bf16.mxu0 0
    %1342 = vmatpush1.bf16.msra.mxu0 %v1299
    %1343 = vmatprep.subr.bf16.mxu0 0
    %1344 = vmatpush2.bf16.msra.mxu0 0
    %1345 = vmatprep.subr.bf16.mxu0 0
    %1346 = vmatpush2.bf16.msra.mxu0 0
    %1347 = vmatprep.subr.bf16.mxu0 0
    %1348 = vmatpush2.bf16.msra.mxu0 0
    %1349 = vmatprep.subr.bf16.mxu0 0
    %1350 = vmatpush2.bf16.msra.mxu0 0
    %1351 = vmatprep.subr.bf16.mxu0 0
    %1352 = vmatpush2.bf16.msra.mxu0 0
    %1353 = vmatprep.subr.bf16.mxu0 0
    %1354 = vmatpush2.bf16.msra.mxu0 0
    %1355 = vmatprep.subr.bf16.mxu0 0
    %1356 = vmatpush2.bf16.msra.mxu0 0
    %1357 = vmatprep.subr.bf16.mxu0 0
    %1358 = vmatpush2.bf16.msra.mxu0 0
    %1359 = vmatprep.mubr.bf16.mxu0 0
    %1360 = vmatmul.mubr.bf16.gmra.mxu0 %v1304
    %v1361 = vpop.f32.mrf.mxu0
    %v1362 = vadd.f32 0.0, %v1361
    %v1363 = vpop.f32.mrf.mxu0
    %v1364 = vpop.f32.mrf.mxu0
    %v1365 = vadd.f32 0.0, %v1364
    %v1366 = vpop.f32.mrf.mxu0
    %1367 = vmatprep.mubr.bf16.mxu0 0
    %1368 = vmatmul.mubr.bf16.gmra.mxu0 %v1307
    %v1369 = vpop.f32.mrf.mxu0
    %v1370 = vadd.f32 0.0, %v1369
    %v1371 = vpop.f32.mrf.mxu0
    %v1372 = vpop.f32.mrf.mxu0
    %v1373 = vadd.f32 0.0, %v1372
    %v1374 = vpop.f32.mrf.mxu0
    %1375 = vmatprep.mubr.bf16.mxu0 0
    %1376 = vmatmul.mubr.bf16.gmra.mxu0 %v1310
    %v1377 = vpop.f32.mrf.mxu0
    %v1378 = vadd.f32 0.0, %v1377
    %v1379 = vpop.f32.mrf.mxu0
    %v1380 = vpop.f32.mrf.mxu0
    %v1381 = vadd.f32 0.0, %v1380
    %v1382 = vpop.f32.mrf.mxu0
    %1383 = vmatprep.mubr.bf16.mxu0 0
    %1384 = vmatmul.mubr.bf16.gmra.mxu0 %v1313
    %v1385 = vpop.f32.mrf.mxu0
    %v1386 = vadd.f32 0.0, %v1385
    %v1387 = vpop.f32.mrf.mxu0
    %v1388 = vpop.f32.mrf.mxu0
    %v1389 = vadd.f32 0.0, %v1388
    %v1390 = vpop.f32.mrf.mxu0
    %1391 = vmatprep.mubr.bf16.mxu0 0
    %1392 = vmatmul.mubr.bf16.gmra.mxu0 %v1316
    %v1393 = vpop.f32.mrf.mxu0
    %v1394 = vadd.f32 0.0, %v1393
    %v1395 = vpop.f32.mrf.mxu0
    %v1396 = vpop.f32.mrf.mxu0
    %v1397 = vadd.f32 0.0, %v1396
    %v1398 = vpop.f32.mrf.mxu0
    %1399 = vmatprep.mubr.bf16.mxu0 0
    %1400 = vmatmul.mubr.bf16.gmra.mxu0 %v1319
    %v1401 = vpop.f32.mrf.mxu0
    %v1402 = vadd.f32 0.0, %v1401
    %v1403 = vpop.f32.mrf.mxu0
    %v1404 = vpop.f32.mrf.mxu0
    %v1405 = vadd.f32 0.0, %v1404
    %v1406 = vpop.f32.mrf.mxu0
    %1407 = vmatprep.mubr.bf16.mxu0 0
    %1408 = vmatmul.mubr.bf16.gmra.mxu0 %v1322
    %v1409 = vpop.f32.mrf.mxu0
    %v1410 = vadd.f32 0.0, %v1409
    %v1411 = vpop.f32.mrf.mxu0
    %v1412 = vpop.f32.mrf.mxu0
    %v1413 = vadd.f32 0.0, %v1412
    %v1414 = vpop.f32.mrf.mxu0
    %1415 = vmatprep.mubr.bf16.mxu0 0
    %1416 = vmatmul.mubr.bf16.gmra.mxu0 %v1325
    %v1417 = vpop.f32.mrf.mxu0
    %v1418 = vadd.f32 0.0, %v1417
    %v1419 = vpop.f32.mrf.mxu0
    %v1420 = vpop.f32.mrf.mxu0
    %v1421 = vadd.f32 0.0, %v1420
    %v1422 = vpop.f32.mrf.mxu0
    %1423 = vdwg.mxu0
    %v1424 = vadd.f32 %v1210, %v1362
    %v1425 = vadd.f32 %v1211, %v1365
    %v1426 = vadd.f32 %v1212, %v1370
    %v1427 = vadd.f32 %v1213, %v1373
    %v1428 = vadd.f32 %v1214, %v1378
    %v1429 = vadd.f32 %v1215, %v1381
    %v1430 = vadd.f32 %v1216, %v1386
    %v1431 = vadd.f32 %v1217, %v1389
    %v1432 = vadd.f32 %v1218, %v1394
    %v1433 = vadd.f32 %v1219, %v1397
    %v1434 = vadd.f32 %v1220, %v1402
    %v1435 = vadd.f32 %v1221, %v1405
    %v1436 = vadd.f32 %v1222, %v1410
    %v1437 = vadd.f32 %v1223, %v1413
    %v1438 = vadd.f32 %v1224, %v1418
    %v1439 = vadd.f32 %v1225, %v1421
    %s1440 = sadd.s32 %s614, 256
    %s1441 = sshra.s32 %s1440, 3
    %s1442 = sand.u32 %s1440, 7
    %s1443 = smul.addr %s1441, 4
    %s1444 = scalar_lea.vmem [#allocation2], %s1443
    %v1445 = vld [vmem:[%s1444] sm:$0xf]
    %v1446 = vld [vmem:[%s1444 + $0x4] sm:$0xf]
    %v1447 = vld [vmem:[%s1444 + $0x8] sm:$0xf]
    %v1448 = vld [vmem:[%s1444 + $0xc] sm:$0xf]
    %v1449 = vld [vmem:[%s1444 + $0x10] sm:$0xf]
    %v1450 = vld [vmem:[%s1444 + $0x14] sm:$0xf]
    %v1451 = vld [vmem:[%s1444 + $0x18] sm:$0xf]
    %v1452 = vld [vmem:[%s1444 + $0x1c] sm:$0xf]
    %v1453 = vld [vmem:[%s1444 + $0x20] sm:$0xf]
    %v1454 = vld [vmem:[%s1444 + $0x24] sm:$0xf]
    %v1455 = vld [vmem:[%s1444 + $0x28] sm:$0xf]
    %v1456 = vld [vmem:[%s1444 + $0x2c] sm:$0xf]
    %v1457 = vld [vmem:[%s1444 + $0x30] sm:$0xf]
    %v1458 = vld [vmem:[%s1444 + $0x34] sm:$0xf]
    %v1459 = vld [vmem:[%s1444 + $0x38] sm:$0xf]
    %v1460 = vld [vmem:[%s1444 + $0x3c] sm:$0xf]
    %v1461 = vld [vmem:[%s3 + $0x40] sm:$0xf]
    %v1462 = vld [vmem:[%s3 + $0x44] sm:$0xf]
    %v1463 = vld [vmem:[%s3 + $0x48] sm:$0xf]
    %v1464 = vld [vmem:[%s3 + $0x4c] sm:$0xf]
    %v1481 = vunpack.c.l.b16 %v1445
    %v1482 = vunpack.c.l.b16 %v1446
    %v1483 = vunpack.c.l.b16 %v1447
    %v1484 = vunpack.c.l.b16 %v1448
    %v1485 = vunpack.c.l.b16 %v1449
    %v1486 = vunpack.c.l.b16 %v1450
    %v1487 = vunpack.c.l.b16 %v1451
    %v1488 = vunpack.c.l.b16 %v1452
    %v1489 = vunpack.c.l.b16 %v1453
    %v1490 = vunpack.c.l.b16 %v1454
    %v1491 = vunpack.c.l.b16 %v1455
    %v1492 = vunpack.c.l.b16 %v1456
    %v1493 = vunpack.c.l.b16 %v1457
    %v1494 = vunpack.c.l.b16 %v1458
    %v1495 = vunpack.c.l.b16 %v1459
    %v1496 = vunpack.c.l.b16 %v1460
    %v1497 = vpack.c.b16 %v1482, %v1481
    %v1498 = vpack.c.b16 %v1484, %v1483
    %v1499 = vpack.c.b16 %v1486, %v1485
    %v1500 = vpack.c.b16 %v1488, %v1487
    %v1501 = vpack.c.b16 %v1490, %v1489
    %v1502 = vpack.c.b16 %v1492, %v1491
    %v1503 = vpack.c.b16 %v1494, %v1493
    %v1504 = vpack.c.b16 %v1496, %v1495
    %v1509 = vunpack.c.l.b16 %v1461
    %v1510 = vunpack.c.l.b16 %v1462
    %v1511 = vunpack.c.l.b16 %v1463
    %v1512 = vunpack.c.l.b16 %v1464
    %v1513 = vpack.c.b16 %v1510, %v1509
    %v1514 = vpack.c.b16 %v1512, %v1511
    %v1518 = vsel %vm717, %v1497, 0
    %v1521 = vsel %vm717, %v1498, 0
    %v1524 = vsel %vm717, %v1499, 0
    %v1527 = vsel %vm717, %v1500, 0
    %v1530 = vsel %vm717, %v1501, 0
    %v1533 = vsel %vm717, %v1502, 0
    %v1536 = vsel %vm717, %v1503, 0
    %v1539 = vsel %vm717, %v1504, 0
    %1541 = vmatprep.subr.bf16.mxu0 0
    %1542 = vmatpush1.bf16.msra.mxu0 0
    %1543 = vmatprep.subr.bf16.mxu0 0
    %1544 = vmatpush1.bf16.msra.mxu0 0
    %1545 = vmatprep.subr.bf16.mxu0 0
    %1546 = vmatpush1.bf16.msra.mxu0 0
    %1547 = vmatprep.subr.bf16.mxu0 0
    %1548 = vmatpush1.bf16.msra.mxu0 0
    %1549 = vmatprep.subr.bf16.mxu0 0
    %1550 = vmatpush1.bf16.msra.mxu0 0
    %1551 = vmatprep.subr.bf16.mxu0 0
    %1552 = vmatpush1.bf16.msra.mxu0 0
    %1553 = vmatprep.subr.bf16.mxu0 0
    %1554 = vmatpush1.bf16.msra.mxu0 %v1514
    %1555 = vmatprep.subr.bf16.mxu0 0
    %1556 = vmatpush1.bf16.msra.mxu0 %v1513
    %1557 = vmatprep.subr.bf16.mxu0 0
    %1558 = vmatpush2.bf16.msra.mxu0 0
    %1559 = vmatprep.subr.bf16.mxu0 0
    %1560 = vmatpush2.bf16.msra.mxu0 0
    %1561 = vmatprep.subr.bf16.mxu0 0
    %1562 = vmatpush2.bf16.msra.mxu0 0
    %1563 = vmatprep.subr.bf16.mxu0 0
    %1564 = vmatpush2.bf16.msra.mxu0 0
    %1565 = vmatprep.subr.bf16.mxu0 0
    %1566 = vmatpush2.bf16.msra.mxu0 0
    %1567 = vmatprep.subr.bf16.mxu0 0
    %1568 = vmatpush2.bf16.msra.mxu0 0
    %1569 = vmatprep.subr.bf16.mxu0 0
    %1570 = vmatpush2.bf16.msra.mxu0 0
    %1571 = vmatprep.subr.bf16.mxu0 0
    %1572 = vmatpush2.bf16.msra.mxu0 0
    %1573 = vmatprep.mubr.bf16.mxu0 0
    %1574 = vmatmul.mubr.bf16.gmra.mxu0 %v1518
    %v1575 = vpop.f32.mrf.mxu0
    %v1576 = vadd.f32 0.0, %v1575
    %v1577 = vpop.f32.mrf.mxu0
    %v1578 = vpop.f32.mrf.mxu0
    %v1579 = vadd.f32 0.0, %v1578
    %v1580 = vpop.f32.mrf.mxu0
    %1581 = vmatprep.mubr.bf16.mxu0 0
    %1582 = vmatmul.mubr.bf16.gmra.mxu0 %v1521
    %v1583 = vpop.f32.mrf.mxu0
    %v1584 = vadd.f32 0.0, %v1583
    %v1585 = vpop.f32.mrf.mxu0
    %v1586 = vpop.f32.mrf.mxu0
    %v1587 = vadd.f32 0.0, %v1586
    %v1588 = vpop.f32.mrf.mxu0
    %1589 = vmatprep.mubr.bf16.mxu0 0
    %1590 = vmatmul.mubr.bf16.gmra.mxu0 %v1524
    %v1591 = vpop.f32.mrf.mxu0
    %v1592 = vadd.f32 0.0, %v1591
    %v1593 = vpop.f32.mrf.mxu0
    %v1594 = vpop.f32.mrf.mxu0
    %v1595 = vadd.f32 0.0, %v1594
    %v1596 = vpop.f32.mrf.mxu0
    %1597 = vmatprep.mubr.bf16.mxu0 0
    %1598 = vmatmul.mubr.bf16.gmra.mxu0 %v1527
    %v1599 = vpop.f32.mrf.mxu0
    %v1600 = vadd.f32 0.0, %v1599
    %v1601 = vpop.f32.mrf.mxu0
    %v1602 = vpop.f32.mrf.mxu0
    %v1603 = vadd.f32 0.0, %v1602
    %v1604 = vpop.f32.mrf.mxu0
    %1605 = vmatprep.mubr.bf16.mxu0 0
    %1606 = vmatmul.mubr.bf16.gmra.mxu0 %v1530
    %v1607 = vpop.f32.mrf.mxu0
    %v1608 = vadd.f32 0.0, %v1607
    %v1609 = vpop.f32.mrf.mxu0
    %v1610 = vpop.f32.mrf.mxu0
    %v1611 = vadd.f32 0.0, %v1610
    %v1612 = vpop.f32.mrf.mxu0
    %1613 = vmatprep.mubr.bf16.mxu0 0
    %1614 = vmatmul.mubr.bf16.gmra.mxu0 %v1533
    %v1615 = vpop.f32.mrf.mxu0
    %v1616 = vadd.f32 0.0, %v1615
    %v1617 = vpop.f32.mrf.mxu0
    %v1618 = vpop.f32.mrf.mxu0
    %v1619 = vadd.f32 0.0, %v1618
    %v1620 = vpop.f32.mrf.mxu0
    %1621 = vmatprep.mubr.bf16.mxu0 0
    %1622 = vmatmul.mubr.bf16.gmra.mxu0 %v1536
    %v1623 = vpop.f32.mrf.mxu0
    %v1624 = vadd.f32 0.0, %v1623
    %v1625 = vpop.f32.mrf.mxu0
    %v1626 = vpop.f32.mrf.mxu0
    %v1627 = vadd.f32 0.0, %v1626
    %v1628 = vpop.f32.mrf.mxu0
    %1629 = vmatprep.mubr.bf16.mxu0 0
    %1630 = vmatmul.mubr.bf16.gmra.mxu0 %v1539
    %v1631 = vpop.f32.mrf.mxu0
    %v1632 = vadd.f32 0.0, %v1631
    %v1633 = vpop.f32.mrf.mxu0
    %v1634 = vpop.f32.mrf.mxu0
    %v1635 = vadd.f32 0.0, %v1634
    %v1636 = vpop.f32.mrf.mxu0
    %1637 = vdwg.mxu0
    %v1638 = vadd.f32 %v1424, %v1576
    %v1639 = vadd.f32 %v1425, %v1579
    %v1640 = vadd.f32 %v1426, %v1584
    %v1641 = vadd.f32 %v1427, %v1587
    %v1642 = vadd.f32 %v1428, %v1592
    %v1643 = vadd.f32 %v1429, %v1595
    %v1644 = vadd.f32 %v1430, %v1600
    %v1645 = vadd.f32 %v1431, %v1603
    %v1646 = vadd.f32 %v1432, %v1608
    %v1647 = vadd.f32 %v1433, %v1611
    %v1648 = vadd.f32 %v1434, %v1616
    %v1649 = vadd.f32 %v1435, %v1619
    %v1650 = vadd.f32 %v1436, %v1624
    %v1651 = vadd.f32 %v1437, %v1627
    %v1652 = vadd.f32 %v1438, %v1632
    %v1653 = vadd.f32 %v1439, %v1635
    %s1654 = sadd.s32 %s614, 264
    %s1655 = sshra.s32 %s1654, 3
    %s1656 = sand.u32 %s1654, 7
    %s1657 = smul.addr %s1655, 4
    %s1658 = scalar_lea.vmem [#allocation2], %s1657
    %v1659 = vld [vmem:[%s1658] sm:$0xf]
    %v1660 = vld [vmem:[%s1658 + $0x4] sm:$0xf]
    %v1661 = vld [vmem:[%s1658 + $0x8] sm:$0xf]
    %v1662 = vld [vmem:[%s1658 + $0xc] sm:$0xf]
    %v1663 = vld [vmem:[%s1658 + $0x10] sm:$0xf]
    %v1664 = vld [vmem:[%s1658 + $0x14] sm:$0xf]
    %v1665 = vld [vmem:[%s1658 + $0x18] sm:$0xf]
    %v1666 = vld [vmem:[%s1658 + $0x1c] sm:$0xf]
    %v1667 = vld [vmem:[%s1658 + $0x20] sm:$0xf]
    %v1668 = vld [vmem:[%s1658 + $0x24] sm:$0xf]
    %v1669 = vld [vmem:[%s1658 + $0x28] sm:$0xf]
    %v1670 = vld [vmem:[%s1658 + $0x2c] sm:$0xf]
    %v1671 = vld [vmem:[%s1658 + $0x30] sm:$0xf]
    %v1672 = vld [vmem:[%s1658 + $0x34] sm:$0xf]
    %v1673 = vld [vmem:[%s1658 + $0x38] sm:$0xf]
    %v1674 = vld [vmem:[%s1658 + $0x3c] sm:$0xf]
    %v1675 = vld [vmem:[%s3 + $0x50] sm:$0xf]
    %v1676 = vld [vmem:[%s3 + $0x54] sm:$0xf]
    %v1677 = vld [vmem:[%s3 + $0x58] sm:$0xf]
    %v1678 = vld [vmem:[%s3 + $0x5c] sm:$0xf]
    %v1695 = vunpack.c.l.b16 %v1659
    %v1696 = vunpack.c.l.b16 %v1660
    %v1697 = vunpack.c.l.b16 %v1661
    %v1698 = vunpack.c.l.b16 %v1662
    %v1699 = vunpack.c.l.b16 %v1663
    %v1700 = vunpack.c.l.b16 %v1664
    %v1701 = vunpack.c.l.b16 %v1665
    %v1702 = vunpack.c.l.b16 %v1666
    %v1703 = vunpack.c.l.b16 %v1667
    %v1704 = vunpack.c.l.b16 %v1668
    %v1705 = vunpack.c.l.b16 %v1669
    %v1706 = vunpack.c.l.b16 %v1670
    %v1707 = vunpack.c.l.b16 %v1671
    %v1708 = vunpack.c.l.b16 %v1672
    %v1709 = vunpack.c.l.b16 %v1673
    %v1710 = vunpack.c.l.b16 %v1674
    %v1711 = vpack.c.b16 %v1696, %v1695
    %v1712 = vpack.c.b16 %v1698, %v1697
    %v1713 = vpack.c.b16 %v1700, %v1699
    %v1714 = vpack.c.b16 %v1702, %v1701
    %v1715 = vpack.c.b16 %v1704, %v1703
    %v1716 = vpack.c.b16 %v1706, %v1705
    %v1717 = vpack.c.b16 %v1708, %v1707
    %v1718 = vpack.c.b16 %v1710, %v1709
    %v1723 = vunpack.c.l.b16 %v1675
    %v1724 = vunpack.c.l.b16 %v1676
    %v1725 = vunpack.c.l.b16 %v1677
    %v1726 = vunpack.c.l.b16 %v1678
    %v1727 = vpack.c.b16 %v1724, %v1723
    %v1728 = vpack.c.b16 %v1726, %v1725
    %v1732 = vsel %vm717, %v1711, 0
    %v1735 = vsel %vm717, %v1712, 0
    %v1738 = vsel %vm717, %v1713, 0
    %v1741 = vsel %vm717, %v1714, 0
    %v1744 = vsel %vm717, %v1715, 0
    %v1747 = vsel %vm717, %v1716, 0
    %v1750 = vsel %vm717, %v1717, 0
    %v1753 = vsel %vm717, %v1718, 0
    %1755 = vmatprep.subr.bf16.mxu0 0
    %1756 = vmatpush1.bf16.msra.mxu0 0
    %1757 = vmatprep.subr.bf16.mxu0 0
    %1758 = vmatpush1.bf16.msra.mxu0 0
    %1759 = vmatprep.subr.bf16.mxu0 0
    %1760 = vmatpush1.bf16.msra.mxu0 0
    %1761 = vmatprep.subr.bf16.mxu0 0
    %1762 = vmatpush1.bf16.msra.mxu0 0
    %1763 = vmatprep.subr.bf16.mxu0 0
    %1764 = vmatpush1.bf16.msra.mxu0 0
    %1765 = vmatprep.subr.bf16.mxu0 0
    %1766 = vmatpush1.bf16.msra.mxu0 0
    %1767 = vmatprep.subr.bf16.mxu0 0
    %1768 = vmatpush1.bf16.msra.mxu0 %v1728
    %1769 = vmatprep.subr.bf16.mxu0 0
    %1770 = vmatpush1.bf16.msra.mxu0 %v1727
    %1771 = vmatprep.subr.bf16.mxu0 0
    %1772 = vmatpush2.bf16.msra.mxu0 0
    %1773 = vmatprep.subr.bf16.mxu0 0
    %1774 = vmatpush2.bf16.msra.mxu0 0
    %1775 = vmatprep.subr.bf16.mxu0 0
    %1776 = vmatpush2.bf16.msra.mxu0 0
    %1777 = vmatprep.subr.bf16.mxu0 0
    %1778 = vmatpush2.bf16.msra.mxu0 0
    %1779 = vmatprep.subr.bf16.mxu0 0
    %1780 = vmatpush2.bf16.msra.mxu0 0
    %1781 = vmatprep.subr.bf16.mxu0 0
    %1782 = vmatpush2.bf16.msra.mxu0 0
    %1783 = vmatprep.subr.bf16.mxu0 0
    %1784 = vmatpush2.bf16.msra.mxu0 0
    %1785 = vmatprep.subr.bf16.mxu0 0
    %1786 = vmatpush2.bf16.msra.mxu0 0
    %1787 = vmatprep.mubr.bf16.mxu0 0
    %1788 = vmatmul.mubr.bf16.gmra.mxu0 %v1732
    %v1789 = vpop.f32.mrf.mxu0
    %v1790 = vadd.f32 0.0, %v1789
    %v1791 = vpop.f32.mrf.mxu0
    %v1792 = vpop.f32.mrf.mxu0
    %v1793 = vadd.f32 0.0, %v1792
    %v1794 = vpop.f32.mrf.mxu0
    %1795 = vmatprep.mubr.bf16.mxu0 0
    %1796 = vmatmul.mubr.bf16.gmra.mxu0 %v1735
    %v1797 = vpop.f32.mrf.mxu0
    %v1798 = vadd.f32 0.0, %v1797
    %v1799 = vpop.f32.mrf.mxu0
    %v1800 = vpop.f32.mrf.mxu0
    %v1801 = vadd.f32 0.0, %v1800
    %v1802 = vpop.f32.mrf.mxu0
    %1803 = vmatprep.mubr.bf16.mxu0 0
    %1804 = vmatmul.mubr.bf16.gmra.mxu0 %v1738
    %v1805 = vpop.f32.mrf.mxu0
    %v1806 = vadd.f32 0.0, %v1805
    %v1807 = vpop.f32.mrf.mxu0
    %v1808 = vpop.f32.mrf.mxu0
    %v1809 = vadd.f32 0.0, %v1808
    %v1810 = vpop.f32.mrf.mxu0
    %1811 = vmatprep.mubr.bf16.mxu0 0
    %1812 = vmatmul.mubr.bf16.gmra.mxu0 %v1741
    %v1813 = vpop.f32.mrf.mxu0
    %v1814 = vadd.f32 0.0, %v1813
    %v1815 = vpop.f32.mrf.mxu0
    %v1816 = vpop.f32.mrf.mxu0
    %v1817 = vadd.f32 0.0, %v1816
    %v1818 = vpop.f32.mrf.mxu0
    %1819 = vmatprep.mubr.bf16.mxu0 0
    %1820 = vmatmul.mubr.bf16.gmra.mxu0 %v1744
    %v1821 = vpop.f32.mrf.mxu0
    %v1822 = vadd.f32 0.0, %v1821
    %v1823 = vpop.f32.mrf.mxu0
    %v1824 = vpop.f32.mrf.mxu0
    %v1825 = vadd.f32 0.0, %v1824
    %v1826 = vpop.f32.mrf.mxu0
    %1827 = vmatprep.mubr.bf16.mxu0 0
    %1828 = vmatmul.mubr.bf16.gmra.mxu0 %v1747
    %v1829 = vpop.f32.mrf.mxu0
    %v1830 = vadd.f32 0.0, %v1829
    %v1831 = vpop.f32.mrf.mxu0
    %v1832 = vpop.f32.mrf.mxu0
    %v1833 = vadd.f32 0.0, %v1832
    %v1834 = vpop.f32.mrf.mxu0
    %1835 = vmatprep.mubr.bf16.mxu0 0
    %1836 = vmatmul.mubr.bf16.gmra.mxu0 %v1750
    %v1837 = vpop.f32.mrf.mxu0
    %v1838 = vadd.f32 0.0, %v1837
    %v1839 = vpop.f32.mrf.mxu0
    %v1840 = vpop.f32.mrf.mxu0
    %v1841 = vadd.f32 0.0, %v1840
    %v1842 = vpop.f32.mrf.mxu0
    %1843 = vmatprep.mubr.bf16.mxu0 0
    %1844 = vmatmul.mubr.bf16.gmra.mxu0 %v1753
    %v1845 = vpop.f32.mrf.mxu0
    %v1846 = vadd.f32 0.0, %v1845
    %v1847 = vpop.f32.mrf.mxu0
    %v1848 = vpop.f32.mrf.mxu0
    %v1849 = vadd.f32 0.0, %v1848
    %v1850 = vpop.f32.mrf.mxu0
    %1851 = vdwg.mxu0
    %v1852 = vadd.f32 %v1638, %v1790
    %v1853 = vadd.f32 %v1639, %v1793
    %v1854 = vadd.f32 %v1640, %v1798
    %v1855 = vadd.f32 %v1641, %v1801
    %v1856 = vadd.f32 %v1642, %v1806
    %v1857 = vadd.f32 %v1643, %v1809
    %v1858 = vadd.f32 %v1644, %v1814
    %v1859 = vadd.f32 %v1645, %v1817
    %v1860 = vadd.f32 %v1646, %v1822
    %v1861 = vadd.f32 %v1647, %v1825
    %v1862 = vadd.f32 %v1648, %v1830
    %v1863 = vadd.f32 %v1649, %v1833
    %v1864 = vadd.f32 %v1650, %v1838
    %v1865 = vadd.f32 %v1651, %v1841
    %v1866 = vadd.f32 %v1652, %v1846
    %v1867 = vadd.f32 %v1653, %v1849
    %s1868 = sadd.s32 %s614, 440
    %s1869 = sshra.s32 %s1868, 3
    %s1870 = sand.u32 %s1868, 7
    %s1871 = smul.addr %s1869, 4
    %s1872 = scalar_lea.vmem [#allocation2], %s1871
    %v1873 = vld [vmem:[%s1872] sm:$0xf]
    %v1874 = vld [vmem:[%s1872 + $0x4] sm:$0xf]
    %v1875 = vld [vmem:[%s1872 + $0x8] sm:$0xf]
    %v1876 = vld [vmem:[%s1872 + $0xc] sm:$0xf]
    %v1877 = vld [vmem:[%s1872 + $0x10] sm:$0xf]
    %v1878 = vld [vmem:[%s1872 + $0x14] sm:$0xf]
    %v1879 = vld [vmem:[%s1872 + $0x18] sm:$0xf]
    %v1880 = vld [vmem:[%s1872 + $0x1c] sm:$0xf]
    %v1881 = vld [vmem:[%s1872 + $0x20] sm:$0xf]
    %v1882 = vld [vmem:[%s1872 + $0x24] sm:$0xf]
    %v1883 = vld [vmem:[%s1872 + $0x28] sm:$0xf]
    %v1884 = vld [vmem:[%s1872 + $0x2c] sm:$0xf]
    %v1885 = vld [vmem:[%s1872 + $0x30] sm:$0xf]
    %v1886 = vld [vmem:[%s1872 + $0x34] sm:$0xf]
    %v1887 = vld [vmem:[%s1872 + $0x38] sm:$0xf]
    %v1888 = vld [vmem:[%s1872 + $0x3c] sm:$0xf]
    %v1889 = vld [vmem:[%s3 + $0x60] sm:$0xf]
    %v1890 = vld [vmem:[%s3 + $0x64] sm:$0xf]
    %v1891 = vld [vmem:[%s3 + $0x68] sm:$0xf]
    %v1892 = vld [vmem:[%s3 + $0x6c] sm:$0xf]
    %v1909 = vunpack.c.l.b16 %v1873
    %v1910 = vunpack.c.l.b16 %v1874
    %v1911 = vunpack.c.l.b16 %v1875
    %v1912 = vunpack.c.l.b16 %v1876
    %v1913 = vunpack.c.l.b16 %v1877
    %v1914 = vunpack.c.l.b16 %v1878
    %v1915 = vunpack.c.l.b16 %v1879
    %v1916 = vunpack.c.l.b16 %v1880
    %v1917 = vunpack.c.l.b16 %v1881
    %v1918 = vunpack.c.l.b16 %v1882
    %v1919 = vunpack.c.l.b16 %v1883
    %v1920 = vunpack.c.l.b16 %v1884
    %v1921 = vunpack.c.l.b16 %v1885
    %v1922 = vunpack.c.l.b16 %v1886
    %v1923 = vunpack.c.l.b16 %v1887
    %v1924 = vunpack.c.l.b16 %v1888
    %v1925 = vpack.c.b16 %v1910, %v1909
    %v1926 = vpack.c.b16 %v1912, %v1911
    %v1927 = vpack.c.b16 %v1914, %v1913
    %v1928 = vpack.c.b16 %v1916, %v1915
    %v1929 = vpack.c.b16 %v1918, %v1917
    %v1930 = vpack.c.b16 %v1920, %v1919
    %v1931 = vpack.c.b16 %v1922, %v1921
    %v1932 = vpack.c.b16 %v1924, %v1923
    %v1937 = vunpack.c.l.b16 %v1889
    %v1938 = vunpack.c.l.b16 %v1890
    %v1939 = vunpack.c.l.b16 %v1891
    %v1940 = vunpack.c.l.b16 %v1892
    %v1941 = vpack.c.b16 %v1938, %v1937
    %v1942 = vpack.c.b16 %v1940, %v1939
    %v1946 = vsel %vm717, %v1925, 0
    %v1949 = vsel %vm717, %v1926, 0
    %v1952 = vsel %vm717, %v1927, 0
    %v1955 = vsel %vm717, %v1928, 0
    %v1958 = vsel %vm717, %v1929, 0
    %v1961 = vsel %vm717, %v1930, 0
    %v1964 = vsel %vm717, %v1931, 0
    %v1967 = vsel %vm717, %v1932, 0
    %1969 = vmatprep.subr.bf16.mxu0 0
    %1970 = vmatpush1.bf16.msra.mxu0 0
    %1971 = vmatprep.subr.bf16.mxu0 0
    %1972 = vmatpush1.bf16.msra.mxu0 0
    %1973 = vmatprep.subr.bf16.mxu0 0
    %1974 = vmatpush1.bf16.msra.mxu0 0
    %1975 = vmatprep.subr.bf16.mxu0 0
    %1976 = vmatpush1.bf16.msra.mxu0 0
    %1977 = vmatprep.subr.bf16.mxu0 0
    %1978 = vmatpush1.bf16.msra.mxu0 0
    %1979 = vmatprep.subr.bf16.mxu0 0
    %1980 = vmatpush1.bf16.msra.mxu0 0
    %1981 = vmatprep.subr.bf16.mxu0 0
    %1982 = vmatpush1.bf16.msra.mxu0 %v1942
    %1983 = vmatprep.subr.bf16.mxu0 0
    %1984 = vmatpush1.bf16.msra.mxu0 %v1941
    %1985 = vmatprep.subr.bf16.mxu0 0
    %1986 = vmatpush2.bf16.msra.mxu0 0
    %1987 = vmatprep.subr.bf16.mxu0 0
    %1988 = vmatpush2.bf16.msra.mxu0 0
    %1989 = vmatprep.subr.bf16.mxu0 0
    %1990 = vmatpush2.bf16.msra.mxu0 0
    %1991 = vmatprep.subr.bf16.mxu0 0
    %1992 = vmatpush2.bf16.msra.mxu0 0
    %1993 = vmatprep.subr.bf16.mxu0 0
    %1994 = vmatpush2.bf16.msra.mxu0 0
    %1995 = vmatprep.subr.bf16.mxu0 0
    %1996 = vmatpush2.bf16.msra.mxu0 0
    %1997 = vmatprep.subr.bf16.mxu0 0
    %1998 = vmatpush2.bf16.msra.mxu0 0
    %1999 = vmatprep.subr.bf16.mxu0 0
    %2000 = vmatpush2.bf16.msra.mxu0 0
    %2001 = vmatprep.mubr.bf16.mxu0 0
    %2002 = vmatmul.mubr.bf16.gmra.mxu0 %v1946
    %v2003 = vpop.f32.mrf.mxu0
    %v2004 = vadd.f32 0.0, %v2003
    %v2005 = vpop.f32.mrf.mxu0
    %v2006 = vpop.f32.mrf.mxu0
    %v2007 = vadd.f32 0.0, %v2006
    %v2008 = vpop.f32.mrf.mxu0
    %2009 = vmatprep.mubr.bf16.mxu0 0
    %2010 = vmatmul.mubr.bf16.gmra.mxu0 %v1949
    %v2011 = vpop.f32.mrf.mxu0
    %v2012 = vadd.f32 0.0, %v2011
    %v2013 = vpop.f32.mrf.mxu0
    %v2014 = vpop.f32.mrf.mxu0
    %v2015 = vadd.f32 0.0, %v2014
    %v2016 = vpop.f32.mrf.mxu0
    %2017 = vmatprep.mubr.bf16.mxu0 0
    %2018 = vmatmul.mubr.bf16.gmra.mxu0 %v1952
    %v2019 = vpop.f32.mrf.mxu0
    %v2020 = vadd.f32 0.0, %v2019
    %v2021 = vpop.f32.mrf.mxu0
    %v2022 = vpop.f32.mrf.mxu0
    %v2023 = vadd.f32 0.0, %v2022
    %v2024 = vpop.f32.mrf.mxu0
    %2025 = vmatprep.mubr.bf16.mxu0 0
    %2026 = vmatmul.mubr.bf16.gmra.mxu0 %v1955
    %v2027 = vpop.f32.mrf.mxu0
    %v2028 = vadd.f32 0.0, %v2027
    %v2029 = vpop.f32.mrf.mxu0
    %v2030 = vpop.f32.mrf.mxu0
    %v2031 = vadd.f32 0.0, %v2030
    %v2032 = vpop.f32.mrf.mxu0
    %2033 = vmatprep.mubr.bf16.mxu0 0
    %2034 = vmatmul.mubr.bf16.gmra.mxu0 %v1958
    %v2035 = vpop.f32.mrf.mxu0
    %v2036 = vadd.f32 0.0, %v2035
    %v2037 = vpop.f32.mrf.mxu0
    %v2038 = vpop.f32.mrf.mxu0
    %v2039 = vadd.f32 0.0, %v2038
    %v2040 = vpop.f32.mrf.mxu0
    %2041 = vmatprep.mubr.bf16.mxu0 0
    %2042 = vmatmul.mubr.bf16.gmra.mxu0 %v1961
    %v2043 = vpop.f32.mrf.mxu0
    %v2044 = vadd.f32 0.0, %v2043
    %v2045 = vpop.f32.mrf.mxu0
    %v2046 = vpop.f32.mrf.mxu0
    %v2047 = vadd.f32 0.0, %v2046
    %v2048 = vpop.f32.mrf.mxu0
    %2049 = vmatprep.mubr.bf16.mxu0 0
    %2050 = vmatmul.mubr.bf16.gmra.mxu0 %v1964
    %v2051 = vpop.f32.mrf.mxu0
    %v2052 = vadd.f32 0.0, %v2051
    %v2053 = vpop.f32.mrf.mxu0
    %v2054 = vpop.f32.mrf.mxu0
    %v2055 = vadd.f32 0.0, %v2054
    %v2056 = vpop.f32.mrf.mxu0
    %2057 = vmatprep.mubr.bf16.mxu0 0
    %2058 = vmatmul.mubr.bf16.gmra.mxu0 %v1967
    %v2059 = vpop.f32.mrf.mxu0
    %v2060 = vadd.f32 0.0, %v2059
    %v2061 = vpop.f32.mrf.mxu0
    %v2062 = vpop.f32.mrf.mxu0
    %v2063 = vadd.f32 0.0, %v2062
    %v2064 = vpop.f32.mrf.mxu0
    %2065 = vdwg.mxu0
    %v2066 = vadd.f32 %v1852, %v2004
    %v2067 = vadd.f32 %v1853, %v2007
    %v2068 = vadd.f32 %v1854, %v2012
    %v2069 = vadd.f32 %v1855, %v2015
    %v2070 = vadd.f32 %v1856, %v2020
    %v2071 = vadd.f32 %v1857, %v2023
    %v2072 = vadd.f32 %v1858, %v2028
    %v2073 = vadd.f32 %v1859, %v2031
    %v2074 = vadd.f32 %v1860, %v2036
    %v2075 = vadd.f32 %v1861, %v2039
    %v2076 = vadd.f32 %v1862, %v2044
    %v2077 = vadd.f32 %v1863, %v2047
    %v2078 = vadd.f32 %v1864, %v2052
    %v2079 = vadd.f32 %v1865, %v2055
    %v2080 = vadd.f32 %v1866, %v2060
    %v2081 = vadd.f32 %v1867, %v2063
    %s2082 = sadd.s32 %s614, 448
    %s2083 = sshra.s32 %s2082, 3
    %s2084 = sand.u32 %s2082, 7
    %s2085 = smul.addr %s2083, 4
    %s2086 = scalar_lea.vmem [#allocation2], %s2085
    %v2087 = vld [vmem:[%s2086] sm:$0xf]
    %v2088 = vld [vmem:[%s2086 + $0x4] sm:$0xf]
    %v2089 = vld [vmem:[%s2086 + $0x8] sm:$0xf]
    %v2090 = vld [vmem:[%s2086 + $0xc] sm:$0xf]
    %v2091 = vld [vmem:[%s2086 + $0x10] sm:$0xf]
    %v2092 = vld [vmem:[%s2086 + $0x14] sm:$0xf]
    %v2093 = vld [vmem:[%s2086 + $0x18] sm:$0xf]
    %v2094 = vld [vmem:[%s2086 + $0x1c] sm:$0xf]
    %v2095 = vld [vmem:[%s2086 + $0x20] sm:$0xf]
    %v2096 = vld [vmem:[%s2086 + $0x24] sm:$0xf]
    %v2097 = vld [vmem:[%s2086 + $0x28] sm:$0xf]
    %v2098 = vld [vmem:[%s2086 + $0x2c] sm:$0xf]
    %v2099 = vld [vmem:[%s2086 + $0x30] sm:$0xf]
    %v2100 = vld [vmem:[%s2086 + $0x34] sm:$0xf]
    %v2101 = vld [vmem:[%s2086 + $0x38] sm:$0xf]
    %v2102 = vld [vmem:[%s2086 + $0x3c] sm:$0xf]
    %v2103 = vld [vmem:[%s3 + $0x70] sm:$0xf]
    %v2104 = vld [vmem:[%s3 + $0x74] sm:$0xf]
    %v2105 = vld [vmem:[%s3 + $0x78] sm:$0xf]
    %v2106 = vld [vmem:[%s3 + $0x7c] sm:$0xf]
    %v2123 = vunpack.c.l.b16 %v2087
    %v2124 = vunpack.c.l.b16 %v2088
    %v2125 = vunpack.c.l.b16 %v2089
    %v2126 = vunpack.c.l.b16 %v2090
    %v2127 = vunpack.c.l.b16 %v2091
    %v2128 = vunpack.c.l.b16 %v2092
    %v2129 = vunpack.c.l.b16 %v2093
    %v2130 = vunpack.c.l.b16 %v2094
    %v2131 = vunpack.c.l.b16 %v2095
    %v2132 = vunpack.c.l.b16 %v2096
    %v2133 = vunpack.c.l.b16 %v2097
    %v2134 = vunpack.c.l.b16 %v2098
    %v2135 = vunpack.c.l.b16 %v2099
    %v2136 = vunpack.c.l.b16 %v2100
    %v2137 = vunpack.c.l.b16 %v2101
    %v2138 = vunpack.c.l.b16 %v2102
    %v2139 = vpack.c.b16 %v2124, %v2123
    %v2140 = vpack.c.b16 %v2126, %v2125
    %v2141 = vpack.c.b16 %v2128, %v2127
    %v2142 = vpack.c.b16 %v2130, %v2129
    %v2143 = vpack.c.b16 %v2132, %v2131
    %v2144 = vpack.c.b16 %v2134, %v2133
    %v2145 = vpack.c.b16 %v2136, %v2135
    %v2146 = vpack.c.b16 %v2138, %v2137
    %v2151 = vunpack.c.l.b16 %v2103
    %v2152 = vunpack.c.l.b16 %v2104
    %v2153 = vunpack.c.l.b16 %v2105
    %v2154 = vunpack.c.l.b16 %v2106
    %v2155 = vpack.c.b16 %v2152, %v2151
    %v2156 = vpack.c.b16 %v2154, %v2153
    %v2160 = vsel %vm717, %v2139, 0
    %v2163 = vsel %vm717, %v2140, 0
    %v2166 = vsel %vm717, %v2141, 0
    %v2169 = vsel %vm717, %v2142, 0
    %v2172 = vsel %vm717, %v2143, 0
    %v2175 = vsel %vm717, %v2144, 0
    %v2178 = vsel %vm717, %v2145, 0
    %v2181 = vsel %vm717, %v2146, 0
    %2183 = vmatprep.subr.bf16.mxu0 0
    %2184 = vmatpush1.bf16.msra.mxu0 0
    %2185 = vmatprep.subr.bf16.mxu0 0
    %2186 = vmatpush1.bf16.msra.mxu0 0
    %2187 = vmatprep.subr.bf16.mxu0 0
    %2188 = vmatpush1.bf16.msra.mxu0 0
    %2189 = vmatprep.subr.bf16.mxu0 0
    %2190 = vmatpush1.bf16.msra.mxu0 0
    %2191 = vmatprep.subr.bf16.mxu0 0
    %2192 = vmatpush1.bf16.msra.mxu0 0
    %2193 = vmatprep.subr.bf16.mxu0 0
    %2194 = vmatpush1.bf16.msra.mxu0 0
    %2195 = vmatprep.subr.bf16.mxu0 0
    %2196 = vmatpush1.bf16.msra.mxu0 %v2156
    %2197 = vmatprep.subr.bf16.mxu0 0
    %2198 = vmatpush1.bf16.msra.mxu0 %v2155
    %2199 = vmatprep.subr.bf16.mxu0 0
    %2200 = vmatpush2.bf16.msra.mxu0 0
    %2201 = vmatprep.subr.bf16.mxu0 0
    %2202 = vmatpush2.bf16.msra.mxu0 0
    %2203 = vmatprep.subr.bf16.mxu0 0
    %2204 = vmatpush2.bf16.msra.mxu0 0
    %2205 = vmatprep.subr.bf16.mxu0 0
    %2206 = vmatpush2.bf16.msra.mxu0 0
    %2207 = vmatprep.subr.bf16.mxu0 0
    %2208 = vmatpush2.bf16.msra.mxu0 0
    %2209 = vmatprep.subr.bf16.mxu0 0
    %2210 = vmatpush2.bf16.msra.mxu0 0
    %2211 = vmatprep.subr.bf16.mxu0 0
    %2212 = vmatpush2.bf16.msra.mxu0 0
    %2213 = vmatprep.subr.bf16.mxu0 0
    %2214 = vmatpush2.bf16.msra.mxu0 0
    %2215 = vmatprep.mubr.bf16.mxu0 0
    %2216 = vmatmul.mubr.bf16.gmra.mxu0 %v2160
    %v2217 = vpop.f32.mrf.mxu0
    %v2218 = vadd.f32 0.0, %v2217
    %v2219 = vpop.f32.mrf.mxu0
    %v2220 = vpop.f32.mrf.mxu0
    %v2221 = vadd.f32 0.0, %v2220
    %v2222 = vpop.f32.mrf.mxu0
    %2223 = vmatprep.mubr.bf16.mxu0 0
    %2224 = vmatmul.mubr.bf16.gmra.mxu0 %v2163
    %v2225 = vpop.f32.mrf.mxu0
    %v2226 = vadd.f32 0.0, %v2225
    %v2227 = vpop.f32.mrf.mxu0
    %v2228 = vpop.f32.mrf.mxu0
    %v2229 = vadd.f32 0.0, %v2228
    %v2230 = vpop.f32.mrf.mxu0
    %2231 = vmatprep.mubr.bf16.mxu0 0
    %2232 = vmatmul.mubr.bf16.gmra.mxu0 %v2166
    %v2233 = vpop.f32.mrf.mxu0
    %v2234 = vadd.f32 0.0, %v2233
    %v2235 = vpop.f32.mrf.mxu0
    %v2236 = vpop.f32.mrf.mxu0
    %v2237 = vadd.f32 0.0, %v2236
    %v2238 = vpop.f32.mrf.mxu0
    %2239 = vmatprep.mubr.bf16.mxu0 0
    %2240 = vmatmul.mubr.bf16.gmra.mxu0 %v2169
    %v2241 = vpop.f32.mrf.mxu0
    %v2242 = vadd.f32 0.0, %v2241
    %v2243 = vpop.f32.mrf.mxu0
    %v2244 = vpop.f32.mrf.mxu0
    %v2245 = vadd.f32 0.0, %v2244
    %v2246 = vpop.f32.mrf.mxu0
    %2247 = vmatprep.mubr.bf16.mxu0 0
    %2248 = vmatmul.mubr.bf16.gmra.mxu0 %v2172
    %v2249 = vpop.f32.mrf.mxu0
    %v2250 = vadd.f32 0.0, %v2249
    %v2251 = vpop.f32.mrf.mxu0
    %v2252 = vpop.f32.mrf.mxu0
    %v2253 = vadd.f32 0.0, %v2252
    %v2254 = vpop.f32.mrf.mxu0
    %2255 = vmatprep.mubr.bf16.mxu0 0
    %2256 = vmatmul.mubr.bf16.gmra.mxu0 %v2175
    %v2257 = vpop.f32.mrf.mxu0
    %v2258 = vadd.f32 0.0, %v2257
    %v2259 = vpop.f32.mrf.mxu0
    %v2260 = vpop.f32.mrf.mxu0
    %v2261 = vadd.f32 0.0, %v2260
    %v2262 = vpop.f32.mrf.mxu0
    %2263 = vmatprep.mubr.bf16.mxu0 0
    %2264 = vmatmul.mubr.bf16.gmra.mxu0 %v2178
    %v2265 = vpop.f32.mrf.mxu0
    %v2266 = vadd.f32 0.0, %v2265
    %v2267 = vpop.f32.mrf.mxu0
    %v2268 = vpop.f32.mrf.mxu0
    %v2269 = vadd.f32 0.0, %v2268
    %v2270 = vpop.f32.mrf.mxu0
    %2271 = vmatprep.mubr.bf16.mxu0 0
    %2272 = vmatmul.mubr.bf16.gmra.mxu0 %v2181
    %v2273 = vpop.f32.mrf.mxu0
    %v2274 = vadd.f32 0.0, %v2273
    %v2275 = vpop.f32.mrf.mxu0
    %v2276 = vpop.f32.mrf.mxu0
    %v2277 = vadd.f32 0.0, %v2276
    %v2278 = vpop.f32.mrf.mxu0
    %2279 = vdwg.mxu0
    %v2280 = vadd.f32 %v2066, %v2218
    %v2281 = vadd.f32 %v2067, %v2221
    %v2282 = vadd.f32 %v2068, %v2226
    %v2283 = vadd.f32 %v2069, %v2229
    %v2284 = vadd.f32 %v2070, %v2234
    %v2285 = vadd.f32 %v2071, %v2237
    %v2286 = vadd.f32 %v2072, %v2242
    %v2287 = vadd.f32 %v2073, %v2245
    %v2288 = vadd.f32 %v2074, %v2250
    %v2289 = vadd.f32 %v2075, %v2253
    %v2290 = vadd.f32 %v2076, %v2258
    %v2291 = vadd.f32 %v2077, %v2261
    %v2292 = vadd.f32 %v2078, %v2266
    %v2293 = vadd.f32 %v2079, %v2269
    %v2294 = vadd.f32 %v2080, %v2274
    %v2295 = vadd.f32 %v2081, %v2277
    %s2296 = sadd.s32 %s614, 456
    %s2297 = sshra.s32 %s2296, 3
    %s2298 = sand.u32 %s2296, 7
    %s2299 = smul.addr %s2297, 4
    %s2300 = scalar_lea.vmem [#allocation2], %s2299
    %v2301 = vld [vmem:[%s2300] sm:$0xf]
    %v2302 = vld [vmem:[%s2300 + $0x4] sm:$0xf]
    %v2303 = vld [vmem:[%s2300 + $0x8] sm:$0xf]
    %v2304 = vld [vmem:[%s2300 + $0xc] sm:$0xf]
    %v2305 = vld [vmem:[%s2300 + $0x10] sm:$0xf]
    %v2306 = vld [vmem:[%s2300 + $0x14] sm:$0xf]
    %v2307 = vld [vmem:[%s2300 + $0x18] sm:$0xf]
    %v2308 = vld [vmem:[%s2300 + $0x1c] sm:$0xf]
    %v2309 = vld [vmem:[%s2300 + $0x20] sm:$0xf]
    %v2310 = vld [vmem:[%s2300 + $0x24] sm:$0xf]
    %v2311 = vld [vmem:[%s2300 + $0x28] sm:$0xf]
    %v2312 = vld [vmem:[%s2300 + $0x2c] sm:$0xf]
    %v2313 = vld [vmem:[%s2300 + $0x30] sm:$0xf]
    %v2314 = vld [vmem:[%s2300 + $0x34] sm:$0xf]
    %v2315 = vld [vmem:[%s2300 + $0x38] sm:$0xf]
    %v2316 = vld [vmem:[%s2300 + $0x3c] sm:$0xf]
    %v2317 = vld [vmem:[%s3 + $0x80] sm:$0xf]
    %v2318 = vld [vmem:[%s3 + $0x84] sm:$0xf]
    %v2319 = vld [vmem:[%s3 + $0x88] sm:$0xf]
    %v2320 = vld [vmem:[%s3 + $0x8c] sm:$0xf]
    %v2337 = vunpack.c.l.b16 %v2301
    %v2338 = vunpack.c.l.b16 %v2302
    %v2339 = vunpack.c.l.b16 %v2303
    %v2340 = vunpack.c.l.b16 %v2304
    %v2341 = vunpack.c.l.b16 %v2305
    %v2342 = vunpack.c.l.b16 %v2306
    %v2343 = vunpack.c.l.b16 %v2307
    %v2344 = vunpack.c.l.b16 %v2308
    %v2345 = vunpack.c.l.b16 %v2309
    %v2346 = vunpack.c.l.b16 %v2310
    %v2347 = vunpack.c.l.b16 %v2311
    %v2348 = vunpack.c.l.b16 %v2312
    %v2349 = vunpack.c.l.b16 %v2313
    %v2350 = vunpack.c.l.b16 %v2314
    %v2351 = vunpack.c.l.b16 %v2315
    %v2352 = vunpack.c.l.b16 %v2316
    %v2353 = vpack.c.b16 %v2338, %v2337
    %v2354 = vpack.c.b16 %v2340, %v2339
    %v2355 = vpack.c.b16 %v2342, %v2341
    %v2356 = vpack.c.b16 %v2344, %v2343
    %v2357 = vpack.c.b16 %v2346, %v2345
    %v2358 = vpack.c.b16 %v2348, %v2347
    %v2359 = vpack.c.b16 %v2350, %v2349
    %v2360 = vpack.c.b16 %v2352, %v2351
    %v2365 = vunpack.c.l.b16 %v2317
    %v2366 = vunpack.c.l.b16 %v2318
    %v2367 = vunpack.c.l.b16 %v2319
    %v2368 = vunpack.c.l.b16 %v2320
    %v2369 = vpack.c.b16 %v2366, %v2365
    %v2370 = vpack.c.b16 %v2368, %v2367
    %v2374 = vsel %vm717, %v2353, 0
    %v2377 = vsel %vm717, %v2354, 0
    %v2380 = vsel %vm717, %v2355, 0
    %v2383 = vsel %vm717, %v2356, 0
    %v2386 = vsel %vm717, %v2357, 0
    %v2389 = vsel %vm717, %v2358, 0
    %v2392 = vsel %vm717, %v2359, 0
    %v2395 = vsel %vm717, %v2360, 0
    %2397 = vmatprep.subr.bf16.mxu0 0
    %2398 = vmatpush1.bf16.msra.mxu0 0
    %2399 = vmatprep.subr.bf16.mxu0 0
    %2400 = vmatpush1.bf16.msra.mxu0 0
    %2401 = vmatprep.subr.bf16.mxu0 0
    %2402 = vmatpush1.bf16.msra.mxu0 0
    %2403 = vmatprep.subr.bf16.mxu0 0
    %2404 = vmatpush1.bf16.msra.mxu0 0
    %2405 = vmatprep.subr.bf16.mxu0 0
    %2406 = vmatpush1.bf16.msra.mxu0 0
    %2407 = vmatprep.subr.bf16.mxu0 0
    %2408 = vmatpush1.bf16.msra.mxu0 0
    %2409 = vmatprep.subr.bf16.mxu0 0
    %2410 = vmatpush1.bf16.msra.mxu0 %v2370
    %2411 = vmatprep.subr.bf16.mxu0 0
    %2412 = vmatpush1.bf16.msra.mxu0 %v2369
    %2413 = vmatprep.subr.bf16.mxu0 0
    %2414 = vmatpush2.bf16.msra.mxu0 0
    %2415 = vmatprep.subr.bf16.mxu0 0
    %2416 = vmatpush2.bf16.msra.mxu0 0
    %2417 = vmatprep.subr.bf16.mxu0 0
    %2418 = vmatpush2.bf16.msra.mxu0 0
    %2419 = vmatprep.subr.bf16.mxu0 0
    %2420 = vmatpush2.bf16.msra.mxu0 0
    %2421 = vmatprep.subr.bf16.mxu0 0
    %2422 = vmatpush2.bf16.msra.mxu0 0
    %2423 = vmatprep.subr.bf16.mxu0 0
    %2424 = vmatpush2.bf16.msra.mxu0 0
    %2425 = vmatprep.subr.bf16.mxu0 0
    %2426 = vmatpush2.bf16.msra.mxu0 0
    %2427 = vmatprep.subr.bf16.mxu0 0
    %2428 = vmatpush2.bf16.msra.mxu0 0
    %2429 = vmatprep.mubr.bf16.mxu0 0
    %2430 = vmatmul.mubr.bf16.gmra.mxu0 %v2374
    %v2431 = vpop.f32.mrf.mxu0
    %v2432 = vadd.f32 0.0, %v2431
    %v2433 = vpop.f32.mrf.mxu0
    %v2434 = vpop.f32.mrf.mxu0
    %v2435 = vadd.f32 0.0, %v2434
    %v2436 = vpop.f32.mrf.mxu0
    %2437 = vmatprep.mubr.bf16.mxu0 0
    %2438 = vmatmul.mubr.bf16.gmra.mxu0 %v2377
    %v2439 = vpop.f32.mrf.mxu0
    %v2440 = vadd.f32 0.0, %v2439
    %v2441 = vpop.f32.mrf.mxu0
    %v2442 = vpop.f32.mrf.mxu0
    %v2443 = vadd.f32 0.0, %v2442
    %v2444 = vpop.f32.mrf.mxu0
    %2445 = vmatprep.mubr.bf16.mxu0 0
    %2446 = vmatmul.mubr.bf16.gmra.mxu0 %v2380
    %v2447 = vpop.f32.mrf.mxu0
    %v2448 = vadd.f32 0.0, %v2447
    %v2449 = vpop.f32.mrf.mxu0
    %v2450 = vpop.f32.mrf.mxu0
    %v2451 = vadd.f32 0.0, %v2450
    %v2452 = vpop.f32.mrf.mxu0
    %2453 = vmatprep.mubr.bf16.mxu0 0
    %2454 = vmatmul.mubr.bf16.gmra.mxu0 %v2383
    %v2455 = vpop.f32.mrf.mxu0
    %v2456 = vadd.f32 0.0, %v2455
    %v2457 = vpop.f32.mrf.mxu0
    %v2458 = vpop.f32.mrf.mxu0
    %v2459 = vadd.f32 0.0, %v2458
    %v2460 = vpop.f32.mrf.mxu0
    %2461 = vmatprep.mubr.bf16.mxu0 0
    %2462 = vmatmul.mubr.bf16.gmra.mxu0 %v2386
    %v2463 = vpop.f32.mrf.mxu0
    %v2464 = vadd.f32 0.0, %v2463
    %v2465 = vpop.f32.mrf.mxu0
    %v2466 = vpop.f32.mrf.mxu0
    %v2467 = vadd.f32 0.0, %v2466
    %v2468 = vpop.f32.mrf.mxu0
    %2469 = vmatprep.mubr.bf16.mxu0 0
    %2470 = vmatmul.mubr.bf16.gmra.mxu0 %v2389
    %v2471 = vpop.f32.mrf.mxu0
    %v2472 = vadd.f32 0.0, %v2471
    %v2473 = vpop.f32.mrf.mxu0
    %v2474 = vpop.f32.mrf.mxu0
    %v2475 = vadd.f32 0.0, %v2474
    %v2476 = vpop.f32.mrf.mxu0
    %2477 = vmatprep.mubr.bf16.mxu0 0
    %2478 = vmatmul.mubr.bf16.gmra.mxu0 %v2392
    %v2479 = vpop.f32.mrf.mxu0
    %v2480 = vadd.f32 0.0, %v2479
    %v2481 = vpop.f32.mrf.mxu0
    %v2482 = vpop.f32.mrf.mxu0
    %v2483 = vadd.f32 0.0, %v2482
    %v2484 = vpop.f32.mrf.mxu0
    %2485 = vmatprep.mubr.bf16.mxu0 0
    %2486 = vmatmul.mubr.bf16.gmra.mxu0 %v2395
    %v2487 = vpop.f32.mrf.mxu0
    %v2488 = vadd.f32 0.0, %v2487
    %v2489 = vpop.f32.mrf.mxu0
    %v2490 = vpop.f32.mrf.mxu0
    %v2491 = vadd.f32 0.0, %v2490
    %v2492 = vpop.f32.mrf.mxu0
    %2493 = vdwg.mxu0
    %v2494 = vadd.f32 %v2280, %v2432
    %v2495 = vadd.f32 %v2281, %v2435
    %v2496 = vadd.f32 %v2282, %v2440
    %v2497 = vadd.f32 %v2283, %v2443
    %v2498 = vadd.f32 %v2284, %v2448
    %v2499 = vadd.f32 %v2285, %v2451
    %v2500 = vadd.f32 %v2286, %v2456
    %v2501 = vadd.f32 %v2287, %v2459
    %v2502 = vadd.f32 %v2288, %v2464
    %v2503 = vadd.f32 %v2289, %v2467
    %v2504 = vadd.f32 %v2290, %v2472
    %v2505 = vadd.f32 %v2291, %v2475
    %v2506 = vadd.f32 %v2292, %v2480
    %v2507 = vadd.f32 %v2293, %v2483
    %v2508 = vadd.f32 %v2294, %v2488
    %v2509 = vadd.f32 %v2295, %v2491
    %s2510 = scalar_lea.vmem [#allocation3], %s614
    %vm2511 = vcmask 523264
    %2512 = vst.msk [vmem:[%s2510] sm:$0xff] %vm2511, %v2494
    %2513 = vst.msk [vmem:[%s2510 + $0x8] sm:$0xff] %vm2511, %v2495
    %2514 = vst.msk [vmem:[%s2510 + $0x10] sm:$0xff] %vm2511, %v2496
    %2515 = vst.msk [vmem:[%s2510 + $0x18] sm:$0xff] %vm2511, %v2497
    %2516 = vst.msk [vmem:[%s2510 + $0x20] sm:$0xff] %vm2511, %v2498
    %2517 = vst.msk [vmem:[%s2510 + $0x28] sm:$0xff] %vm2511, %v2499
    %2518 = vst.msk [vmem:[%s2510 + $0x30] sm:$0xff] %vm2511, %v2500
    %2519 = vst.msk [vmem:[%s2510 + $0x38] sm:$0xff] %vm2511, %v2501
    %2520 = vst.msk [vmem:[%s2510 + $0x40] sm:$0xff] %vm2511, %v2502
    %2521 = vst.msk [vmem:[%s2510 + $0x48] sm:$0xff] %vm2511, %v2503
    %2522 = vst.msk [vmem:[%s2510 + $0x50] sm:$0xff] %vm2511, %v2504
    %2523 = vst.msk [vmem:[%s2510 + $0x58] sm:$0xff] %vm2511, %v2505
    %2524 = vst.msk [vmem:[%s2510 + $0x60] sm:$0xff] %vm2511, %v2506
    %2525 = vst.msk [vmem:[%s2510 + $0x68] sm:$0xff] %vm2511, %v2507
    %2526 = vst.msk [vmem:[%s2510 + $0x70] sm:$0xff] %vm2511, %v2508
    %2527 = vst.msk [vmem:[%s2510 + $0x78] sm:$0xff] %vm2511, %v2509
  $region57: #{neural_network_forward.1} parent=0 // loop_footer
    %s613 = sadd.s32 1, %s609
  $region58: #{neural_network_forward.1} parent=0 // loop_footer_branch
    %608 = sbr.rel target = $region54
  $region59: #{neural_network_forward.1} parent=0 // loop_exit
    _
  %v2528 = vld [vmem:[%s4] sm:$0x1]
  %v2529 = vld [vmem:[#allocation3] sm:$0xff]
  %v2530 = vld [vmem:[#allocation3 + $0x8] sm:$0xff]
  %v2531 = vmax.f32 %v2529, %v2530
  %v2532 = vld [vmem:[#allocation3 + $0xc0] sm:$0xff]
  %v2533 = vld [vmem:[#allocation3 + $0xc8] sm:$0xff]
  %v2534 = vmax.f32 %v2532, %v2533
  %v2535 = vmax.f32 %v2531, %v2534
  %v2537 = vlaneseq
  %v2538 = vshrl.u32 %v2537, 7
  %v2539 = vsub.s32 0, %v2538
  %v2540 = vrot.slane %v2528, %v2539
  %v2542 = vadd.f32 %v2535, %v2540
  %v2543 = vpack.c.bf16 %v2542, %v2542
  %vm2544 = vcmask 519168
  %2545 = vst.msk [vmem:[#allocation4] sm:$0xf] %vm2544, %v2543
  %v2546 = vld [vmem:[#allocation3 + $0x10] sm:$0xff]
  %v2547 = vld [vmem:[#allocation3 + $0x18] sm:$0xff]
  %v2548 = vmax.f32 %v2546, %v2547
  %v2549 = vld [vmem:[#allocation3 + $0xd0] sm:$0xff]
  %v2550 = vld [vmem:[#allocation3 + $0xd8] sm:$0xff]
  %v2551 = vmax.f32 %v2549, %v2550
  %v2552 = vmax.f32 %v2548, %v2551
  %v2553 = vadd.f32 %v2552, %v2540
  %v2554 = vpack.c.bf16 %v2553, %v2553
  %2555 = vst.msk [vmem:[#allocation4 + $0x4] sm:$0xf] %vm2544, %v2554
  %v2556 = vld [vmem:[#allocation3 + $0x20] sm:$0xff]
  %v2557 = vld [vmem:[#allocation3 + $0x28] sm:$0xff]
  %v2558 = vmax.f32 %v2556, %v2557
  %v2559 = vld [vmem:[#allocation3 + $0xe0] sm:$0xff]
  %v2560 = vld [vmem:[#allocation3 + $0xe8] sm:$0xff]
  %v2561 = vmax.f32 %v2559, %v2560
  %v2562 = vmax.f32 %v2558, %v2561
  %v2563 = vadd.f32 %v2562, %v2540
  %v2564 = vpack.c.bf16 %v2563, %v2563
  %2565 = vst.msk [vmem:[#allocation4 + $0x10] sm:$0xf] %vm2544, %v2564
  %v2566 = vld [vmem:[#allocation3 + $0x30] sm:$0xff]
  %v2567 = vld [vmem:[#allocation3 + $0x38] sm:$0xff]
  %v2568 = vmax.f32 %v2566, %v2567
  %v2569 = vld [vmem:[#allocation3 + $0xf0] sm:$0xff]
  %v2570 = vld [vmem:[#allocation3 + $0xf8] sm:$0xff]
  %v2571 = vmax.f32 %v2569, %v2570
  %v2572 = vmax.f32 %v2568, %v2571
  %v2573 = vadd.f32 %v2572, %v2540
  %v2574 = vpack.c.bf16 %v2573, %v2573
  %2575 = vst.msk [vmem:[#allocation4 + $0x14] sm:$0xf] %vm2544, %v2574
  %v2576 = vld [vmem:[#allocation3 + $0x40] sm:$0xff]
  %v2577 = vld [vmem:[#allocation3 + $0x48] sm:$0xff]
  %v2578 = vmax.f32 %v2576, %v2577
  %v2579 = vld [vmem:[#allocation3 + $0x100] sm:$0xff]
  %v2580 = vld [vmem:[#allocation3 + $0x108] sm:$0xff]
  %v2581 = vmax.f32 %v2579, %v2580
  %v2582 = vmax.f32 %v2578, %v2581
  %v2583 = vadd.f32 %v2582, %v2540
  %v2584 = vpack.c.bf16 %v2583, %v2583
  %2585 = vst.msk [vmem:[#allocation4 + $0x20] sm:$0xf] %vm2544, %v2584
  %v2586 = vld [vmem:[#allocation3 + $0x50] sm:$0xff]
  %v2587 = vld [vmem:[#allocation3 + $0x58] sm:$0xff]
  %v2588 = vmax.f32 %v2586, %v2587
  %v2589 = vld [vmem:[#allocation3 + $0x110] sm:$0xff]
  %v2590 = vld [vmem:[#allocation3 + $0x118] sm:$0xff]
  %v2591 = vmax.f32 %v2589, %v2590
  %v2592 = vmax.f32 %v2588, %v2591
  %v2593 = vadd.f32 %v2592, %v2540
  %v2594 = vpack.c.bf16 %v2593, %v2593
  %2595 = vst.msk [vmem:[#allocation4 + $0x24] sm:$0xf] %vm2544, %v2594
  %v2596 = vld [vmem:[#allocation3 + $0x180] sm:$0xff]
  %v2597 = vld [vmem:[#allocation3 + $0x188] sm:$0xff]
  %v2598 = vmax.f32 %v2596, %v2597
  %v2599 = vld [vmem:[#allocation3 + $0x240] sm:$0xff]
  %v2600 = vld [vmem:[#allocation3 + $0x248] sm:$0xff]
  %v2601 = vmax.f32 %v2599, %v2600
  %v2602 = vmax.f32 %v2598, %v2601
  %v2603 = vadd.f32 %v2602, %v2540
  %v2604 = vpack.c.bf16 %v2603, %v2603
  %2605 = vst.msk [vmem:[#allocation4 + $0x8] sm:$0xf] %vm2544, %v2604
  %v2606 = vld [vmem:[#allocation3 + $0x190] sm:$0xff]
  %v2607 = vld [vmem:[#allocation3 + $0x198] sm:$0xff]
  %v2608 = vmax.f32 %v2606, %v2607
  %v2609 = vld [vmem:[#allocation3 + $0x250] sm:$0xff]
  %v2610 = vld [vmem:[#allocation3 + $0x258] sm:$0xff]
  %v2611 = vmax.f32 %v2609, %v2610
  %v2612 = vmax.f32 %v2608, %v2611
  %v2613 = vadd.f32 %v2612, %v2540
  %v2614 = vpack.c.bf16 %v2613, %v2613
  %2615 = vst.msk [vmem:[#allocation4 + $0xc] sm:$0xf] %vm2544, %v2614
  %v2616 = vld [vmem:[#allocation3 + $0x1a0] sm:$0xff]
  %v2617 = vld [vmem:[#allocation3 + $0x1a8] sm:$0xff]
  %v2618 = vmax.f32 %v2616, %v2617
  %v2619 = vld [vmem:[#allocation3 + $0x260] sm:$0xff]
  %v2620 = vld [vmem:[#allocation3 + $0x268] sm:$0xff]
  %v2621 = vmax.f32 %v2619, %v2620
  %v2622 = vmax.f32 %v2618, %v2621
  %v2623 = vadd.f32 %v2622, %v2540
  %v2624 = vpack.c.bf16 %v2623, %v2623
  %2625 = vst.msk [vmem:[#allocation4 + $0x18] sm:$0xf] %vm2544, %v2624
  %v2626 = vld [vmem:[#allocation3 + $0x1b0] sm:$0xff]
  %v2627 = vld [vmem:[#allocation3 + $0x1b8] sm:$0xff]
  %v2628 = vmax.f32 %v2626, %v2627
  %v2629 = vld [vmem:[#allocation3 + $0x270] sm:$0xff]
  %v2630 = vld [vmem:[#allocation3 + $0x278] sm:$0xff]
  %v2631 = vmax.f32 %v2629, %v2630
  %v2632 = vmax.f32 %v2628, %v2631
  %v2633 = vadd.f32 %v2632, %v2540
  %v2634 = vpack.c.bf16 %v2633, %v2633
  %2635 = vst.msk [vmem:[#allocation4 + $0x1c] sm:$0xf] %vm2544, %v2634
  %v2636 = vld [vmem:[#allocation3 + $0x1c0] sm:$0xff]
  %v2637 = vld [vmem:[#allocation3 + $0x1c8] sm:$0xff]
  %v2638 = vmax.f32 %v2636, %v2637
  %v2639 = vld [vmem:[#allocation3 + $0x280] sm:$0xff]
  %v2640 = vld [vmem:[#allocation3 + $0x288] sm:$0xff]
  %v2641 = vmax.f32 %v2639, %v2640
  %v2642 = vmax.f32 %v2638, %v2641
  %v2643 = vadd.f32 %v2642, %v2540
  %v2644 = vpack.c.bf16 %v2643, %v2643
  %2645 = vst.msk [vmem:[#allocation4 + $0x28] sm:$0xf] %vm2544, %v2644
  %v2646 = vld [vmem:[#allocation3 + $0x1d0] sm:$0xff]
  %v2647 = vld [vmem:[#allocation3 + $0x1d8] sm:$0xff]
  %v2648 = vmax.f32 %v2646, %v2647
  %v2649 = vld [vmem:[#allocation3 + $0x290] sm:$0xff]
  %v2650 = vld [vmem:[#allocation3 + $0x298] sm:$0xff]
  %v2651 = vmax.f32 %v2649, %v2650
  %v2652 = vmax.f32 %v2648, %v2651
  %v2653 = vadd.f32 %v2652, %v2540
  %v2654 = vpack.c.bf16 %v2653, %v2653
  %2655 = vst.msk [vmem:[#allocation4 + $0x2c] sm:$0xf] %vm2544, %v2654
  %v2656 = vld [vmem:[#allocation3 + $0x300] sm:$0xff]
  %v2657 = vld [vmem:[#allocation3 + $0x308] sm:$0xff]
  %v2658 = vmax.f32 %v2656, %v2657
  %v2659 = vld [vmem:[#allocation3 + $0x3c0] sm:$0xff]
  %v2660 = vld [vmem:[#allocation3 + $0x3c8] sm:$0xff]
  %v2661 = vmax.f32 %v2659, %v2660
  %v2662 = vmax.f32 %v2658, %v2661
  %v2663 = vadd.f32 %v2662, %v2540
  %v2664 = vpack.c.bf16 %v2663, %v2663
  %2665 = vst.msk [vmem:[#allocation4 + $0x30] sm:$0xf] %vm2544, %v2664
  %v2666 = vld [vmem:[#allocation3 + $0x310] sm:$0xff]
  %v2667 = vld [vmem:[#allocation3 + $0x318] sm:$0xff]
  %v2668 = vmax.f32 %v2666, %v2667
  %v2669 = vld [vmem:[#allocation3 + $0x3d0] sm:$0xff]
  %v2670 = vld [vmem:[#allocation3 + $0x3d8] sm:$0xff]
  %v2671 = vmax.f32 %v2669, %v2670
  %v2672 = vmax.f32 %v2668, %v2671
  %v2673 = vadd.f32 %v2672, %v2540
  %v2674 = vpack.c.bf16 %v2673, %v2673
  %2675 = vst.msk [vmem:[#allocation4 + $0x34] sm:$0xf] %vm2544, %v2674
  %v2676 = vld [vmem:[#allocation3 + $0x320] sm:$0xff]
  %v2677 = vld [vmem:[#allocation3 + $0x328] sm:$0xff]
  %v2678 = vmax.f32 %v2676, %v2677
  %v2679 = vld [vmem:[#allocation3 + $0x3e0] sm:$0xff]
  %v2680 = vld [vmem:[#allocation3 + $0x3e8] sm:$0xff]
  %v2681 = vmax.f32 %v2679, %v2680
  %v2682 = vmax.f32 %v2678, %v2681
  %v2683 = vadd.f32 %v2682, %v2540
  %v2684 = vpack.c.bf16 %v2683, %v2683
  %2685 = vst.msk [vmem:[#allocation4 + $0x40] sm:$0xf] %vm2544, %v2684
  %v2686 = vld [vmem:[#allocation3 + $0x330] sm:$0xff]
  %v2687 = vld [vmem:[#allocation3 + $0x338] sm:$0xff]
  %v2688 = vmax.f32 %v2686, %v2687
  %v2689 = vld [vmem:[#allocation3 + $0x3f0] sm:$0xff]
  %v2690 = vld [vmem:[#allocation3 + $0x3f8] sm:$0xff]
  %v2691 = vmax.f32 %v2689, %v2690
  %v2692 = vmax.f32 %v2688, %v2691
  %v2693 = vadd.f32 %v2692, %v2540
  %v2694 = vpack.c.bf16 %v2693, %v2693
  %2695 = vst.msk [vmem:[#allocation4 + $0x44] sm:$0xf] %vm2544, %v2694
  %v2696 = vld [vmem:[#allocation3 + $0x340] sm:$0xff]
  %v2697 = vld [vmem:[#allocation3 + $0x348] sm:$0xff]
  %v2698 = vmax.f32 %v2696, %v2697
  %v2699 = vld [vmem:[#allocation3 + $0x400] sm:$0xff]
  %v2700 = vld [vmem:[#allocation3 + $0x408] sm:$0xff]
  %v2701 = vmax.f32 %v2699, %v2700
  %v2702 = vmax.f32 %v2698, %v2701
  %v2703 = vadd.f32 %v2702, %v2540
  %v2704 = vpack.c.bf16 %v2703, %v2703
  %2705 = vst.msk [vmem:[#allocation4 + $0x50] sm:$0xf] %vm2544, %v2704
  %v2706 = vld [vmem:[#allocation3 + $0x350] sm:$0xff]
  %v2707 = vld [vmem:[#allocation3 + $0x358] sm:$0xff]
  %v2708 = vmax.f32 %v2706, %v2707
  %v2709 = vld [vmem:[#allocation3 + $0x410] sm:$0xff]
  %v2710 = vld [vmem:[#allocation3 + $0x418] sm:$0xff]
  %v2711 = vmax.f32 %v2709, %v2710
  %v2712 = vmax.f32 %v2708, %v2711
  %v2713 = vadd.f32 %v2712, %v2540
  %v2714 = vpack.c.bf16 %v2713, %v2713
  %2715 = vst.msk [vmem:[#allocation4 + $0x54] sm:$0xf] %vm2544, %v2714
  %v2716 = vld [vmem:[#allocation3 + $0x480] sm:$0xff]
  %v2717 = vld [vmem:[#allocation3 + $0x488] sm:$0xff]
  %v2718 = vmax.f32 %v2716, %v2717
  %v2719 = vld [vmem:[#allocation3 + $0x540] sm:$0xff]
  %v2720 = vld [vmem:[#allocation3 + $0x548] sm:$0xff]
  %v2721 = vmax.f32 %v2719, %v2720
  %v2722 = vmax.f32 %v2718, %v2721
  %v2723 = vadd.f32 %v2722, %v2540
  %v2724 = vpack.c.bf16 %v2723, %v2723
  %2725 = vst.msk [vmem:[#allocation4 + $0x38] sm:$0xf] %vm2544, %v2724
  %v2726 = vld [vmem:[#allocation3 + $0x490] sm:$0xff]
  %v2727 = vld [vmem:[#allocation3 + $0x498] sm:$0xff]
  %v2728 = vmax.f32 %v2726, %v2727
  %v2729 = vld [vmem:[#allocation3 + $0x550] sm:$0xff]
  %v2730 = vld [vmem:[#allocation3 + $0x558] sm:$0xff]
  %v2731 = vmax.f32 %v2729, %v2730
  %v2732 = vmax.f32 %v2728, %v2731
  %v2733 = vadd.f32 %v2732, %v2540
  %v2734 = vpack.c.bf16 %v2733, %v2733
  %2735 = vst.msk [vmem:[#allocation4 + $0x3c] sm:$0xf] %vm2544, %v2734
  %v2736 = vld [vmem:[#allocation3 + $0x4a0] sm:$0xff]
  %v2737 = vld [vmem:[#allocation3 + $0x4a8] sm:$0xff]
  %v2738 = vmax.f32 %v2736, %v2737
  %v2739 = vld [vmem:[#allocation3 + $0x560] sm:$0xff]
  %v2740 = vld [vmem:[#allocation3 + $0x568] sm:$0xff]
  %v2741 = vmax.f32 %v2739, %v2740
  %v2742 = vmax.f32 %v2738, %v2741
  %v2743 = vadd.f32 %v2742, %v2540
  %v2744 = vpack.c.bf16 %v2743, %v2743
  %2745 = vst.msk [vmem:[#allocation4 + $0x48] sm:$0xf] %vm2544, %v2744
  %v2746 = vld [vmem:[#allocation3 + $0x4b0] sm:$0xff]
  %v2747 = vld [vmem:[#allocation3 + $0x4b8] sm:$0xff]
  %v2748 = vmax.f32 %v2746, %v2747
  %v2749 = vld [vmem:[#allocation3 + $0x570] sm:$0xff]
  %v2750 = vld [vmem:[#allocation3 + $0x578] sm:$0xff]
  %v2751 = vmax.f32 %v2749, %v2750
  %v2752 = vmax.f32 %v2748, %v2751
  %v2753 = vadd.f32 %v2752, %v2540
  %v2754 = vpack.c.bf16 %v2753, %v2753
  %2755 = vst.msk [vmem:[#allocation4 + $0x4c] sm:$0xf] %vm2544, %v2754
  %v2756 = vld [vmem:[#allocation3 + $0x4c0] sm:$0xff]
  %v2757 = vld [vmem:[#allocation3 + $0x4c8] sm:$0xff]
  %v2758 = vmax.f32 %v2756, %v2757
  %v2759 = vld [vmem:[#allocation3 + $0x580] sm:$0xff]
  %v2760 = vld [vmem:[#allocation3 + $0x588] sm:$0xff]
  %v2761 = vmax.f32 %v2759, %v2760
  %v2762 = vmax.f32 %v2758, %v2761
  %v2763 = vadd.f32 %v2762, %v2540
  %v2764 = vpack.c.bf16 %v2763, %v2763
  %2765 = vst.msk [vmem:[#allocation4 + $0x58] sm:$0xf] %vm2544, %v2764
  %v2766 = vld [vmem:[#allocation3 + $0x4d0] sm:$0xff]
  %v2767 = vld [vmem:[#allocation3 + $0x4d8] sm:$0xff]
  %v2768 = vmax.f32 %v2766, %v2767
  %v2769 = vld [vmem:[#allocation3 + $0x590] sm:$0xff]
  %v2770 = vld [vmem:[#allocation3 + $0x598] sm:$0xff]
  %v2771 = vmax.f32 %v2769, %v2770
  %v2772 = vmax.f32 %v2768, %v2771
  %v2773 = vadd.f32 %v2772, %v2540
  %v2774 = vpack.c.bf16 %v2773, %v2773
  %2775 = vst.msk [vmem:[#allocation4 + $0x5c] sm:$0xf] %vm2544, %v2774
  %v2776 = vld [vmem:[#allocation3 + $0x600] sm:$0xff]
  %v2777 = vld [vmem:[#allocation3 + $0x608] sm:$0xff]
  %v2778 = vmax.f32 %v2776, %v2777
  %v2779 = vld [vmem:[#allocation3 + $0x6c0] sm:$0xff]
  %v2780 = vld [vmem:[#allocation3 + $0x6c8] sm:$0xff]
  %v2781 = vmax.f32 %v2779, %v2780
  %v2782 = vmax.f32 %v2778, %v2781
  %v2783 = vadd.f32 %v2782, %v2540
  %v2784 = vpack.c.bf16 %v2783, %v2783
  %2785 = vst.msk [vmem:[#allocation4 + $0x60] sm:$0xf] %vm2544, %v2784
  %v2786 = vld [vmem:[#allocation3 + $0x610] sm:$0xff]
  %v2787 = vld [vmem:[#allocation3 + $0x618] sm:$0xff]
  %v2788 = vmax.f32 %v2786, %v2787
  %v2789 = vld [vmem:[#allocation3 + $0x6d0] sm:$0xff]
  %v2790 = vld [vmem:[#allocation3 + $0x6d8] sm:$0xff]
  %v2791 = vmax.f32 %v2789, %v2790
  %v2792 = vmax.f32 %v2788, %v2791
  %v2793 = vadd.f32 %v2792, %v2540
  %v2794 = vpack.c.bf16 %v2793, %v2793
  %2795 = vst.msk [vmem:[#allocation4 + $0x64] sm:$0xf] %vm2544, %v2794
  %v2796 = vld [vmem:[#allocation3 + $0x620] sm:$0xff]
  %v2797 = vld [vmem:[#allocation3 + $0x628] sm:$0xff]
  %v2798 = vmax.f32 %v2796, %v2797
  %v2799 = vld [vmem:[#allocation3 + $0x6e0] sm:$0xff]
  %v2800 = vld [vmem:[#allocation3 + $0x6e8] sm:$0xff]
  %v2801 = vmax.f32 %v2799, %v2800
  %v2802 = vmax.f32 %v2798, %v2801
  %v2803 = vadd.f32 %v2802, %v2540
  %v2804 = vpack.c.bf16 %v2803, %v2803
  %2805 = vst.msk [vmem:[#allocation4 + $0x70] sm:$0xf] %vm2544, %v2804
  %v2806 = vld [vmem:[#allocation3 + $0x630] sm:$0xff]
  %v2807 = vld [vmem:[#allocation3 + $0x638] sm:$0xff]
  %v2808 = vmax.f32 %v2806, %v2807
  %v2809 = vld [vmem:[#allocation3 + $0x6f0] sm:$0xff]
  %v2810 = vld [vmem:[#allocation3 + $0x6f8] sm:$0xff]
  %v2811 = vmax.f32 %v2809, %v2810
  %v2812 = vmax.f32 %v2808, %v2811
  %v2813 = vadd.f32 %v2812, %v2540
  %v2814 = vpack.c.bf16 %v2813, %v2813
  %2815 = vst.msk [vmem:[#allocation4 + $0x74] sm:$0xf] %vm2544, %v2814
  %v2816 = vld [vmem:[#allocation3 + $0x640] sm:$0xff]
  %v2817 = vld [vmem:[#allocation3 + $0x648] sm:$0xff]
  %v2818 = vmax.f32 %v2816, %v2817
  %v2819 = vld [vmem:[#allocation3 + $0x700] sm:$0xff]
  %v2820 = vld [vmem:[#allocation3 + $0x708] sm:$0xff]
  %v2821 = vmax.f32 %v2819, %v2820
  %v2822 = vmax.f32 %v2818, %v2821
  %v2823 = vadd.f32 %v2822, %v2540
  %v2824 = vpack.c.bf16 %v2823, %v2823
  %2825 = vst.msk [vmem:[#allocation4 + $0x80] sm:$0xf] %vm2544, %v2824
  %v2826 = vld [vmem:[#allocation3 + $0x650] sm:$0xff]
  %v2827 = vld [vmem:[#allocation3 + $0x658] sm:$0xff]
  %v2828 = vmax.f32 %v2826, %v2827
  %v2829 = vld [vmem:[#allocation3 + $0x710] sm:$0xff]
  %v2830 = vld [vmem:[#allocation3 + $0x718] sm:$0xff]
  %v2831 = vmax.f32 %v2829, %v2830
  %v2832 = vmax.f32 %v2828, %v2831
  %v2833 = vadd.f32 %v2832, %v2540
  %v2834 = vpack.c.bf16 %v2833, %v2833
  %2835 = vst.msk [vmem:[#allocation4 + $0x84] sm:$0xf] %vm2544, %v2834
  %v2836 = vld [vmem:[#allocation3 + $0x780] sm:$0xff]
  %v2837 = vld [vmem:[#allocation3 + $0x788] sm:$0xff]
  %v2838 = vmax.f32 %v2836, %v2837
  %v2839 = vld [vmem:[#allocation3 + $0x840] sm:$0xff]
  %v2840 = vld [vmem:[#allocation3 + $0x848] sm:$0xff]
  %v2841 = vmax.f32 %v2839, %v2840
  %v2842 = vmax.f32 %v2838, %v2841
  %v2843 = vadd.f32 %v2842, %v2540
  %v2844 = vpack.c.bf16 %v2843, %v2843
  %2845 = vst.msk [vmem:[#allocation4 + $0x68] sm:$0xf] %vm2544, %v2844
  %v2846 = vld [vmem:[#allocation3 + $0x790] sm:$0xff]
  %v2847 = vld [vmem:[#allocation3 + $0x798] sm:$0xff]
  %v2848 = vmax.f32 %v2846, %v2847
  %v2849 = vld [vmem:[#allocation3 + $0x850] sm:$0xff]
  %v2850 = vld [vmem:[#allocation3 + $0x858] sm:$0xff]
  %v2851 = vmax.f32 %v2849, %v2850
  %v2852 = vmax.f32 %v2848, %v2851
  %v2853 = vadd.f32 %v2852, %v2540
  %v2854 = vpack.c.bf16 %v2853, %v2853
  %2855 = vst.msk [vmem:[#allocation4 + $0x6c] sm:$0xf] %vm2544, %v2854
  %v2856 = vld [vmem:[#allocation3 + $0x7a0] sm:$0xff]
  %v2857 = vld [vmem:[#allocation3 + $0x7a8] sm:$0xff]
  %v2858 = vmax.f32 %v2856, %v2857
  %v2859 = vld [vmem:[#allocation3 + $0x860] sm:$0xff]
  %v2860 = vld [vmem:[#allocation3 + $0x868] sm:$0xff]
  %v2861 = vmax.f32 %v2859, %v2860
  %v2862 = vmax.f32 %v2858, %v2861
  %v2863 = vadd.f32 %v2862, %v2540
  %v2864 = vpack.c.bf16 %v2863, %v2863
  %2865 = vst.msk [vmem:[#allocation4 + $0x78] sm:$0xf] %vm2544, %v2864
  %v2866 = vld [vmem:[#allocation3 + $0x7b0] sm:$0xff]
  %v2867 = vld [vmem:[#allocation3 + $0x7b8] sm:$0xff]
  %v2868 = vmax.f32 %v2866, %v2867
  %v2869 = vld [vmem:[#allocation3 + $0x870] sm:$0xff]
  %v2870 = vld [vmem:[#allocation3 + $0x878] sm:$0xff]
  %v2871 = vmax.f32 %v2869, %v2870
  %v2872 = vmax.f32 %v2868, %v2871
  %v2873 = vadd.f32 %v2872, %v2540
  %v2874 = vpack.c.bf16 %v2873, %v2873
  %2875 = vst.msk [vmem:[#allocation4 + $0x7c] sm:$0xf] %vm2544, %v2874
  %v2876 = vld [vmem:[#allocation3 + $0x7c0] sm:$0xff]
  %v2877 = vld [vmem:[#allocation3 + $0x7c8] sm:$0xff]
  %v2878 = vmax.f32 %v2876, %v2877
  %v2879 = vld [vmem:[#allocation3 + $0x880] sm:$0xff]
  %v2880 = vld [vmem:[#allocation3 + $0x888] sm:$0xff]
  %v2881 = vmax.f32 %v2879, %v2880
  %v2882 = vmax.f32 %v2878, %v2881
  %v2883 = vadd.f32 %v2882, %v2540
  %v2884 = vpack.c.bf16 %v2883, %v2883
  %2885 = vst.msk [vmem:[#allocation4 + $0x88] sm:$0xf] %vm2544, %v2884
  %v2886 = vld [vmem:[#allocation3 + $0x7d0] sm:$0xff]
  %v2887 = vld [vmem:[#allocation3 + $0x7d8] sm:$0xff]
  %v2888 = vmax.f32 %v2886, %v2887
  %v2889 = vld [vmem:[#allocation3 + $0x890] sm:$0xff]
  %v2890 = vld [vmem:[#allocation3 + $0x898] sm:$0xff]
  %v2891 = vmax.f32 %v2889, %v2890
  %v2892 = vmax.f32 %v2888, %v2891
  %v2893 = vadd.f32 %v2892, %v2540
  %v2894 = vpack.c.bf16 %v2893, %v2893
  %2895 = vst.msk [vmem:[#allocation4 + $0x8c] sm:$0xf] %vm2544, %v2894
  %v2896 = vld [vmem:[#allocation4] sm:$0xf]
  %v2897 = vld [vmem:[#allocation4 + $0x4] sm:$0xf]
  %v2898 = vld [vmem:[#allocation4 + $0x8] sm:$0xf]
  %v2899 = vld [vmem:[#allocation4 + $0xc] sm:$0xf]
  %v2900 = vld [vmem:[#allocation4 + $0x10] sm:$0xf]
  %v2901 = vld [vmem:[#allocation4 + $0x14] sm:$0xf]
  %v2902 = vld [vmem:[#allocation4 + $0x18] sm:$0xf]
  %v2903 = vld [vmem:[#allocation4 + $0x1c] sm:$0xf]
  %v2904 = vld [vmem:[#allocation4 + $0x20] sm:$0xf]
  %v2905 = vld [vmem:[#allocation4 + $0x24] sm:$0xf]
  %v2906 = vld [vmem:[#allocation4 + $0x28] sm:$0xf]
  %v2907 = vld [vmem:[#allocation4 + $0x2c] sm:$0xf]
  %v2908 = vld [vmem:[#allocation4 + $0x30] sm:$0xf]
  %v2909 = vld [vmem:[#allocation4 + $0x34] sm:$0xf]
  %v2910 = vld [vmem:[#allocation4 + $0x38] sm:$0xf]
  %v2911 = vld [vmem:[#allocation4 + $0x3c] sm:$0xf]
  %v2912 = vld [vmem:[#allocation4 + $0x40] sm:$0xf]
  %v2913 = vld [vmem:[#allocation4 + $0x44] sm:$0xf]
  %v2914 = vld [vmem:[#allocation4 + $0x48] sm:$0xf]
  %v2915 = vld [vmem:[#allocation4 + $0x4c] sm:$0xf]
  %v2916 = vld [vmem:[#allocation4 + $0x50] sm:$0xf]
  %v2917 = vld [vmem:[#allocation4 + $0x54] sm:$0xf]
  %v2918 = vld [vmem:[#allocation4 + $0x58] sm:$0xf]
  %v2919 = vld [vmem:[#allocation4 + $0x5c] sm:$0xf]
  %v2920 = vld [vmem:[#allocation4 + $0x60] sm:$0xf]
  %v2921 = vld [vmem:[#allocation4 + $0x64] sm:$0xf]
  %v2922 = vld [vmem:[#allocation4 + $0x68] sm:$0xf]
  %v2923 = vld [vmem:[#allocation4 + $0x6c] sm:$0xf]
  %v2924 = vld [vmem:[#allocation4 + $0x70] sm:$0xf]
  %v2925 = vld [vmem:[#allocation4 + $0x74] sm:$0xf]
  %v2926 = vld [vmem:[#allocation4 + $0x78] sm:$0xf]
  %v2927 = vld [vmem:[#allocation4 + $0x7c] sm:$0xf]
  %v2928 = vld [vmem:[#allocation4 + $0x80] sm:$0xf]
  %v2929 = vld [vmem:[#allocation4 + $0x84] sm:$0xf]
  %v2930 = vld [vmem:[#allocation4 + $0x88] sm:$0xf]
  %v2931 = vld [vmem:[#allocation4 + $0x8c] sm:$0xf]
  %v2932 = vld [vmem:[%s5] sm:$0xf]
  %v2933 = vld [vmem:[%s5 + $0x4] sm:$0xf]
  %v2934 = vld [vmem:[%s5 + $0x8] sm:$0xf]
  %v2935 = vld [vmem:[%s5 + $0xc] sm:$0xf]
  %v2936 = vld [vmem:[%s5 + $0x10] sm:$0xf]
  %v2937 = vld [vmem:[%s5 + $0x14] sm:$0xf]
  %v2938 = vld [vmem:[%s5 + $0x18] sm:$0xf]
  %v2939 = vld [vmem:[%s5 + $0x1c] sm:$0xf]
  %v2976 = vunpack.c.l.b16 %v2896
  %v2977 = vunpack.c.l.b16 %v2897
  %v2978 = vunpack.c.l.b16 %v2898
  %v2979 = vunpack.c.l.b16 %v2899
  %v2980 = vunpack.c.l.b16 %v2900
  %v2981 = vunpack.c.l.b16 %v2901
  %v2982 = vunpack.c.l.b16 %v2902
  %v2983 = vunpack.c.l.b16 %v2903
  %v2984 = vunpack.c.l.b16 %v2904
  %v2985 = vunpack.c.l.b16 %v2905
  %v2986 = vunpack.c.l.b16 %v2906
  %v2987 = vunpack.c.l.b16 %v2907
  %v2988 = vunpack.c.l.b16 %v2908
  %v2989 = vunpack.c.l.b16 %v2909
  %v2990 = vunpack.c.l.b16 %v2910
  %v2991 = vunpack.c.l.b16 %v2911
  %v2992 = vunpack.c.l.b16 %v2912
  %v2993 = vunpack.c.l.b16 %v2913
  %v2994 = vunpack.c.l.b16 %v2914
  %v2995 = vunpack.c.l.b16 %v2915
  %v2996 = vunpack.c.l.b16 %v2916
  %v2997 = vunpack.c.l.b16 %v2917
  %v2998 = vunpack.c.l.b16 %v2918
  %v2999 = vunpack.c.l.b16 %v2919
  %v3000 = vunpack.c.l.b16 %v2920
  %v3001 = vunpack.c.l.b16 %v2921
  %v3002 = vunpack.c.l.b16 %v2922
  %v3003 = vunpack.c.l.b16 %v2923
  %v3004 = vunpack.c.l.b16 %v2924
  %v3005 = vunpack.c.l.b16 %v2925
  %v3006 = vunpack.c.l.b16 %v2926
  %v3007 = vunpack.c.l.b16 %v2927
  %v3008 = vunpack.c.l.b16 %v2928
  %v3009 = vunpack.c.l.b16 %v2929
  %v3010 = vunpack.c.l.b16 %v2930
  %v3011 = vunpack.c.l.b16 %v2931
  %v3012 = vpack.c.b16 %v2977, %v2976
  %v3013 = vpack.c.b16 %v2979, %v2978
  %v3014 = vpack.c.b16 %v2981, %v2980
  %v3015 = vpack.c.b16 %v2983, %v2982
  %v3016 = vpack.c.b16 %v2985, %v2984
  %v3017 = vpack.c.b16 %v2987, %v2986
  %v3018 = vpack.c.b16 %v2989, %v2988
  %v3019 = vpack.c.b16 %v2991, %v2990
  %v3020 = vpack.c.b16 %v2993, %v2992
  %v3021 = vpack.c.b16 %v2995, %v2994
  %v3022 = vpack.c.b16 %v2997, %v2996
  %v3023 = vpack.c.b16 %v2999, %v2998
  %v3024 = vpack.c.b16 %v3001, %v3000
  %v3025 = vpack.c.b16 %v3003, %v3002
  %v3026 = vpack.c.b16 %v3005, %v3004
  %v3027 = vpack.c.b16 %v3007, %v3006
  %v3028 = vpack.c.b16 %v3009, %v3008
  %v3029 = vpack.c.b16 %v3011, %v3010
  %v3038 = vunpack.c.l.b16 %v2932
  %v3039 = vunpack.c.l.b16 %v2933
  %v3040 = vunpack.c.l.b16 %v2934
  %v3041 = vunpack.c.l.b16 %v2935
  %v3042 = vunpack.c.l.b16 %v2936
  %v3043 = vunpack.c.l.b16 %v2937
  %v3044 = vunpack.c.l.b16 %v2938
  %v3045 = vunpack.c.l.b16 %v2939
  %v3046 = vpack.c.b16 %v3039, %v3038
  %v3047 = vpack.c.b16 %v3041, %v3040
  %v3048 = vpack.c.b16 %v3043, %v3042
  %v3049 = vpack.c.b16 %v3045, %v3044
  %vm3054 = vcmask 523264
  %v3056 = vsel %vm3054, %v3012, 0
  %v3059 = vsel %vm3054, %v3013, 0
  %v3062 = vsel %vm3054, %v3014, 0
  %v3065 = vsel %vm3054, %v3015, 0
  %v3068 = vsel %vm3054, %v3016, 0
  %v3071 = vsel %vm3054, %v3017, 0
  %v3074 = vsel %vm3054, %v3018, 0
  %v3077 = vsel %vm3054, %v3019, 0
  %v3080 = vsel %vm3054, %v3020, 0
  %v3083 = vsel %vm3054, %v3021, 0
  %v3086 = vsel %vm3054, %v3022, 0
  %v3089 = vsel %vm3054, %v3023, 0
  %v3092 = vsel %vm3054, %v3024, 0
  %v3095 = vsel %vm3054, %v3025, 0
  %v3098 = vsel %vm3054, %v3026, 0
  %v3101 = vsel %vm3054, %v3027, 0
  %v3104 = vsel %vm3054, %v3028, 0
  %v3107 = vsel %vm3054, %v3029, 0
  %3109 = vmatprep.subr.bf16.mxu0 0
  %3110 = vmatpush1.bf16.msra.mxu0 0
  %3111 = vmatprep.subr.bf16.mxu0 0
  %3112 = vmatpush1.bf16.msra.mxu0 0
  %3113 = vmatprep.subr.bf16.mxu0 0
  %3114 = vmatpush1.bf16.msra.mxu0 0
  %3115 = vmatprep.subr.bf16.mxu0 0
  %3116 = vmatpush1.bf16.msra.mxu0 0
  %3117 = vmatprep.subr.bf16.mxu0 0
  %3118 = vmatpush1.bf16.msra.mxu0 %v3049
  %3119 = vmatprep.subr.bf16.mxu0 0
  %3120 = vmatpush1.bf16.msra.mxu0 %v3048
  %3121 = vmatprep.subr.bf16.mxu0 0
  %3122 = vmatpush1.bf16.msra.mxu0 %v3047
  %3123 = vmatprep.subr.bf16.mxu0 0
  %3124 = vmatpush1.bf16.msra.mxu0 %v3046
  %3125 = vmatprep.subr.bf16.mxu0 0
  %3126 = vmatpush2.bf16.msra.mxu0 0
  %3127 = vmatprep.subr.bf16.mxu0 0
  %3128 = vmatpush2.bf16.msra.mxu0 0
  %3129 = vmatprep.subr.bf16.mxu0 0
  %3130 = vmatpush2.bf16.msra.mxu0 0
  %3131 = vmatprep.subr.bf16.mxu0 0
  %3132 = vmatpush2.bf16.msra.mxu0 0
  %3133 = vmatprep.subr.bf16.mxu0 0
  %3134 = vmatpush2.bf16.msra.mxu0 0
  %3135 = vmatprep.subr.bf16.mxu0 0
  %3136 = vmatpush2.bf16.msra.mxu0 0
  %3137 = vmatprep.subr.bf16.mxu0 0
  %3138 = vmatpush2.bf16.msra.mxu0 0
  %3139 = vmatprep.subr.bf16.mxu0 0
  %3140 = vmatpush2.bf16.msra.mxu0 0
  %3141 = vmatprep.mubr.bf16.mxu0 0
  %3142 = vmatmul.mubr.bf16.gmra.mxu0 %v3056
  %v3143 = vpop.f32.mrf.mxu0
  %v3144 = vadd.f32 0.0, %v3143
  %v3145 = vpop.f32.mrf.mxu0
  %v3146 = vpop.f32.mrf.mxu0
  %v3147 = vadd.f32 0.0, %v3146
  %v3148 = vpop.f32.mrf.mxu0
  %3149 = vmatprep.mubr.bf16.mxu0 0
  %3150 = vmatmul.mubr.bf16.gmra.mxu0 %v3059
  %v3151 = vpop.f32.mrf.mxu0
  %v3152 = vadd.f32 0.0, %v3151
  %v3153 = vpop.f32.mrf.mxu0
  %v3154 = vpop.f32.mrf.mxu0
  %v3155 = vadd.f32 0.0, %v3154
  %v3156 = vpop.f32.mrf.mxu0
  %3157 = vmatprep.mubr.bf16.mxu0 0
  %3158 = vmatmul.mubr.bf16.gmra.mxu0 %v3062
  %v3159 = vpop.f32.mrf.mxu0
  %v3160 = vadd.f32 0.0, %v3159
  %v3161 = vpop.f32.mrf.mxu0
  %v3162 = vpop.f32.mrf.mxu0
  %v3163 = vadd.f32 0.0, %v3162
  %v3164 = vpop.f32.mrf.mxu0
  %3165 = vmatprep.mubr.bf16.mxu0 0
  %3166 = vmatmul.mubr.bf16.gmra.mxu0 %v3065
  %v3167 = vpop.f32.mrf.mxu0
  %v3168 = vadd.f32 0.0, %v3167
  %v3169 = vpop.f32.mrf.mxu0
  %v3170 = vpop.f32.mrf.mxu0
  %v3171 = vadd.f32 0.0, %v3170
  %v3172 = vpop.f32.mrf.mxu0
  %3173 = vmatprep.mubr.bf16.mxu0 0
  %3174 = vmatmul.mubr.bf16.gmra.mxu0 %v3068
  %v3175 = vpop.f32.mrf.mxu0
  %v3176 = vadd.f32 0.0, %v3175
  %v3177 = vpop.f32.mrf.mxu0
  %v3178 = vpop.f32.mrf.mxu0
  %v3179 = vadd.f32 0.0, %v3178
  %v3180 = vpop.f32.mrf.mxu0
  %3181 = vmatprep.mubr.bf16.mxu0 0
  %3182 = vmatmul.mubr.bf16.gmra.mxu0 %v3071
  %v3183 = vpop.f32.mrf.mxu0
  %v3184 = vadd.f32 0.0, %v3183
  %v3185 = vpop.f32.mrf.mxu0
  %v3186 = vpop.f32.mrf.mxu0
  %v3187 = vadd.f32 0.0, %v3186
  %v3188 = vpop.f32.mrf.mxu0
  %3189 = vmatprep.mubr.bf16.mxu0 0
  %3190 = vmatmul.mubr.bf16.gmra.mxu0 %v3074
  %v3191 = vpop.f32.mrf.mxu0
  %v3192 = vadd.f32 0.0, %v3191
  %v3193 = vpop.f32.mrf.mxu0
  %v3194 = vpop.f32.mrf.mxu0
  %v3195 = vadd.f32 0.0, %v3194
  %v3196 = vpop.f32.mrf.mxu0
  %3197 = vmatprep.mubr.bf16.mxu0 0
  %3198 = vmatmul.mubr.bf16.gmra.mxu0 %v3077
  %v3199 = vpop.f32.mrf.mxu0
  %v3200 = vadd.f32 0.0, %v3199
  %v3201 = vpop.f32.mrf.mxu0
  %v3202 = vpop.f32.mrf.mxu0
  %v3203 = vadd.f32 0.0, %v3202
  %v3204 = vpop.f32.mrf.mxu0
  %3205 = vmatprep.mubr.bf16.mxu0 0
  %3206 = vmatmul.mubr.bf16.gmra.mxu0 %v3080
  %v3207 = vpop.f32.mrf.mxu0
  %v3208 = vadd.f32 0.0, %v3207
  %v3209 = vpop.f32.mrf.mxu0
  %v3210 = vpop.f32.mrf.mxu0
  %v3211 = vadd.f32 0.0, %v3210
  %v3212 = vpop.f32.mrf.mxu0
  %3213 = vmatprep.mubr.bf16.mxu0 0
  %3214 = vmatmul.mubr.bf16.gmra.mxu0 %v3083
  %v3215 = vpop.f32.mrf.mxu0
  %v3216 = vadd.f32 0.0, %v3215
  %v3217 = vpop.f32.mrf.mxu0
  %v3218 = vpop.f32.mrf.mxu0
  %v3219 = vadd.f32 0.0, %v3218
  %v3220 = vpop.f32.mrf.mxu0
  %3221 = vmatprep.mubr.bf16.mxu0 0
  %3222 = vmatmul.mubr.bf16.gmra.mxu0 %v3086
  %v3223 = vpop.f32.mrf.mxu0
  %v3224 = vadd.f32 0.0, %v3223
  %v3225 = vpop.f32.mrf.mxu0
  %v3226 = vpop.f32.mrf.mxu0
  %v3227 = vadd.f32 0.0, %v3226
  %v3228 = vpop.f32.mrf.mxu0
  %3229 = vmatprep.mubr.bf16.mxu0 0
  %3230 = vmatmul.mubr.bf16.gmra.mxu0 %v3089
  %v3231 = vpop.f32.mrf.mxu0
  %v3232 = vadd.f32 0.0, %v3231
  %v3233 = vpop.f32.mrf.mxu0
  %v3234 = vpop.f32.mrf.mxu0
  %v3235 = vadd.f32 0.0, %v3234
  %v3236 = vpop.f32.mrf.mxu0
  %3237 = vmatprep.mubr.bf16.mxu0 0
  %3238 = vmatmul.mubr.bf16.gmra.mxu0 %v3092
  %v3239 = vpop.f32.mrf.mxu0
  %v3240 = vadd.f32 0.0, %v3239
  %v3241 = vpop.f32.mrf.mxu0
  %v3242 = vpop.f32.mrf.mxu0
  %v3243 = vadd.f32 0.0, %v3242
  %v3244 = vpop.f32.mrf.mxu0
  %3245 = vmatprep.mubr.bf16.mxu0 0
  %3246 = vmatmul.mubr.bf16.gmra.mxu0 %v3095
  %v3247 = vpop.f32.mrf.mxu0
  %v3248 = vadd.f32 0.0, %v3247
  %v3249 = vpop.f32.mrf.mxu0
  %v3250 = vpop.f32.mrf.mxu0
  %v3251 = vadd.f32 0.0, %v3250
  %v3252 = vpop.f32.mrf.mxu0
  %3253 = vmatprep.mubr.bf16.mxu0 0
  %3254 = vmatmul.mubr.bf16.gmra.mxu0 %v3098
  %v3255 = vpop.f32.mrf.mxu0
  %v3256 = vadd.f32 0.0, %v3255
  %v3257 = vpop.f32.mrf.mxu0
  %v3258 = vpop.f32.mrf.mxu0
  %v3259 = vadd.f32 0.0, %v3258
  %v3260 = vpop.f32.mrf.mxu0
  %3261 = vmatprep.mubr.bf16.mxu0 0
  %3262 = vmatmul.mubr.bf16.gmra.mxu0 %v3101
  %v3263 = vpop.f32.mrf.mxu0
  %v3264 = vadd.f32 0.0, %v3263
  %v3265 = vpop.f32.mrf.mxu0
  %v3266 = vpop.f32.mrf.mxu0
  %v3267 = vadd.f32 0.0, %v3266
  %v3268 = vpop.f32.mrf.mxu0
  %3269 = vmatprep.mubr.bf16.mxu0 0
  %3270 = vmatmul.mubr.bf16.gmra.mxu0 %v3104
  %v3271 = vpop.f32.mrf.mxu0
  %v3272 = vadd.f32 0.0, %v3271
  %v3273 = vpop.f32.mrf.mxu0
  %v3274 = vpop.f32.mrf.mxu0
  %v3275 = vadd.f32 0.0, %v3274
  %v3276 = vpop.f32.mrf.mxu0
  %3277 = vmatprep.mubr.bf16.mxu0 0
  %3278 = vmatmul.mubr.bf16.gmra.mxu0 %v3107
  %v3279 = vpop.f32.mrf.mxu0
  %v3280 = vadd.f32 0.0, %v3279
  %v3281 = vpop.f32.mrf.mxu0
  %v3282 = vpop.f32.mrf.mxu0
  %v3283 = vadd.f32 0.0, %v3282
  %v3284 = vpop.f32.mrf.mxu0
  %3285 = vdwg.mxu0
  %3286 = vst [vmem:[#allocation5] sm:$0xff] %v3144
  %3287 = vst [vmem:[#allocation5 + $0x8] sm:$0xff] %v3147
  %3288 = vst [vmem:[#allocation5 + $0x10] sm:$0xff] %v3152
  %3289 = vst [vmem:[#allocation5 + $0x18] sm:$0xff] %v3155
  %3290 = vst [vmem:[#allocation5 + $0x20] sm:$0xff] %v3160
  %3291 = vst [vmem:[#allocation5 + $0x28] sm:$0xff] %v3163
  %3292 = vst [vmem:[#allocation5 + $0x30] sm:$0xff] %v3168
  %3293 = vst [vmem:[#allocation5 + $0x38] sm:$0xff] %v3171
  %3294 = vst [vmem:[#allocation5 + $0x40] sm:$0xff] %v3176
  %3295 = vst [vmem:[#allocation5 + $0x48] sm:$0xff] %v3179
  %3296 = vst [vmem:[#allocation5 + $0x50] sm:$0xff] %v3184
  %3297 = vst [vmem:[#allocation5 + $0x58] sm:$0xff] %v3187
  %3298 = vst [vmem:[#allocation5 + $0x60] sm:$0xff] %v3192
  %3299 = vst [vmem:[#allocation5 + $0x68] sm:$0xff] %v3195
  %3300 = vst [vmem:[#allocation5 + $0x70] sm:$0xff] %v3200
  %3301 = vst [vmem:[#allocation5 + $0x78] sm:$0xff] %v3203
  %3302 = vst [vmem:[#allocation5 + $0x80] sm:$0xff] %v3208
  %3303 = vst [vmem:[#allocation5 + $0x88] sm:$0xff] %v3211
  %3304 = vst [vmem:[#allocation5 + $0x90] sm:$0xff] %v3216
  %3305 = vst [vmem:[#allocation5 + $0x98] sm:$0xff] %v3219
  %3306 = vst [vmem:[#allocation5 + $0xa0] sm:$0xff] %v3224
  %3307 = vst [vmem:[#allocation5 + $0xa8] sm:$0xff] %v3227
  %3308 = vst [vmem:[#allocation5 + $0xb0] sm:$0xff] %v3232
  %3309 = vst [vmem:[#allocation5 + $0xb8] sm:$0xff] %v3235
  %3310 = vst [vmem:[#allocation5 + $0xc0] sm:$0xff] %v3240
  %3311 = vst [vmem:[#allocation5 + $0xc8] sm:$0xff] %v3243
  %3312 = vst [vmem:[#allocation5 + $0xd0] sm:$0xff] %v3248
  %3313 = vst [vmem:[#allocation5 + $0xd8] sm:$0xff] %v3251
  %3314 = vst [vmem:[#allocation5 + $0xe0] sm:$0xff] %v3256
  %3315 = vst [vmem:[#allocation5 + $0xe8] sm:$0xff] %v3259
  %3316 = vst [vmem:[#allocation5 + $0xf0] sm:$0xff] %v3264
  %3317 = vst [vmem:[#allocation5 + $0xf8] sm:$0xff] %v3267
  %3318 = vst [vmem:[#allocation5 + $0x100] sm:$0xff] %v3272
  %3319 = vst [vmem:[#allocation5 + $0x108] sm:$0xff] %v3275
  %3320 = vst [vmem:[#allocation5 + $0x110] sm:$0xff] %v3280
  %3321 = vst [vmem:[#allocation5 + $0x118] sm:$0xff] %v3283
  %v3322 = vld [vmem:[%s6] sm:$0x1]
  %v3323 = vld [vmem:[#allocation5] sm:$0xff]
  %v3324 = vld [vmem:[#allocation5 + $0x8] sm:$0xff]
  %v3325 = vmax.f32 %v3323, %v3324
  %v3326 = vld [vmem:[#allocation5 + $0x10] sm:$0xff]
  %v3327 = vld [vmem:[#allocation5 + $0x18] sm:$0xff]
  %v3328 = vmax.f32 %v3326, %v3327
  %v3329 = vmax.f32 %v3325, %v3328
  %v3331 = vlaneseq
  %v3332 = vshrl.u32 %v3331, 7
  %v3333 = vsub.s32 0, %v3332
  %v3334 = vrot.slane %v3322, %v3333
  %v3336 = vadd.f32 %v3329, %v3334
  %v3337 = vpack.c.bf16 %v3336, %v3336
  %3338 = vst [vmem:[#allocation6] sm:$0xf] %v3337
  %v3339 = vld [vmem:[#allocation5 + $0x20] sm:$0xff]
  %v3340 = vld [vmem:[#allocation5 + $0x28] sm:$0xff]
  %v3341 = vmax.f32 %v3339, %v3340
  %v3342 = vld [vmem:[#allocation5 + $0x30] sm:$0xff]
  %v3343 = vld [vmem:[#allocation5 + $0x38] sm:$0xff]
  %v3344 = vmax.f32 %v3342, %v3343
  %v3345 = vmax.f32 %v3341, %v3344
  %v3346 = vadd.f32 %v3345, %v3334
  %v3347 = vpack.c.bf16 %v3346, %v3346
  %3348 = vst [vmem:[#allocation6 + $0x4] sm:$0xf] %v3347
  %v3349 = vld [vmem:[#allocation5 + $0x40] sm:$0xff]
  %v3350 = vld [vmem:[#allocation5 + $0x48] sm:$0xff]
  %v3351 = vmax.f32 %v3349, %v3350
  %v3352 = vld [vmem:[#allocation5 + $0x50] sm:$0xff]
  %v3353 = vld [vmem:[#allocation5 + $0x58] sm:$0xff]
  %v3354 = vmax.f32 %v3352, %v3353
  %v3355 = vmax.f32 %v3351, %v3354
  %v3356 = vadd.f32 %v3355, %v3334
  %v3357 = vpack.c.bf16 %v3356, %v3356
  %3358 = vst [vmem:[#allocation6 + $0x8] sm:$0xf] %v3357
  %v3359 = vld [vmem:[#allocation5 + $0x60] sm:$0xff]
  %v3360 = vld [vmem:[#allocation5 + $0x68] sm:$0xff]
  %v3361 = vmax.f32 %v3359, %v3360
  %v3362 = vld [vmem:[#allocation5 + $0x70] sm:$0xff]
  %v3363 = vld [vmem:[#allocation5 + $0x78] sm:$0xff]
  %v3364 = vmax.f32 %v3362, %v3363
  %v3365 = vmax.f32 %v3361, %v3364
  %v3366 = vadd.f32 %v3365, %v3334
  %v3367 = vpack.c.bf16 %v3366, %v3366
  %3368 = vst [vmem:[#allocation6 + $0xc] sm:$0xf] %v3367
  %v3369 = vld [vmem:[#allocation5 + $0x80] sm:$0xff]
  %v3370 = vld [vmem:[#allocation5 + $0x88] sm:$0xff]
  %v3371 = vmax.f32 %v3369, %v3370
  %v3372 = vld [vmem:[#allocation5 + $0x90] sm:$0xff]
  %v3373 = vld [vmem:[#allocation5 + $0x98] sm:$0xff]
  %v3374 = vmax.f32 %v3372, %v3373
  %v3375 = vmax.f32 %v3371, %v3374
  %v3376 = vadd.f32 %v3375, %v3334
  %v3377 = vpack.c.bf16 %v3376, %v3376
  %3378 = vst [vmem:[#allocation6 + $0x10] sm:$0xf] %v3377
  %v3379 = vld [vmem:[#allocation5 + $0xa0] sm:$0xff]
  %v3380 = vld [vmem:[#allocation5 + $0xa8] sm:$0xff]
  %v3381 = vmax.f32 %v3379, %v3380
  %v3382 = vld [vmem:[#allocation5 + $0xb0] sm:$0xff]
  %v3383 = vld [vmem:[#allocation5 + $0xb8] sm:$0xff]
  %v3384 = vmax.f32 %v3382, %v3383
  %v3385 = vmax.f32 %v3381, %v3384
  %v3386 = vadd.f32 %v3385, %v3334
  %v3387 = vpack.c.bf16 %v3386, %v3386
  %3388 = vst [vmem:[#allocation6 + $0x14] sm:$0xf] %v3387
  %v3389 = vld [vmem:[#allocation5 + $0xc0] sm:$0xff]
  %v3390 = vld [vmem:[#allocation5 + $0xc8] sm:$0xff]
  %v3391 = vmax.f32 %v3389, %v3390
  %v3392 = vld [vmem:[#allocation5 + $0xd0] sm:$0xff]
  %v3393 = vld [vmem:[#allocation5 + $0xd8] sm:$0xff]
  %v3394 = vmax.f32 %v3392, %v3393
  %v3395 = vmax.f32 %v3391, %v3394
  %v3396 = vadd.f32 %v3395, %v3334
  %v3397 = vpack.c.bf16 %v3396, %v3396
  %3398 = vst [vmem:[#allocation6 + $0x18] sm:$0xf] %v3397
  %v3399 = vld [vmem:[#allocation5 + $0xe0] sm:$0xff]
  %v3400 = vld [vmem:[#allocation5 + $0xe8] sm:$0xff]
  %v3401 = vmax.f32 %v3399, %v3400
  %v3402 = vld [vmem:[#allocation5 + $0xf0] sm:$0xff]
  %v3403 = vld [vmem:[#allocation5 + $0xf8] sm:$0xff]
  %v3404 = vmax.f32 %v3402, %v3403
  %v3405 = vmax.f32 %v3401, %v3404
  %v3406 = vadd.f32 %v3405, %v3334
  %v3407 = vpack.c.bf16 %v3406, %v3406
  %3408 = vst [vmem:[#allocation6 + $0x1c] sm:$0xf] %v3407
  %v3409 = vld [vmem:[#allocation5 + $0x100] sm:$0xff]
  %v3410 = vld [vmem:[#allocation5 + $0x108] sm:$0xff]
  %v3411 = vmax.f32 %v3409, %v3410
  %v3412 = vld [vmem:[#allocation5 + $0x110] sm:$0xff]
  %v3413 = vld [vmem:[#allocation5 + $0x118] sm:$0xff]
  %v3414 = vmax.f32 %v3412, %v3413
  %v3415 = vmax.f32 %v3411, %v3414
  %v3416 = vadd.f32 %v3415, %v3334
  %v3417 = vpack.c.bf16 %v3416, %v3416
  %3418 = vst [vmem:[#allocation6 + $0x20] sm:$0xf] %v3417
  %v3419 = vld [vmem:[#allocation6] sm:$0xff]
  %v3420 = vld [vmem:[#allocation6 + $0x8] sm:$0xff]
  %v3421 = vld [vmem:[#allocation6 + $0x10] sm:$0xff]
  %v3422 = vld [vmem:[#allocation6 + $0x18] sm:$0xff]
  %v3423 = vld [vmem:[#allocation6 + $0x20] sm:$0xf]
  %v3424 = vld [vmem:[%s7] sm:$0xf]
  %v3425 = vld [vmem:[%s7 + $0x4] sm:$0xf]
  %v3426 = vld [vmem:[%s7 + $0x8] sm:$0xf]
  %v3427 = vld [vmem:[%s7 + $0xc] sm:$0xf]
  %v3428 = vld [vmem:[%s7 + $0x10] sm:$0xf]
  %v3429 = vld [vmem:[%s7 + $0x14] sm:$0xf]
  %v3430 = vld [vmem:[%s7 + $0x18] sm:$0xf]
  %v3431 = vld [vmem:[%s7 + $0x1c] sm:$0xf]
  %v3432 = vld [vmem:[%s7 + $0x20] sm:$0xf]
  %v3433 = vld [vmem:[%s7 + $0x24] sm:$0xf]
  %v3434 = vld [vmem:[%s7 + $0x28] sm:$0xf]
  %v3435 = vld [vmem:[%s7 + $0x2c] sm:$0xf]
  %v3436 = vld [vmem:[%s7 + $0x30] sm:$0xf]
  %v3437 = vld [vmem:[%s7 + $0x34] sm:$0xf]
  %v3438 = vld [vmem:[%s7 + $0x38] sm:$0xf]
  %v3439 = vld [vmem:[%s7 + $0x3c] sm:$0xf]
  %v3440 = vld [vmem:[%s7 + $0x40] sm:$0xf]
  %v3441 = vld [vmem:[%s7 + $0x44] sm:$0xf]
  %v3442 = vld [vmem:[%s7 + $0x48] sm:$0xf]
  %v3443 = vld [vmem:[%s7 + $0x4c] sm:$0xf]
  %v3444 = vld [vmem:[%s7 + $0x50] sm:$0xf]
  %v3445 = vld [vmem:[%s7 + $0x54] sm:$0xf]
  %v3446 = vld [vmem:[%s7 + $0x58] sm:$0xf]
  %v3447 = vld [vmem:[%s7 + $0x5c] sm:$0xf]
  %v3448 = vld [vmem:[%s7 + $0x60] sm:$0xf]
  %v3449 = vld [vmem:[%s7 + $0x64] sm:$0xf]
  %v3450 = vld [vmem:[%s7 + $0x68] sm:$0xf]
  %v3451 = vld [vmem:[%s7 + $0x6c] sm:$0xf]
  %v3452 = vld [vmem:[%s7 + $0x70] sm:$0xf]
  %v3453 = vld [vmem:[%s7 + $0x74] sm:$0xf]
  %v3454 = vld [vmem:[%s7 + $0x78] sm:$0xf]
  %v3455 = vld [vmem:[%s7 + $0x7c] sm:$0xf]
  %v3456 = vld [vmem:[%s7 + $0x80] sm:$0xf]
  %v3457 = vld [vmem:[%s7 + $0x84] sm:$0xf]
  %v3458 = vld [vmem:[%s7 + $0x88] sm:$0xf]
  %v3459 = vld [vmem:[%s7 + $0x8c] sm:$0xf]
  %v3460 = vld [vmem:[%s7 + $0x90] sm:$0xf]
  %v3461 = vld [vmem:[%s7 + $0x94] sm:$0xf]
  %v3462 = vld [vmem:[%s7 + $0x98] sm:$0xf]
  %v3463 = vld [vmem:[%s7 + $0x9c] sm:$0xf]
  %v3464 = vld [vmem:[%s7 + $0xa0] sm:$0xf]
  %v3465 = vld [vmem:[%s7 + $0xa4] sm:$0xf]
  %v3466 = vld [vmem:[%s7 + $0xa8] sm:$0xf]
  %v3467 = vld [vmem:[%s7 + $0xac] sm:$0xf]
  %v3468 = vld [vmem:[%s7 + $0xb0] sm:$0xf]
  %v3469 = vld [vmem:[%s7 + $0xb4] sm:$0xf]
  %v3470 = vld [vmem:[%s7 + $0xb8] sm:$0xf]
  %v3471 = vld [vmem:[%s7 + $0xbc] sm:$0xf]
  %v3472 = vld [vmem:[%s7 + $0xc0] sm:$0xf]
  %v3473 = vld [vmem:[%s7 + $0xc4] sm:$0xf]
  %v3474 = vld [vmem:[%s7 + $0xc8] sm:$0xf]
  %v3475 = vld [vmem:[%s7 + $0xcc] sm:$0xf]
  %v3476 = vld [vmem:[%s7 + $0xd0] sm:$0xf]
  %v3477 = vld [vmem:[%s7 + $0xd4] sm:$0xf]
  %v3478 = vld [vmem:[%s7 + $0xd8] sm:$0xf]
  %v3479 = vld [vmem:[%s7 + $0xdc] sm:$0xf]
  %v3480 = vld [vmem:[%s7 + $0xe0] sm:$0xf]
  %v3481 = vld [vmem:[%s7 + $0xe4] sm:$0xf]
  %v3482 = vld [vmem:[%s7 + $0xe8] sm:$0xf]
  %v3483 = vld [vmem:[%s7 + $0xec] sm:$0xf]
  %v3484 = vld [vmem:[%s7 + $0xf0] sm:$0xf]
  %v3485 = vld [vmem:[%s7 + $0xf4] sm:$0xf]
  %v3486 = vld [vmem:[%s7 + $0xf8] sm:$0xf]
  %v3487 = vld [vmem:[%s7 + $0xfc] sm:$0xf]
  %v3488 = vld [vmem:[%s7 + $0x100] sm:$0xf]
  %v3489 = vld [vmem:[%s7 + $0x104] sm:$0xf]
  %v3490 = vld [vmem:[%s7 + $0x108] sm:$0xf]
  %v3491 = vld [vmem:[%s7 + $0x10c] sm:$0xf]
  %v3492 = vld [vmem:[%s7 + $0x110] sm:$0xf]
  %v3493 = vld [vmem:[%s7 + $0x114] sm:$0xf]
  %v3494 = vld [vmem:[%s7 + $0x118] sm:$0xf]
  %v3495 = vld [vmem:[%s7 + $0x11c] sm:$0xf]
  %v3496 = vld [vmem:[%s7 + $0x120] sm:$0xf]
  %v3497 = vld [vmem:[%s7 + $0x124] sm:$0xf]
  %v3498 = vld [vmem:[%s7 + $0x128] sm:$0xf]
  %v3499 = vld [vmem:[%s7 + $0x12c] sm:$0xf]
  %v3500 = vld [vmem:[%s7 + $0x130] sm:$0xf]
  %v3501 = vld [vmem:[%s7 + $0x134] sm:$0xf]
  %v3502 = vld [vmem:[%s7 + $0x138] sm:$0xf]
  %v3503 = vld [vmem:[%s7 + $0x13c] sm:$0xf]
  %v3504 = vld [vmem:[%s7 + $0x140] sm:$0xf]
  %v3505 = vld [vmem:[%s7 + $0x144] sm:$0xf]
  %v3506 = vld [vmem:[%s7 + $0x148] sm:$0xf]
  %v3507 = vld [vmem:[%s7 + $0x14c] sm:$0xf]
  %v3508 = vld [vmem:[%s7 + $0x150] sm:$0xf]
  %v3509 = vld [vmem:[%s7 + $0x154] sm:$0xf]
  %v3510 = vld [vmem:[%s7 + $0x158] sm:$0xf]
  %v3511 = vld [vmem:[%s7 + $0x15c] sm:$0xf]
  %v3512 = vld [vmem:[%s7 + $0x160] sm:$0xf]
  %v3513 = vld [vmem:[%s7 + $0x164] sm:$0xf]
  %v3514 = vld [vmem:[%s7 + $0x168] sm:$0xf]
  %v3515 = vld [vmem:[%s7 + $0x16c] sm:$0xf]
  %v3516 = vld [vmem:[%s7 + $0x170] sm:$0xf]
  %v3517 = vld [vmem:[%s7 + $0x174] sm:$0xf]
  %v3518 = vld [vmem:[%s7 + $0x178] sm:$0xf]
  %v3519 = vld [vmem:[%s7 + $0x17c] sm:$0xf]
  %v3520 = vld [vmem:[%s7 + $0x180] sm:$0xf]
  %v3521 = vld [vmem:[%s7 + $0x184] sm:$0xf]
  %v3522 = vld [vmem:[%s7 + $0x188] sm:$0xf]
  %v3523 = vld [vmem:[%s7 + $0x18c] sm:$0xf]
  %v3524 = vld [vmem:[%s7 + $0x190] sm:$0xf]
  %v3525 = vld [vmem:[%s7 + $0x194] sm:$0xf]
  %v3526 = vld [vmem:[%s7 + $0x198] sm:$0xf]
  %v3527 = vld [vmem:[%s7 + $0x19c] sm:$0xf]
  %v3528 = vld [vmem:[%s7 + $0x1a0] sm:$0xf]
  %v3529 = vld [vmem:[%s7 + $0x1a4] sm:$0xf]
  %v3530 = vld [vmem:[%s7 + $0x1a8] sm:$0xf]
  %v3531 = vld [vmem:[%s7 + $0x1ac] sm:$0xf]
  %v3532 = vld [vmem:[%s7 + $0x1b0] sm:$0xf]
  %v3533 = vld [vmem:[%s7 + $0x1b4] sm:$0xf]
  %v3534 = vld [vmem:[%s7 + $0x1b8] sm:$0xf]
  %v3535 = vld [vmem:[%s7 + $0x1bc] sm:$0xf]
  %v3536 = vld [vmem:[%s7 + $0x1c0] sm:$0xf]
  %v3537 = vld [vmem:[%s7 + $0x1c4] sm:$0xf]
  %v3538 = vld [vmem:[%s7 + $0x1c8] sm:$0xf]
  %v3539 = vld [vmem:[%s7 + $0x1cc] sm:$0xf]
  %v3540 = vld [vmem:[%s7 + $0x1d0] sm:$0xf]
  %v3541 = vld [vmem:[%s7 + $0x1d4] sm:$0xf]
  %v3542 = vld [vmem:[%s7 + $0x1d8] sm:$0xf]
  %v3543 = vld [vmem:[%s7 + $0x1dc] sm:$0xf]
  %v3544 = vld [vmem:[%s7 + $0x1e0] sm:$0xf]
  %v3545 = vld [vmem:[%s7 + $0x1e4] sm:$0xf]
  %v3546 = vld [vmem:[%s7 + $0x1e8] sm:$0xf]
  %v3547 = vld [vmem:[%s7 + $0x1ec] sm:$0xf]
  %v3548 = vld [vmem:[%s7 + $0x1f0] sm:$0xf]
  %v3549 = vld [vmem:[%s7 + $0x1f4] sm:$0xf]
  %v3550 = vld [vmem:[%s7 + $0x1f8] sm:$0xf]
  %v3551 = vld [vmem:[%s7 + $0x1fc] sm:$0xf]
  %v3552 = vld [vmem:[%s7 + $0x200] sm:$0xf]
  %v3553 = vld [vmem:[%s7 + $0x204] sm:$0xf]
  %v3554 = vld [vmem:[%s7 + $0x208] sm:$0xf]
  %v3555 = vld [vmem:[%s7 + $0x20c] sm:$0xf]
  %v3556 = vld [vmem:[%s7 + $0x210] sm:$0xf]
  %v3557 = vld [vmem:[%s7 + $0x214] sm:$0xf]
  %v3558 = vld [vmem:[%s7 + $0x218] sm:$0xf]
  %v3559 = vld [vmem:[%s7 + $0x21c] sm:$0xf]
  %v3560 = vld [vmem:[%s7 + $0x220] sm:$0xf]
  %v3561 = vld [vmem:[%s7 + $0x224] sm:$0xf]
  %v3562 = vld [vmem:[%s7 + $0x228] sm:$0xf]
  %v3563 = vld [vmem:[%s7 + $0x22c] sm:$0xf]
  %v3564 = vld [vmem:[%s7 + $0x230] sm:$0xf]
  %v3565 = vld [vmem:[%s7 + $0x234] sm:$0xf]
  %v3566 = vld [vmem:[%s7 + $0x238] sm:$0xf]
  %v3567 = vld [vmem:[%s7 + $0x23c] sm:$0xf]
  %v3568 = vld [vmem:[%s8] sm:$0x1]
  %v3570 = vlaneseq
  %v3571 = vshrl.u32 %v3570, 7
  %v3572 = vsub.s32 0, %v3571
  %v3573 = vrot.slane %v3568, %v3572
  %v3580 = vunpack.c.l.b16 %v3419
  %v3581 = vunpack.c.h.b16 %v3419
  %v3582 = vunpack.c.l.b16 %v3420
  %v3583 = vunpack.c.h.b16 %v3420
  %v3584 = vunpack.c.l.b16 %v3421
  %v3585 = vunpack.c.h.b16 %v3421
  %v3586 = vunpack.c.l.b16 %v3422
  %v3587 = vunpack.c.h.b16 %v3422
  %v3588 = vunpack.c.l.b16 %v3423
  %v3589 = vpack.c.b16 %v3580, %v3580
  %v3590 = vpack.c.b16 %v3581, %v3581
  %v3591 = vpack.c.b16 %v3582, %v3582
  %v3592 = vpack.c.b16 %v3583, %v3583
  %v3593 = vpack.c.b16 %v3584, %v3584
  %v3594 = vpack.c.b16 %v3585, %v3585
  %v3595 = vpack.c.b16 %v3586, %v3586
  %v3596 = vpack.c.b16 %v3587, %v3587
  %v3597 = vpack.c.b16 %v3588, %v3588
  %v3751 = vunpack.c.l.b16 %v3424
  %v3752 = vunpack.c.l.b16 %v3425
  %v3753 = vunpack.c.l.b16 %v3426
  %v3754 = vunpack.c.l.b16 %v3427
  %v3755 = vunpack.c.l.b16 %v3428
  %v3756 = vunpack.c.l.b16 %v3429
  %v3757 = vunpack.c.l.b16 %v3430
  %v3758 = vunpack.c.l.b16 %v3431
  %v3759 = vunpack.c.l.b16 %v3432
  %v3760 = vunpack.c.l.b16 %v3433
  %v3761 = vunpack.c.l.b16 %v3434
  %v3762 = vunpack.c.l.b16 %v3435
  %v3763 = vunpack.c.l.b16 %v3436
  %v3764 = vunpack.c.l.b16 %v3437
  %v3765 = vunpack.c.l.b16 %v3438
  %v3766 = vunpack.c.l.b16 %v3439
  %v3767 = vunpack.c.l.b16 %v3440
  %v3768 = vunpack.c.l.b16 %v3441
  %v3769 = vunpack.c.l.b16 %v3442
  %v3770 = vunpack.c.l.b16 %v3443
  %v3771 = vunpack.c.l.b16 %v3444
  %v3772 = vunpack.c.l.b16 %v3445
  %v3773 = vunpack.c.l.b16 %v3446
  %v3774 = vunpack.c.l.b16 %v3447
  %v3775 = vunpack.c.l.b16 %v3448
  %v3776 = vunpack.c.l.b16 %v3449
  %v3777 = vunpack.c.l.b16 %v3450
  %v3778 = vunpack.c.l.b16 %v3451
  %v3779 = vunpack.c.l.b16 %v3452
  %v3780 = vunpack.c.l.b16 %v3453
  %v3781 = vunpack.c.l.b16 %v3454
  %v3782 = vunpack.c.l.b16 %v3455
  %v3783 = vunpack.c.l.b16 %v3456
  %v3784 = vunpack.c.l.b16 %v3457
  %v3785 = vunpack.c.l.b16 %v3458
  %v3786 = vunpack.c.l.b16 %v3459
  %v3787 = vunpack.c.l.b16 %v3460
  %v3788 = vunpack.c.l.b16 %v3461
  %v3789 = vunpack.c.l.b16 %v3462
  %v3790 = vunpack.c.l.b16 %v3463
  %v3791 = vunpack.c.l.b16 %v3464
  %v3792 = vunpack.c.l.b16 %v3465
  %v3793 = vunpack.c.l.b16 %v3466
  %v3794 = vunpack.c.l.b16 %v3467
  %v3795 = vunpack.c.l.b16 %v3468
  %v3796 = vunpack.c.l.b16 %v3469
  %v3797 = vunpack.c.l.b16 %v3470
  %v3798 = vunpack.c.l.b16 %v3471
  %v3799 = vunpack.c.l.b16 %v3472
  %v3800 = vunpack.c.l.b16 %v3473
  %v3801 = vunpack.c.l.b16 %v3474
  %v3802 = vunpack.c.l.b16 %v3475
  %v3803 = vunpack.c.l.b16 %v3476
  %v3804 = vunpack.c.l.b16 %v3477
  %v3805 = vunpack.c.l.b16 %v3478
  %v3806 = vunpack.c.l.b16 %v3479
  %v3807 = vunpack.c.l.b16 %v3480
  %v3808 = vunpack.c.l.b16 %v3481
  %v3809 = vunpack.c.l.b16 %v3482
  %v3810 = vunpack.c.l.b16 %v3483
  %v3811 = vunpack.c.l.b16 %v3484
  %v3812 = vunpack.c.l.b16 %v3485
  %v3813 = vunpack.c.l.b16 %v3486
  %v3814 = vunpack.c.l.b16 %v3487
  %v3815 = vunpack.c.l.b16 %v3488
  %v3816 = vunpack.c.l.b16 %v3489
  %v3817 = vunpack.c.l.b16 %v3490
  %v3818 = vunpack.c.l.b16 %v3491
  %v3819 = vunpack.c.l.b16 %v3492
  %v3820 = vunpack.c.l.b16 %v3493
  %v3821 = vunpack.c.l.b16 %v3494
  %v3822 = vunpack.c.l.b16 %v3495
  %v3823 = vunpack.c.l.b16 %v3496
  %v3824 = vunpack.c.l.b16 %v3497
  %v3825 = vunpack.c.l.b16 %v3498
  %v3826 = vunpack.c.l.b16 %v3499
  %v3827 = vunpack.c.l.b16 %v3500
  %v3828 = vunpack.c.l.b16 %v3501
  %v3829 = vunpack.c.l.b16 %v3502
  %v3830 = vunpack.c.l.b16 %v3503
  %v3831 = vunpack.c.l.b16 %v3504
  %v3832 = vunpack.c.l.b16 %v3505
  %v3833 = vunpack.c.l.b16 %v3506
  %v3834 = vunpack.c.l.b16 %v3507
  %v3835 = vunpack.c.l.b16 %v3508
  %v3836 = vunpack.c.l.b16 %v3509
  %v3837 = vunpack.c.l.b16 %v3510
  %v3838 = vunpack.c.l.b16 %v3511
  %v3839 = vunpack.c.l.b16 %v3512
  %v3840 = vunpack.c.l.b16 %v3513
  %v3841 = vunpack.c.l.b16 %v3514
  %v3842 = vunpack.c.l.b16 %v3515
  %v3843 = vunpack.c.l.b16 %v3516
  %v3844 = vunpack.c.l.b16 %v3517
  %v3845 = vunpack.c.l.b16 %v3518
  %v3846 = vunpack.c.l.b16 %v3519
  %v3847 = vunpack.c.l.b16 %v3520
  %v3848 = vunpack.c.l.b16 %v3521
  %v3849 = vunpack.c.l.b16 %v3522
  %v3850 = vunpack.c.l.b16 %v3523
  %v3851 = vunpack.c.l.b16 %v3524
  %v3852 = vunpack.c.l.b16 %v3525
  %v3853 = vunpack.c.l.b16 %v3526
  %v3854 = vunpack.c.l.b16 %v3527
  %v3855 = vunpack.c.l.b16 %v3528
  %v3856 = vunpack.c.l.b16 %v3529
  %v3857 = vunpack.c.l.b16 %v3530
  %v3858 = vunpack.c.l.b16 %v3531
  %v3859 = vunpack.c.l.b16 %v3532
  %v3860 = vunpack.c.l.b16 %v3533
  %v3861 = vunpack.c.l.b16 %v3534
  %v3862 = vunpack.c.l.b16 %v3535
  %v3863 = vunpack.c.l.b16 %v3536
  %v3864 = vunpack.c.l.b16 %v3537
  %v3865 = vunpack.c.l.b16 %v3538
  %v3866 = vunpack.c.l.b16 %v3539
  %v3867 = vunpack.c.l.b16 %v3540
  %v3868 = vunpack.c.l.b16 %v3541
  %v3869 = vunpack.c.l.b16 %v3542
  %v3870 = vunpack.c.l.b16 %v3543
  %v3871 = vunpack.c.l.b16 %v3544
  %v3872 = vunpack.c.l.b16 %v3545
  %v3873 = vunpack.c.l.b16 %v3546
  %v3874 = vunpack.c.l.b16 %v3547
  %v3875 = vunpack.c.l.b16 %v3548
  %v3876 = vunpack.c.l.b16 %v3549
  %v3877 = vunpack.c.l.b16 %v3550
  %v3878 = vunpack.c.l.b16 %v3551
  %v3879 = vunpack.c.l.b16 %v3552
  %v3880 = vunpack.c.l.b16 %v3553
  %v3881 = vunpack.c.l.b16 %v3554
  %v3882 = vunpack.c.l.b16 %v3555
  %v3883 = vunpack.c.l.b16 %v3556
  %v3884 = vunpack.c.l.b16 %v3557
  %v3885 = vunpack.c.l.b16 %v3558
  %v3886 = vunpack.c.l.b16 %v3559
  %v3887 = vunpack.c.l.b16 %v3560
  %v3888 = vunpack.c.l.b16 %v3561
  %v3889 = vunpack.c.l.b16 %v3562
  %v3890 = vunpack.c.l.b16 %v3563
  %v3891 = vunpack.c.l.b16 %v3564
  %v3892 = vunpack.c.l.b16 %v3565
  %v3893 = vunpack.c.l.b16 %v3566
  %v3894 = vunpack.c.l.b16 %v3567
  %v3895 = vpack.c.b16 %v3752, %v3751
  %v3896 = vpack.c.b16 %v3754, %v3753
  %v3897 = vpack.c.b16 %v3756, %v3755
  %v3898 = vpack.c.b16 %v3758, %v3757
  %v3899 = vpack.c.b16 %v3760, %v3759
  %v3900 = vpack.c.b16 %v3762, %v3761
  %v3901 = vpack.c.b16 %v3764, %v3763
  %v3902 = vpack.c.b16 %v3766, %v3765
  %v3903 = vpack.c.b16 %v3768, %v3767
  %v3904 = vpack.c.b16 %v3770, %v3769
  %v3905 = vpack.c.b16 %v3772, %v3771
  %v3906 = vpack.c.b16 %v3774, %v3773
  %v3907 = vpack.c.b16 %v3776, %v3775
  %v3908 = vpack.c.b16 %v3778, %v3777
  %v3909 = vpack.c.b16 %v3780, %v3779
  %v3910 = vpack.c.b16 %v3782, %v3781
  %v3911 = vpack.c.b16 %v3784, %v3783
  %v3912 = vpack.c.b16 %v3786, %v3785
  %v3913 = vpack.c.b16 %v3788, %v3787
  %v3914 = vpack.c.b16 %v3790, %v3789
  %v3915 = vpack.c.b16 %v3792, %v3791
  %v3916 = vpack.c.b16 %v3794, %v3793
  %v3917 = vpack.c.b16 %v3796, %v3795
  %v3918 = vpack.c.b16 %v3798, %v3797
  %v3919 = vpack.c.b16 %v3800, %v3799
  %v3920 = vpack.c.b16 %v3802, %v3801
  %v3921 = vpack.c.b16 %v3804, %v3803
  %v3922 = vpack.c.b16 %v3806, %v3805
  %v3923 = vpack.c.b16 %v3808, %v3807
  %v3924 = vpack.c.b16 %v3810, %v3809
  %v3925 = vpack.c.b16 %v3812, %v3811
  %v3926 = vpack.c.b16 %v3814, %v3813
  %v3927 = vpack.c.b16 %v3816, %v3815
  %v3928 = vpack.c.b16 %v3818, %v3817
  %v3929 = vpack.c.b16 %v3820, %v3819
  %v3930 = vpack.c.b16 %v3822, %v3821
  %v3931 = vpack.c.b16 %v3824, %v3823
  %v3932 = vpack.c.b16 %v3826, %v3825
  %v3933 = vpack.c.b16 %v3828, %v3827
  %v3934 = vpack.c.b16 %v3830, %v3829
  %v3935 = vpack.c.b16 %v3832, %v3831
  %v3936 = vpack.c.b16 %v3834, %v3833
  %v3937 = vpack.c.b16 %v3836, %v3835
  %v3938 = vpack.c.b16 %v3838, %v3837
  %v3939 = vpack.c.b16 %v3840, %v3839
  %v3940 = vpack.c.b16 %v3842, %v3841
  %v3941 = vpack.c.b16 %v3844, %v3843
  %v3942 = vpack.c.b16 %v3846, %v3845
  %v3943 = vpack.c.b16 %v3848, %v3847
  %v3944 = vpack.c.b16 %v3850, %v3849
  %v3945 = vpack.c.b16 %v3852, %v3851
  %v3946 = vpack.c.b16 %v3854, %v3853
  %v3947 = vpack.c.b16 %v3856, %v3855
  %v3948 = vpack.c.b16 %v3858, %v3857
  %v3949 = vpack.c.b16 %v3860, %v3859
  %v3950 = vpack.c.b16 %v3862, %v3861
  %v3951 = vpack.c.b16 %v3864, %v3863
  %v3952 = vpack.c.b16 %v3866, %v3865
  %v3953 = vpack.c.b16 %v3868, %v3867
  %v3954 = vpack.c.b16 %v3870, %v3869
  %v3955 = vpack.c.b16 %v3872, %v3871
  %v3956 = vpack.c.b16 %v3874, %v3873
  %v3957 = vpack.c.b16 %v3876, %v3875
  %v3958 = vpack.c.b16 %v3878, %v3877
  %v3959 = vpack.c.b16 %v3880, %v3879
  %v3960 = vpack.c.b16 %v3882, %v3881
  %v3961 = vpack.c.b16 %v3884, %v3883
  %v3962 = vpack.c.b16 %v3886, %v3885
  %v3963 = vpack.c.b16 %v3888, %v3887
  %v3964 = vpack.c.b16 %v3890, %v3889
  %v3965 = vpack.c.b16 %v3892, %v3891
  %v3966 = vpack.c.b16 %v3894, %v3893
  %4039 = vmatprep.subr.bf16.mxu0 0
  %4040 = vmatpush1.bf16.msra.mxu0 %v3902
  %4041 = vmatprep.subr.bf16.mxu0 0
  %4042 = vmatpush1.bf16.msra.mxu0 %v3901
  %4043 = vmatprep.subr.bf16.mxu0 0
  %4044 = vmatpush1.bf16.msra.mxu0 %v3900
  %4045 = vmatprep.subr.bf16.mxu0 0
  %4046 = vmatpush1.bf16.msra.mxu0 %v3899
  %4047 = vmatprep.subr.bf16.mxu0 0
  %4048 = vmatpush1.bf16.msra.mxu0 %v3898
  %4049 = vmatprep.subr.bf16.mxu0 0
  %4050 = vmatpush1.bf16.msra.mxu0 %v3897
  %4051 = vmatprep.subr.bf16.mxu0 0
  %4052 = vmatpush1.bf16.msra.mxu0 %v3896
  %4053 = vmatprep.subr.bf16.mxu0 0
  %4054 = vmatpush1.bf16.msra.mxu0 %v3895
  %4055 = vmatprep.subr.bf16.mxu0 0
  %4056 = vmatpush2.bf16.msra.mxu0 %v3910
  %4057 = vmatprep.subr.bf16.mxu0 0
  %4058 = vmatpush2.bf16.msra.mxu0 %v3909
  %4059 = vmatprep.subr.bf16.mxu0 0
  %4060 = vmatpush2.bf16.msra.mxu0 %v3908
  %4061 = vmatprep.subr.bf16.mxu0 0
  %4062 = vmatpush2.bf16.msra.mxu0 %v3907
  %4063 = vmatprep.subr.bf16.mxu0 0
  %4064 = vmatpush2.bf16.msra.mxu0 %v3906
  %4065 = vmatprep.subr.bf16.mxu0 0
  %4066 = vmatpush2.bf16.msra.mxu0 %v3905
  %4067 = vmatprep.subr.bf16.mxu0 0
  %4068 = vmatpush2.bf16.msra.mxu0 %v3904
  %4069 = vmatprep.subr.bf16.mxu0 0
  %4070 = vmatpush2.bf16.msra.mxu0 %v3903
  %4071 = vmatprep.mubr.bf16.mxu0 %v3590
  %4072 = vmatmul.mubr.bf16.gmra.mxu0 %v3589
  %v4073 = vpop.f32.mrf.mxu0
  %v4074 = vadd.f32 %v3573, %v4073
  %v4075 = vpop.f32.mrf.mxu0
  %v4076 = vpop.f32.mrf.mxu0
  %v4077 = vpop.f32.mrf.mxu0
  %4078 = vdwg.mxu0
  %4079 = vmatprep.subr.bf16.mxu0 0
  %4080 = vmatpush1.bf16.msra.mxu0 %v3918
  %4081 = vmatprep.subr.bf16.mxu0 0
  %4082 = vmatpush1.bf16.msra.mxu0 %v3917
  %4083 = vmatprep.subr.bf16.mxu0 0
  %4084 = vmatpush1.bf16.msra.mxu0 %v3916
  %4085 = vmatprep.subr.bf16.mxu0 0
  %4086 = vmatpush1.bf16.msra.mxu0 %v3915
  %4087 = vmatprep.subr.bf16.mxu0 0
  %4088 = vmatpush1.bf16.msra.mxu0 %v3914
  %4089 = vmatprep.subr.bf16.mxu0 0
  %4090 = vmatpush1.bf16.msra.mxu0 %v3913
  %4091 = vmatprep.subr.bf16.mxu0 0
  %4092 = vmatpush1.bf16.msra.mxu0 %v3912
  %4093 = vmatprep.subr.bf16.mxu0 0
  %4094 = vmatpush1.bf16.msra.mxu0 %v3911
  %4095 = vmatprep.subr.bf16.mxu0 0
  %4096 = vmatpush2.bf16.msra.mxu0 %v3926
  %4097 = vmatprep.subr.bf16.mxu0 0
  %4098 = vmatpush2.bf16.msra.mxu0 %v3925
  %4099 = vmatprep.subr.bf16.mxu0 0
  %4100 = vmatpush2.bf16.msra.mxu0 %v3924
  %4101 = vmatprep.subr.bf16.mxu0 0
  %4102 = vmatpush2.bf16.msra.mxu0 %v3923
  %4103 = vmatprep.subr.bf16.mxu0 0
  %4104 = vmatpush2.bf16.msra.mxu0 %v3922
  %4105 = vmatprep.subr.bf16.mxu0 0
  %4106 = vmatpush2.bf16.msra.mxu0 %v3921
  %4107 = vmatprep.subr.bf16.mxu0 0
  %4108 = vmatpush2.bf16.msra.mxu0 %v3920
  %4109 = vmatprep.subr.bf16.mxu0 0
  %4110 = vmatpush2.bf16.msra.mxu0 %v3919
  %4111 = vmatprep.mubr.bf16.mxu0 %v3592
  %4112 = vmatmul.mubr.bf16.gmra.mxu0 %v3591
  %v4113 = vpop.f32.mrf.mxu0
  %v4114 = vadd.f32 %v4074, %v4113
  %v4115 = vpop.f32.mrf.mxu0
  %v4116 = vpop.f32.mrf.mxu0
  %v4117 = vpop.f32.mrf.mxu0
  %4118 = vdwg.mxu0
  %4119 = vmatprep.subr.bf16.mxu0 0
  %4120 = vmatpush1.bf16.msra.mxu0 %v3934
  %4121 = vmatprep.subr.bf16.mxu0 0
  %4122 = vmatpush1.bf16.msra.mxu0 %v3933
  %4123 = vmatprep.subr.bf16.mxu0 0
  %4124 = vmatpush1.bf16.msra.mxu0 %v3932
  %4125 = vmatprep.subr.bf16.mxu0 0
  %4126 = vmatpush1.bf16.msra.mxu0 %v3931
  %4127 = vmatprep.subr.bf16.mxu0 0
  %4128 = vmatpush1.bf16.msra.mxu0 %v3930
  %4129 = vmatprep.subr.bf16.mxu0 0
  %4130 = vmatpush1.bf16.msra.mxu0 %v3929
  %4131 = vmatprep.subr.bf16.mxu0 0
  %4132 = vmatpush1.bf16.msra.mxu0 %v3928
  %4133 = vmatprep.subr.bf16.mxu0 0
  %4134 = vmatpush1.bf16.msra.mxu0 %v3927
  %4135 = vmatprep.subr.bf16.mxu0 0
  %4136 = vmatpush2.bf16.msra.mxu0 %v3942
  %4137 = vmatprep.subr.bf16.mxu0 0
  %4138 = vmatpush2.bf16.msra.mxu0 %v3941
  %4139 = vmatprep.subr.bf16.mxu0 0
  %4140 = vmatpush2.bf16.msra.mxu0 %v3940
  %4141 = vmatprep.subr.bf16.mxu0 0
  %4142 = vmatpush2.bf16.msra.mxu0 %v3939
  %4143 = vmatprep.subr.bf16.mxu0 0
  %4144 = vmatpush2.bf16.msra.mxu0 %v3938
  %4145 = vmatprep.subr.bf16.mxu0 0
  %4146 = vmatpush2.bf16.msra.mxu0 %v3937
  %4147 = vmatprep.subr.bf16.mxu0 0
  %4148 = vmatpush2.bf16.msra.mxu0 %v3936
  %4149 = vmatprep.subr.bf16.mxu0 0
  %4150 = vmatpush2.bf16.msra.mxu0 %v3935
  %4151 = vmatprep.mubr.bf16.mxu0 %v3594
  %4152 = vmatmul.mubr.bf16.gmra.mxu0 %v3593
  %v4153 = vpop.f32.mrf.mxu0
  %v4154 = vadd.f32 %v4114, %v4153
  %v4155 = vpop.f32.mrf.mxu0
  %v4156 = vpop.f32.mrf.mxu0
  %v4157 = vpop.f32.mrf.mxu0
  %4158 = vdwg.mxu0
  %4159 = vmatprep.subr.bf16.mxu0 0
  %4160 = vmatpush1.bf16.msra.mxu0 %v3950
  %4161 = vmatprep.subr.bf16.mxu0 0
  %4162 = vmatpush1.bf16.msra.mxu0 %v3949
  %4163 = vmatprep.subr.bf16.mxu0 0
  %4164 = vmatpush1.bf16.msra.mxu0 %v3948
  %4165 = vmatprep.subr.bf16.mxu0 0
  %4166 = vmatpush1.bf16.msra.mxu0 %v3947
  %4167 = vmatprep.subr.bf16.mxu0 0
  %4168 = vmatpush1.bf16.msra.mxu0 %v3946
  %4169 = vmatprep.subr.bf16.mxu0 0
  %4170 = vmatpush1.bf16.msra.mxu0 %v3945
  %4171 = vmatprep.subr.bf16.mxu0 0
  %4172 = vmatpush1.bf16.msra.mxu0 %v3944
  %4173 = vmatprep.subr.bf16.mxu0 0
  %4174 = vmatpush1.bf16.msra.mxu0 %v3943
  %4175 = vmatprep.subr.bf16.mxu0 0
  %4176 = vmatpush2.bf16.msra.mxu0 %v3958
  %4177 = vmatprep.subr.bf16.mxu0 0
  %4178 = vmatpush2.bf16.msra.mxu0 %v3957
  %4179 = vmatprep.subr.bf16.mxu0 0
  %4180 = vmatpush2.bf16.msra.mxu0 %v3956
  %4181 = vmatprep.subr.bf16.mxu0 0
  %4182 = vmatpush2.bf16.msra.mxu0 %v3955
  %4183 = vmatprep.subr.bf16.mxu0 0
  %4184 = vmatpush2.bf16.msra.mxu0 %v3954
  %4185 = vmatprep.subr.bf16.mxu0 0
  %4186 = vmatpush2.bf16.msra.mxu0 %v3953
  %4187 = vmatprep.subr.bf16.mxu0 0
  %4188 = vmatpush2.bf16.msra.mxu0 %v3952
  %4189 = vmatprep.subr.bf16.mxu0 0
  %4190 = vmatpush2.bf16.msra.mxu0 %v3951
  %4191 = vmatprep.mubr.bf16.mxu0 %v3596
  %4192 = vmatmul.mubr.bf16.gmra.mxu0 %v3595
  %v4193 = vpop.f32.mrf.mxu0
  %v4194 = vadd.f32 %v4154, %v4193
  %v4195 = vpop.f32.mrf.mxu0
  %v4196 = vpop.f32.mrf.mxu0
  %v4197 = vpop.f32.mrf.mxu0
  %4198 = vdwg.mxu0
  %4199 = vmatprep.subr.bf16.mxu0 0
  %4200 = vmatpush1.bf16.msra.mxu0 %v3966
  %4201 = vmatprep.subr.bf16.mxu0 0
  %4202 = vmatpush1.bf16.msra.mxu0 %v3965
  %4203 = vmatprep.subr.bf16.mxu0 0
  %4204 = vmatpush1.bf16.msra.mxu0 %v3964
  %4205 = vmatprep.subr.bf16.mxu0 0
  %4206 = vmatpush1.bf16.msra.mxu0 %v3963
  %4207 = vmatprep.subr.bf16.mxu0 0
  %4208 = vmatpush1.bf16.msra.mxu0 %v3962
  %4209 = vmatprep.subr.bf16.mxu0 0
  %4210 = vmatpush1.bf16.msra.mxu0 %v3961
  %4211 = vmatprep.subr.bf16.mxu0 0
  %4212 = vmatpush1.bf16.msra.mxu0 %v3960
  %4213 = vmatprep.subr.bf16.mxu0 0
  %4214 = vmatpush1.bf16.msra.mxu0 %v3959
  %4215 = vmatprep.subr.bf16.mxu0 0
  %4216 = vmatpush2.bf16.msra.mxu0 0
  %4217 = vmatprep.subr.bf16.mxu0 0
  %4218 = vmatpush2.bf16.msra.mxu0 0
  %4219 = vmatprep.subr.bf16.mxu0 0
  %4220 = vmatpush2.bf16.msra.mxu0 0
  %4221 = vmatprep.subr.bf16.mxu0 0
  %4222 = vmatpush2.bf16.msra.mxu0 0
  %4223 = vmatprep.subr.bf16.mxu0 0
  %4224 = vmatpush2.bf16.msra.mxu0 0
  %4225 = vmatprep.subr.bf16.mxu0 0
  %4226 = vmatpush2.bf16.msra.mxu0 0
  %4227 = vmatprep.subr.bf16.mxu0 0
  %4228 = vmatpush2.bf16.msra.mxu0 0
  %4229 = vmatprep.subr.bf16.mxu0 0
  %4230 = vmatpush2.bf16.msra.mxu0 0
  %4231 = vmatprep.mubr.bf16.mxu0 0
  %4232 = vmatmul.mubr.bf16.gmra.mxu0 %v3597
  %v4233 = vpop.f32.mrf.mxu0
  %v4234 = vadd.f32 %v4194, %v4233
  %v4235 = vpop.f32.mrf.mxu0
  %v4236 = vpop.f32.mrf.mxu0
  %v4237 = vpop.f32.mrf.mxu0
  %4238 = vdwg.mxu0
  %v4239 = vmax.f32 %v4234, 0.0
  %v4240 = vld [vmem:[%s1] sm:$0xff]
  %v4241 = vmul.f32 %v4239, %v4240
  %v4242 = vpack.c.bf16 %v4241, %v4241
  %v4243 = vld [vmem:[%s9] sm:$0xf]
  %v4244 = vld [vmem:[%s9 + $0x4] sm:$0xf]
  %v4245 = vld [vmem:[%s9 + $0x8] sm:$0xf]
  %v4246 = vld [vmem:[%s9 + $0xc] sm:$0xf]
  %v4247 = vld [vmem:[%s9 + $0x10] sm:$0xf]
  %v4248 = vld [vmem:[%s9 + $0x14] sm:$0xf]
  %v4249 = vld [vmem:[%s9 + $0x18] sm:$0xf]
  %v4250 = vld [vmem:[%s9 + $0x1c] sm:$0xf]
  %v4251 = vld [vmem:[%s9 + $0x20] sm:$0xf]
  %v4252 = vld [vmem:[%s9 + $0x24] sm:$0xf]
  %v4253 = vld [vmem:[%s9 + $0x28] sm:$0xf]
  %v4254 = vld [vmem:[%s9 + $0x2c] sm:$0xf]
  %v4255 = vld [vmem:[%s9 + $0x30] sm:$0xf]
  %v4256 = vld [vmem:[%s9 + $0x34] sm:$0xf]
  %v4257 = vld [vmem:[%s9 + $0x38] sm:$0xf]
  %v4258 = vld [vmem:[%s9 + $0x3c] sm:$0xf]
  %v4259 = vld [vmem:[%s10] sm:$0x1]
  %v4261 = vlaneseq
  %v4262 = vshrl.u32 %v4261, 7
  %v4263 = vsub.s32 0, %v4262
  %v4264 = vrot.slane %v4259, %v4263
  %v4282 = vunpack.c.l.b16 %v4243
  %v4283 = vunpack.c.l.b16 %v4244
  %v4284 = vunpack.c.l.b16 %v4245
  %v4285 = vunpack.c.l.b16 %v4246
  %v4286 = vunpack.c.l.b16 %v4247
  %v4287 = vunpack.c.l.b16 %v4248
  %v4288 = vunpack.c.l.b16 %v4249
  %v4289 = vunpack.c.l.b16 %v4250
  %v4290 = vunpack.c.l.b16 %v4251
  %v4291 = vunpack.c.l.b16 %v4252
  %v4292 = vunpack.c.l.b16 %v4253
  %v4293 = vunpack.c.l.b16 %v4254
  %v4294 = vunpack.c.l.b16 %v4255
  %v4295 = vunpack.c.l.b16 %v4256
  %v4296 = vunpack.c.l.b16 %v4257
  %v4297 = vunpack.c.l.b16 %v4258
  %v4298 = vpack.c.b16 %v4283, %v4282
  %v4299 = vpack.c.b16 %v4285, %v4284
  %v4300 = vpack.c.b16 %v4287, %v4286
  %v4301 = vpack.c.b16 %v4289, %v4288
  %v4302 = vpack.c.b16 %v4291, %v4290
  %v4303 = vpack.c.b16 %v4293, %v4292
  %v4304 = vpack.c.b16 %v4295, %v4294
  %v4305 = vpack.c.b16 %v4297, %v4296
  %4314 = vmatprep.subr.bf16.mxu0 0
  %4315 = vmatpush1.bf16.msra.mxu0 %v4305
  %4316 = vmatprep.subr.bf16.mxu0 0
  %4317 = vmatpush1.bf16.msra.mxu0 %v4304
  %4318 = vmatprep.subr.bf16.mxu0 0
  %4319 = vmatpush1.bf16.msra.mxu0 %v4303
  %4320 = vmatprep.subr.bf16.mxu0 0
  %4321 = vmatpush1.bf16.msra.mxu0 %v4302
  %4322 = vmatprep.subr.bf16.mxu0 0
  %4323 = vmatpush1.bf16.msra.mxu0 %v4301
  %4324 = vmatprep.subr.bf16.mxu0 0
  %4325 = vmatpush1.bf16.msra.mxu0 %v4300
  %4326 = vmatprep.subr.bf16.mxu0 0
  %4327 = vmatpush1.bf16.msra.mxu0 %v4299
  %4328 = vmatprep.subr.bf16.mxu0 0
  %4329 = vmatpush1.bf16.msra.mxu0 %v4298
  %4330 = vmatprep.subr.bf16.mxu0 0
  %4331 = vmatpush2.bf16.msra.mxu0 0
  %4332 = vmatprep.subr.bf16.mxu0 0
  %4333 = vmatpush2.bf16.msra.mxu0 0
  %4334 = vmatprep.subr.bf16.mxu0 0
  %4335 = vmatpush2.bf16.msra.mxu0 0
  %4336 = vmatprep.subr.bf16.mxu0 0
  %4337 = vmatpush2.bf16.msra.mxu0 0
  %4338 = vmatprep.subr.bf16.mxu0 0
  %4339 = vmatpush2.bf16.msra.mxu0 0
  %4340 = vmatprep.subr.bf16.mxu0 0
  %4341 = vmatpush2.bf16.msra.mxu0 0
  %4342 = vmatprep.subr.bf16.mxu0 0
  %4343 = vmatpush2.bf16.msra.mxu0 0
  %4344 = vmatprep.subr.bf16.mxu0 0
  %4345 = vmatpush2.bf16.msra.mxu0 0
  %4346 = vmatprep.mubr.bf16.mxu0 0
  %4347 = vmatmul.mubr.bf16.gmra.mxu0 %v4242
  %v4348 = vpop.f32.mrf.mxu0
  %v4349 = vadd.f32 %v4264, %v4348
  %v4350 = vpop.f32.mrf.mxu0
  %v4351 = vpop.f32.mrf.mxu0
  %v4352 = vpop.f32.mrf.mxu0
  %4353 = vdwg.mxu0
  %4354 = vmax.xlane.f32.xlu0 %v4349
  %v4355 = vpop.xlane.xlu0 %4354
  %v4356 = vsub.f32 %v4349, %v4355
  %v4357 = vmul.f32 %v4356, 1.442695
  %v4358 = vpow.pop %v4357
  %4359 = vadd.xlane.f32.xlu0 %v4358
  %v4360 = vpop.xlane.xlu0 %4359
  %v4361 = vrcp.pop %v4360
  %v4362 = vmul.f32 %v4358, %v4361
  %4363 = vst [vmem:[%s11] sm:$0xff] %v4362
  // Predicated region
  $region60: #{neural_network_forward.1} parent=0 // pred_check
    _
  $region61: #{neural_network_forward.1} parent=0 // pred_check_branch
    %4365 = sbr.rel (0) target = $region63
  $region62: #{neural_network_forward.1} parent=0 // pred_region
    _
  $region63: #{neural_network_forward.1} parent=0 // pred_fallthru
    _
  // Predicated region
  $region64: #{neural_network_forward.1} parent=0 // pred_check
    _
  $region65: #{neural_network_forward.1} parent=0 // pred_check_branch
    %4367 = sbr.rel (0) target = $region67
  $region66: #{neural_network_forward.1} parent=0 // pred_region
    _
  $region67: #{neural_network_forward.1} parent=0 // pred_fallthru
    _

</llo_original>
